<compile_context>
chip_gen: v7x
topology: tpu7x:2x2x1
jax: 0.10.0
libtpu: 0.0.40
codegen_flags: <defaults>
</compile_context>

<pallas_src>
import functools

import jax
import jax.numpy as jnp
from jax.experimental import pallas as pl
from jax.experimental.pallas import tpu as pltpu


def _round_up(x, m):
    return ((x + m - 1) // m) * m


def _vmem_cap_bytes():
    """Generation-aware VMEM cap (90% of physical), with a safe fallback."""
    try:
        cap = int(pltpu.get_tpu_info().vmem_capacity_bytes)
    except Exception:
        cap = 64 * 1024 * 1024  # conservative (valid on v5e/v6e/v7x)
    return int(0.9 * cap)


# ----------------------------------------------------------------------------
# Kernel: one grid step == TT timesteps for one batch tile.
# ----------------------------------------------------------------------------
def _nested_lstm_seq_kernel(
    x_ref,                                # (TT, B_tile, D_pad)   inputs, compute dtype
    h0_ref, c0_ref, hi0_ref, ci0_ref,     # (B_tile, H)  f32      initial states
    w1_ref, b1_ref,                       # (D_pad+H, 4H), (1, 4H)   outer gates
    w2a_ref, w2b_ref, b2_ref,             # (2H, 4H), (H, 4H), (1, 4H)  inner gates
    hid_ref,                              # (TT, B_tile, H)       hidden, compute dtype
    fin_ref,                              # (4, B_tile, H) f32    [h | c | h_in | c_in]
    concat1,                              # (B_tile, D_pad+H)     [x | h] matmul slab
    concat2,                              # (B_tile, 2H)          [f*c | i*g] slab
    hi_s,                                 # (B_tile, H)           inner hidden (cdt)
    c_s, ci_s,                            # (B_tile, H) f32       cell states
    *, TT, T,
):
    H = c_s.shape[1]
    Dp = x_ref.shape[2]
    cdt = concat1.dtype
    tc = pl.program_id(1)
    last_chunk = (T - 1) // TT            # chunk containing the last real step
    last_s = (T - 1) % TT                 # in-chunk index of the last real step

    # Initialize the VMEM-resident recurrent state at the first time chunk of
    # each batch tile.  h lives in concat1[:, Dp:], inner h in hi_s.
    @pl.when(tc == 0)
    def _init_state():
        concat1[:, Dp:] = h0_ref[...].astype(cdt)
        hi_s[...] = hi0_ref[...].astype(cdt)
        c_s[...] = c0_ref[...].astype(jnp.float32)
        ci_s[...] = ci0_ref[...].astype(jnp.float32)

    def step(s):
        # Independent partial for the inner gates (h_inner is already known),
        # hoisted off the serial chain: dot -> nonlin -> mul -> dot.
        pre2 = (
            jnp.dot(hi_s[...], w2b_ref[...], preferred_element_type=jnp.float32)
            + b2_ref[...]
        )

        # Stream this timestep's input into the concat slab (lane-aligned).
        concat1[:, :Dp] = x_ref[s]

        # ---- outer gates: ONE dot of [x | h] against (D_pad+H, 4H)
        gates = (
            jnp.dot(concat1[...], w1_ref[...], preferred_element_type=jnp.float32)
            + b1_ref[...]
        )
        # TODO(synk): on v5e, if the EUP slot binds, replace sigmoid with
        # 0.5*(tanh(0.5*x)+1) for these slabs (needs a bundle dump to confirm).
        sig = jax.nn.sigmoid(gates[:, : 3 * H])      # in | remember | out
        g = jnp.tanh(gates[:, 3 * H:])               # cell_gate
        i_g, f_g, o_g = sig[:, :H], sig[:, H:2 * H], sig[:, 2 * H:]

        # Inner-LSTM input slab: [remember*c | in*g]
        concat2[:, :H] = (f_g * c_s[...]).astype(cdt)
        concat2[:, H:] = (i_g * g).astype(cdt)

        # ---- inner gates: dependent dot has K = 2H; h_inner partial is pre2.
        gates2 = (
            jnp.dot(concat2[...], w2a_ref[...], preferred_element_type=jnp.float32)
            + pre2
        )
        sig2 = jax.nn.sigmoid(gates2[:, : 3 * H])
        g2 = jnp.tanh(gates2[:, 3 * H:])
        i2, f2, o2 = sig2[:, :H], sig2[:, H:2 * H], sig2[:, 2 * H:]

        ci_new = f2 * ci_s[...] + i2 * g2            # inner cell   (f32)
        cell = o2 * jnp.tanh(ci_new)                 # inner hidden == outer "cell"
        hidden = o_g * jnp.tanh(cell)

        # Only the hidden sequence is written to HBM per step (compute dtype).
        hid_ref[s] = hidden.astype(hid_ref.dtype)

        # Carry the recurrent state in VMEM for the next timestep.
        concat1[:, Dp:] = hidden.astype(cdt)
        hi_s[...] = cell.astype(cdt)
        c_s[...] = cell
        ci_s[...] = ci_new
        return hidden, cell, ci_new

    # Statically unrolled time-chunk loop.  Padded tail steps (only possible in
    # the last chunk) are skipped; the final states are written exactly once.
    for s in range(TT):
        if s > last_s:
            # This in-chunk index is a padded step iff we are in the last chunk.
            @pl.when(tc < last_chunk)
            def _run(s=s):
                step(s)
        elif s == last_s:
            hidden, cell, ci_new = step(s)

            @pl.when(tc == last_chunk)
            def _write_final(hidden=hidden, cell=cell, ci_new=ci_new):
                fin_ref[0] = hidden.astype(fin_ref.dtype)
                fin_ref[1] = cell.astype(fin_ref.dtype)
                fin_ref[2] = cell.astype(fin_ref.dtype)   # inner hidden == cell
                fin_ref[3] = ci_new.astype(fin_ref.dtype)
        else:
            step(s)


# ----------------------------------------------------------------------------
# One-time parameter preparation (hoisted out of the per-call path).
# ----------------------------------------------------------------------------
def prepare_params(params, compute_dtype=jnp.bfloat16):
    """Transpose, split, pad and cast the nn.Linear weights once."""
    W1, b1, W2, b2 = params["W1"], params["b1"], params["W2"], params["b2"]
    four_h, d_plus_h = W1.shape
    H = four_h // 4
    D = d_plus_h - H
    assert H % 128 == 0, "hidden_dim must be a multiple of 128 (TPU lane width)"
    assert W2.shape == (4 * H, 3 * H)

    cdt = jnp.dtype(compute_dtype)
    D_pad = _round_up(D, 128)

    W1t = W1.T                                   # (D+H, 4H)
    w1x = W1t[:D]
    if D_pad != D:                               # zero-pad the x input rows
        w1x = jnp.concatenate(
            [w1x, jnp.zeros((D_pad - D, 4 * H), W1t.dtype)], axis=0)
    W1p = jnp.concatenate([w1x, W1t[D:]], axis=0).astype(cdt)   # (D_pad+H, 4H)

    W2t = W2.T                                   # (3H, 4H)
    W2a = W2t[: 2 * H].astype(cdt)               # rows for [f*c | i*g]
    W2b = W2t[2 * H:].astype(cdt)                # rows for h_inner

    return {
        "W1": W1p,
        "b1": b1.reshape(1, -1).astype(jnp.float32),
        "W2a": W2a,
        "W2b": W2b,
        "b2": b2.reshape(1, -1).astype(jnp.float32),
        "D": D, "D_pad": D_pad, "H": H,
        "compute_dtype": cdt,
    }


# ----------------------------------------------------------------------------
# Jitted sequence implementation (pads, casts, pallas_call, slices -- all fused).
# ----------------------------------------------------------------------------
@functools.partial(
    jax.jit,
    static_argnames=("D_pad", "H", "compute_dtype", "batch_tile", "time_tile"))
def _nested_lstm_sequence_jit(x_seq, h0, c0, hi0, ci0,
                              W1, b1, W2a, W2b, b2,
                              *, D_pad, H, compute_dtype, batch_tile, time_tile):
    T, B, D_in = x_seq.shape
    cdt = jnp.dtype(compute_dtype)
    isz = cdt.itemsize

    # Batch tiling / padding (8 sublane rows for f32, 16 for bf16 packing).
    row_mult = 16 if isz < 4 else 8
    B_pad0 = _round_up(B, row_mult)
    B_tile = min(_round_up(batch_tile, row_mult), B_pad0)
    B_pad = _round_up(B_pad0, B_tile)

    # Time chunking.
    TT = max(1, min(time_tile, T))
    T_pad = _round_up(T, TT)
    n_tc = T_pad // TT

    # Pad + cast inputs (fused under jit).
    x_p = jnp.pad(x_seq.astype(cdt),
                  ((0, T_pad - T), (0, B_pad - B), (0, D_pad - D_in)))

    def pad_b(a):
        return jnp.pad(a.astype(jnp.float32), ((0, B_pad - B), (0, 0)))

    h0p, c0p, hi0p, ci0p = pad_b(h0), pad_b(c0), pad_b(hi0), pad_b(ci0)

    grid = (B_pad // B_tile, n_tc)

    in_specs = [
        pl.BlockSpec((TT, B_tile, D_pad), lambda b, t: (t, b, 0)),        # x (streamed)
        pl.BlockSpec((B_tile, H), lambda b, t: (b, 0)),                   # h0
        pl.BlockSpec((B_tile, H), lambda b, t: (b, 0)),                   # c0
        pl.BlockSpec((B_tile, H), lambda b, t: (b, 0)),                   # hi0
        pl.BlockSpec((B_tile, H), lambda b, t: (b, 0)),                   # ci0
        pl.BlockSpec((D_pad + H, 4 * H), lambda b, t: (0, 0)),            # W1 (resident)
        pl.BlockSpec((1, 4 * H), lambda b, t: (0, 0)),                    # b1
        pl.BlockSpec((2 * H, 4 * H), lambda b, t: (0, 0)),                # W2a (resident)
        pl.BlockSpec((H, 4 * H), lambda b, t: (0, 0)),                    # W2b (resident)
        pl.BlockSpec((1, 4 * H), lambda b, t: (0, 0)),                    # b2
    ]
    out_shape = (
        jax.ShapeDtypeStruct((T_pad, B_pad, H), cdt),        # hidden sequence
        jax.ShapeDtypeStruct((4, B_pad, H), jnp.float32),    # final [h|c|hi|ci]
    )
    out_specs = (
        pl.BlockSpec((TT, B_tile, H), lambda b, t: (t, b, 0)),
        pl.BlockSpec((4, B_tile, H), lambda b, t: (0, b, 0)),   # t-independent
    )
    scratch_shapes = [
        pltpu.VMEM((B_tile, D_pad + H), cdt),   # [x | h] matmul slab
        pltpu.VMEM((B_tile, 2 * H), cdt),       # [f*c | i*g] slab
        pltpu.VMEM((B_tile, H), cdt),           # inner hidden
        pltpu.VMEM((B_tile, H), jnp.float32),   # c_cur
        pltpu.VMEM((B_tile, H), jnp.float32),   # c_inner
    ]

    # VMEM budget.  Pallas double-buffers every input/output by default, so
    # count 2x for those; scratch is single-buffered.  Cap generation-aware.
    H4 = 4 * H
    est = 0
    est += 2 * (D_pad + H) * H4 * isz            # W1
    est += 2 * 3 * H * H4 * isz                  # W2a + W2b
    est += 2 * 2 * H4 * 4                        # b1, b2
    est += 2 * 4 * B_tile * H * 4                # h0,c0,hi0,ci0
    est += 2 * TT * B_tile * D_pad * isz         # x tile
    est += 2 * TT * B_tile * H * isz             # hidden out tile
    est += 2 * 4 * B_tile * H * 4                # final-state out tile
    est += B_tile * (D_pad + H) * isz            # concat1
    est += B_tile * 2 * H * isz                  # concat2
    est += B_tile * H * isz                      # hi_s
    est += 2 * B_tile * H * 4                    # c_s, ci_s
    vmem_limit = int(min(max(int(1.25 * est), 32 * 1024 * 1024), _vmem_cap_bytes()))

    kernel = functools.partial(_nested_lstm_seq_kernel, TT=TT, T=T)

    hid, fin = pl.pallas_call(
        kernel,
        out_shape=out_shape,
        grid=grid,
        in_specs=in_specs,
        out_specs=out_specs,
        scratch_shapes=scratch_shapes,
        compiler_params=pltpu.CompilerParams(
            dimension_semantics=("parallel", "arbitrary"),
            vmem_limit_bytes=vmem_limit,
        ),
    )(x_p, h0p, c0p, hi0p, ci0p, W1, b1, W2a, W2b, b2)

    hidden_seq = hid[:T, :B, :]
    h_last = fin[0, :B]
    c_last = fin[1, :B]
    hi_last = fin[2, :B]
    ci_last = fin[3, :B]
    return hidden_seq, ((h_last, c_last), (hi_last, ci_last))


# ----------------------------------------------------------------------------
# Public wrappers.
# ----------------------------------------------------------------------------
def nested_lstm_sequence(x_seq, h0, c0, hi0, ci0, prepped, *,
                         batch_tile=256, time_tile=4):
    """Runs the NestedLSTMCell over x_seq[(T,B,D)].

    Returns (hidden_seq[(T,B,H)] in compute dtype,
             ((h_T, c_T), (h_inner_T, c_inner_T)) in f32).
    """
    T, B, D = x_seq.shape
    assert D == prepped["D"], "input_size mismatch with prepared params"
    return _nested_lstm_sequence_jit(
        x_seq, h0, c0, hi0, ci0,
        prepped["W1"], prepped["b1"], prepped["W2a"], prepped["W2b"], prepped["b2"],
        D_pad=prepped["D_pad"], H=prepped["H"],
        compute_dtype=prepped["compute_dtype"],
        batch_tile=batch_tile, time_tile=time_tile)


def nested_lstm_cell(x, h_cur, c_cur, h_inner, c_inner, prepped):
    """Single-step API matching the PyTorch module: ((hidden, cell), cell_state)."""
    _, ((h_n, c_n), (hi_n, ci_n)) = nested_lstm_sequence(
        x[None], h_cur, c_cur, h_inner, c_inner, prepped)
    return (h_n, c_n), (hi_n, ci_n)


# ----------------------------------------------------------------------------
# Pure-JAX reference (mirrors the PyTorch forward exactly).
# ----------------------------------------------------------------------------
def _reference_cell(x, h_cur, c_cur, h_inner, c_inner, params):
    W1, b1, W2, b2 = params["W1"], params["b1"], params["W2"], params["b2"]
    gates = jnp.concatenate([x, h_cur], axis=1) @ W1.T + b1
    i, f, o, g = jnp.split(gates, 4, axis=1)
    i, f, o, g = jax.nn.sigmoid(i), jax.nn.sigmoid(f), jax.nn.sigmoid(o), jnp.tanh(g)
    cell_in = jnp.concatenate([f * c_cur, i * g], axis=1)
    gates2 = jnp.concatenate([cell_in, h_inner], axis=1) @ W2.T + b2
    i2, f2, o2, g2 = jnp.split(gates2, 4, axis=1)
    i2, f2, o2, g2 = (jax.nn.sigmoid(i2), jax.nn.sigmoid(f2),
                      jax.nn.sigmoid(o2), jnp.tanh(g2))
    ci_new = f2 * c_inner + i2 * g2
    hi_new = o2 * jnp.tanh(ci_new)
    cell = hi_new
    hidden = o * jnp.tanh(cell)
    return (hidden, cell), (hi_new, ci_new)


if __name__ == "__main__":
    # Small shapes: hidden aligned to 128 lanes; input / batch / time exercise padding.
    B, D, H, T = 12, 96, 128, 6
    key = jax.random.PRNGKey(0)
    ks = jax.random.split(key, 9)

    bound1 = 1.0 / jnp.sqrt(D + H)
    bound2 = 1.0 / jnp.sqrt(3 * H)
    params = {
        "W1": jax.random.uniform(ks[0], (4 * H, D + H), jnp.float32, -bound1, bound1),
        "b1": jax.random.uniform(ks[1], (4 * H,), jnp.float32, -bound1, bound1),
        "W2": jax.random.uniform(ks[2], (4 * H, 3 * H), jnp.float32, -bound2, bound2),
        "b2": jax.random.uniform(ks[3], (4 * H,), jnp.float32, -bound2, bound2),
    }
    x_seq = jax.random.normal(ks[4], (T, B, D), jnp.float32)
    h0 = jax.random.normal(ks[5], (B, H), jnp.float32)
    c0 = jax.random.normal(ks[6], (B, H), jnp.float32)
    hi0 = jax.random.normal(ks[7], (B, H), jnp.float32)
    ci0 = jax.random.normal(ks[8], (B, H), jnp.float32)

    # Reference trajectory (per-step cell, mirrors PyTorch).
    h, c, hi, ci = h0, c0, hi0, ci0
    hid_ref = []
    for t in range(T):
        (h, c), (hi, ci) = _reference_cell(x_seq[t], h, c, hi, ci, params)
        hid_ref.append(h)
    hid_ref = jnp.stack(hid_ref)

    # --- f32 compute path: validates the fused-sequence kernel logic.
    p32 = prepare_params(params, jnp.float32)
    hid32, ((h32, c32), (hi32, ci32)) = nested_lstm_sequence(
        x_seq, h0, c0, hi0, ci0, p32)
    jax.block_until_ready(hid32)
    assert jnp.allclose(hid32, hid_ref, atol=3e-2), float(jnp.max(jnp.abs(hid32 - hid_ref)))
    assert jnp.allclose(h32, h, atol=3e-2)
    assert jnp.allclose(c32, c, atol=3e-2)
    assert jnp.allclose(hi32, hi, atol=3e-2)
    assert jnp.allclose(ci32, ci, atol=3e-2)

    # --- bf16 compute path: bf16 weights/matmul inputs/hidden, f32 states.
    # NOTE: recurrent h / h_inner are re-quantized to bf16 per step, so error
    # compounds with T; validated here for short sequences (T=6) at atol=1e-1.
    pbf = prepare_params(params, jnp.bfloat16)
    hidbf, ((hb, cb), (hib, cib)) = nested_lstm_sequence(
        x_seq, h0, c0, hi0, ci0, pbf)
    jax.block_until_ready(hidbf)
    assert jnp.allclose(hidbf.astype(jnp.float32), hid_ref, atol=1e-1), \
        float(jnp.max(jnp.abs(hidbf.astype(jnp.float32) - hid_ref)))
    assert jnp.allclose(cb, c, atol=1e-1)
    assert jnp.allclose(cib, ci, atol=1e-1)

    # --- single-step API matches the PyTorch module call signature.
    (h1, c1), (hi1, ci1) = nested_lstm_cell(x_seq[0], h0, c0, hi0, ci0, p32)
    (h1r, c1r), (hi1r, ci1r) = _reference_cell(x_seq[0], h0, c0, hi0, ci0, params)
    assert jnp.allclose(h1, h1r, atol=2e-2)
    assert jnp.allclose(c1, c1r, atol=2e-2)
    assert jnp.allclose(hi1, hi1r, atol=2e-2)
    assert jnp.allclose(ci1, ci1r, atol=2e-2)

    print("KERNEL_OK")
</pallas_src>

<mosaic_0001>
module attributes {stable_mosaic.version = 11 : i64} {
  func.func @_nested_lstm_seq_kernel(%arg0: i32, %arg1: i32, %arg2: memref<4x16x128xf32, #tpu.memory_space<vmem>>, %arg3: memref<16x128xf32, #tpu.memory_space<vmem>>, %arg4: memref<16x128xf32, #tpu.memory_space<vmem>>, %arg5: memref<16x128xf32, #tpu.memory_space<vmem>>, %arg6: memref<16x128xf32, #tpu.memory_space<vmem>>, %arg7: memref<256x512xf32, #tpu.memory_space<vmem>>, %arg8: memref<1x512xf32, #tpu.memory_space<vmem>>, %arg9: memref<256x512xf32, #tpu.memory_space<vmem>>, %arg10: memref<128x512xf32, #tpu.memory_space<vmem>>, %arg11: memref<1x512xf32, #tpu.memory_space<vmem>>, %arg12: memref<4x16x128xf32, #tpu.memory_space<vmem>>, %arg13: memref<4x16x128xf32, #tpu.memory_space<vmem>>, %arg14: memref<16x256xf32, #tpu.memory_space<vmem>>, %arg15: memref<16x256xf32, #tpu.memory_space<vmem>>, %arg16: memref<16x128xf32, #tpu.memory_space<vmem>>, %arg17: memref<16x128xf32, #tpu.memory_space<vmem>>, %arg18: memref<16x128xf32, #tpu.memory_space<vmem>>) attributes {dimension_semantics = [#tpu.dimension_semantics<parallel>, #tpu.dimension_semantics<arbitrary>], iteration_bounds = array<i64: 1, 2>, scalar_prefetch = 0 : i64, scratch_operands = 5 : i64, tpu.core_type = #tpu.core_type<tc>, window_params = [{transform_indices = @transform_0, window_bounds = array<i64: 4, 16, 128>}, {transform_indices = @transform_1, window_bounds = array<i64: 16, 128>}, {transform_indices = @transform_2, window_bounds = array<i64: 16, 128>}, {transform_indices = @transform_3, window_bounds = array<i64: 16, 128>}, {transform_indices = @transform_4, window_bounds = array<i64: 16, 128>}, {pipeline_mode = #tpu.pipeline_mode<synchronous>, transform_indices = @transform_5, window_bounds = array<i64: 256, 512>}, {pipeline_mode = #tpu.pipeline_mode<synchronous>, transform_indices = @transform_6, window_bounds = array<i64: 1, 512>}, {pipeline_mode = #tpu.pipeline_mode<synchronous>, transform_indices = @transform_7, window_bounds = array<i64: 256, 512>}, {pipeline_mode = #tpu.pipeline_mode<synchronous>, transform_indices = @transform_8, window_bounds = array<i64: 128, 512>}, {pipeline_mode = #tpu.pipeline_mode<synchronous>, transform_indices = @transform_9, window_bounds = array<i64: 1, 512>}, {transform_indices = @transform_10, window_bounds = array<i64: 4, 16, 128>}, {transform_indices = @transform_11, window_bounds = array<i64: 4, 16, 128>}]} {
    %c0_i32 = arith.constant 0 : i32
    %0 = arith.cmpi eq, %arg1, %c0_i32 : i32
    %1 = arith.extui %0 : i1 to i32
    %c0_i32_0 = arith.constant 0 : i32
    %2 = arith.cmpi ne, %1, %c0_i32_0 : i32
    scf.if %2 {
      %c0_92 = arith.constant 0 : index
      %c0_93 = arith.constant 0 : index
      %134 = vector.load %arg3[%c0_92, %c0_93] : memref<16x128xf32, #tpu.memory_space<vmem>>, vector<16x128xf32>
      %c0_94 = arith.constant 0 : index
      %c128_95 = arith.constant 128 : index
      %135 = vector.load %arg14[%c0_94, %c128_95] : memref<16x256xf32, #tpu.memory_space<vmem>>, vector<16x128xf32>
      tpu.vector_store %arg14[%c0_94, %c128_95], %134 {strides = array<i32>} : memref<16x256xf32, #tpu.memory_space<vmem>>, vector<16x128xf32>,
      %c0_96 = arith.constant 0 : index
      %c0_97 = arith.constant 0 : index
      %136 = vector.load %arg5[%c0_96, %c0_97] : memref<16x128xf32, #tpu.memory_space<vmem>>, vector<16x128xf32>
      %c0_98 = arith.constant 0 : index
      %c0_99 = arith.constant 0 : index
      %137 = vector.load %arg16[%c0_98, %c0_99] : memref<16x128xf32, #tpu.memory_space<vmem>>, vector<16x128xf32>
      tpu.vector_store %arg16[%c0_98, %c0_99], %136 {strides = array<i32>} : memref<16x128xf32, #tpu.memory_space<vmem>>, vector<16x128xf32>,
      %c0_100 = arith.constant 0 : index
      %c0_101 = arith.constant 0 : index
      %138 = vector.load %arg4[%c0_100, %c0_101] : memref<16x128xf32, #tpu.memory_space<vmem>>, vector<16x128xf32>
      %c0_102 = arith.constant 0 : index
      %c0_103 = arith.constant 0 : index
      %139 = vector.load %arg17[%c0_102, %c0_103] : memref<16x128xf32, #tpu.memory_space<vmem>>, vector<16x128xf32>
      tpu.vector_store %arg17[%c0_102, %c0_103], %138 {strides = array<i32>} : memref<16x128xf32, #tpu.memory_space<vmem>>, vector<16x128xf32>,
      %c0_104 = arith.constant 0 : index
      %c0_105 = arith.constant 0 : index
      %140 = vector.load %arg6[%c0_104, %c0_105] : memref<16x128xf32, #tpu.memory_space<vmem>>, vector<16x128xf32>
      %c0_106 = arith.constant 0 : index
      %c0_107 = arith.constant 0 : index
      %141 = vector.load %arg18[%c0_106, %c0_107] : memref<16x128xf32, #tpu.memory_space<vmem>>, vector<16x128xf32>
      tpu.vector_store %arg18[%c0_106, %c0_107], %140 {strides = array<i32>} : memref<16x128xf32, #tpu.memory_space<vmem>>, vector<16x128xf32>,
    } else {
    }
    %c0 = arith.constant 0 : index
    %c0_1 = arith.constant 0 : index
    %3 = vector.load %arg16[%c0, %c0_1] : memref<16x128xf32, #tpu.memory_space<vmem>>, vector<16x128xf32>
    %c0_2 = arith.constant 0 : index
    %c0_3 = arith.constant 0 : index
    %4 = vector.load %arg10[%c0_2, %c0_3] : memref<128x512xf32, #tpu.memory_space<vmem>>, vector<128x512xf32>
    %cst = arith.constant dense<0.000000e+00> : vector<16x512xf32>
    %5 = tpu.matmul %3, %4, %cst {dimension_numbers = #tpu.dot_dimension_numbers<[1], [0], [0], [1], [0, 0, 1, 1], [], []>} : vector<16x128xf32>, vector<128x512xf32>, vector<16x512xf32> -> vector<16x512xf32>
    %c0_4 = arith.constant 0 : index
    %c0_5 = arith.constant 0 : index
    %6 = vector.load %arg11[%c0_4, %c0_5] : memref<1x512xf32, #tpu.memory_space<vmem>>, vector<1x512xf32>
    %7 = vector.broadcast %6 : vector<1x512xf32> to vector<16x512xf32>
    %8 = arith.addf %5, %7 : vector<16x512xf32>
    %c0_6 = arith.constant 0 : index
    %c0_7 = arith.constant 0 : index
    %c0_8 = arith.constant 0 : index
    %9 = vector.load %arg2[%c0_6, %c0_7, %c0_8] : memref<4x16x128xf32, #tpu.memory_space<vmem>>, vector<1x16x128xf32>
    %10 = vector.shape_cast %9 : vector<1x16x128xf32> to vector<16x128xf32>
    %c0_9 = arith.constant 0 : index
    %c0_10 = arith.constant 0 : index
    %11 = vector.load %arg14[%c0_9, %c0_10] : memref<16x256xf32, #tpu.memory_space<vmem>>, vector<16x128xf32>
    tpu.vector_store %arg14[%c0_9, %c0_10], %10 {strides = array<i32>} : memref<16x256xf32, #tpu.memory_space<vmem>>, vector<16x128xf32>,
    %c0_11 = arith.constant 0 : index
    %c0_12 = arith.constant 0 : index
    %12 = vector.load %arg14[%c0_11, %c0_12] : memref<16x256xf32, #tpu.memory_space<vmem>>, vector<16x256xf32>
    %c0_13 = arith.constant 0 : index
    %c0_14 = arith.constant 0 : index
    %13 = vector.load %arg7[%c0_13, %c0_14] : memref<256x512xf32, #tpu.memory_space<vmem>>, vector<256x512xf32>
    %cst_15 = arith.constant dense<0.000000e+00> : vector<16x512xf32>
    %14 = tpu.matmul %12, %13, %cst_15 {dimension_numbers = #tpu.dot_dimension_numbers<[1], [0], [0], [1], [0, 0, 1, 1], [], []>} : vector<16x256xf32>, vector<256x512xf32>, vector<16x512xf32> -> vector<16x512xf32>
    %c0_16 = arith.constant 0 : index
    %c0_17 = arith.constant 0 : index
    %15 = vector.load %arg8[%c0_16, %c0_17] : memref<1x512xf32, #tpu.memory_space<vmem>>, vector<1x512xf32>
    %16 = vector.broadcast %15 : vector<1x512xf32> to vector<16x512xf32>
    %17 = arith.addf %14, %16 : vector<16x512xf32>
    %18 = vector.extract_strided_slice %17 {offsets = [0, 0], sizes = [16, 384], strides = [1, 1]} : vector<16x512xf32> to vector<16x384xf32>
    %19 = arith.negf %18 : vector<16x384xf32>
    %20 = math.exp %19 : vector<16x384xf32>
    %cst_18 = arith.constant 1.000000e+00 : f32
    %21 = vector.broadcast %cst_18 : f32 to vector<16x384xf32>
    %22 = arith.addf %21, %20 : vector<16x384xf32>
    %23 = arith.divf %21, %22 : vector<16x384xf32>
    %24 = vector.extract_strided_slice %17 {offsets = [0, 384], sizes = [16, 128], strides = [1, 1]} : vector<16x512xf32> to vector<16x128xf32>
    %25 = math.tanh %24 : vector<16x128xf32>
    %26 = vector.extract_strided_slice %23 {offsets = [0, 0], sizes = [16, 128], strides = [1, 1]} : vector<16x384xf32> to vector<16x128xf32>
    %27 = vector.extract_strided_slice %23 {offsets = [0, 128], sizes = [16, 128], strides = [1, 1]} : vector<16x384xf32> to vector<16x128xf32>
    %28 = vector.extract_strided_slice %23 {offsets = [0, 256], sizes = [16, 128], strides = [1, 1]} : vector<16x384xf32> to vector<16x128xf32>
    %c0_19 = arith.constant 0 : index
    %c0_20 = arith.constant 0 : index
    %29 = vector.load %arg17[%c0_19, %c0_20] : memref<16x128xf32, #tpu.memory_space<vmem>>, vector<16x128xf32>
    %30 = arith.mulf %27, %29 : vector<16x128xf32>
    %c0_21 = arith.constant 0 : index
    %c0_22 = arith.constant 0 : index
    %31 = vector.load %arg15[%c0_21, %c0_22] : memref<16x256xf32, #tpu.memory_space<vmem>>, vector<16x128xf32>
    tpu.vector_store %arg15[%c0_21, %c0_22], %30 {strides = array<i32>} : memref<16x256xf32, #tpu.memory_space<vmem>>, vector<16x128xf32>,
    %32 = arith.mulf %26, %25 : vector<16x128xf32>
    %c0_23 = arith.constant 0 : index
    %c128 = arith.constant 128 : index
    %33 = vector.load %arg15[%c0_23, %c128] : memref<16x256xf32, #tpu.memory_space<vmem>>, vector<16x128xf32>
    tpu.vector_store %arg15[%c0_23, %c128], %32 {strides = array<i32>} : memref<16x256xf32, #tpu.memory_space<vmem>>, vector<16x128xf32>,
    %c0_24 = arith.constant 0 : index
    %c0_25 = arith.constant 0 : index
    %34 = vector.load %arg15[%c0_24, %c0_25] : memref<16x256xf32, #tpu.memory_space<vmem>>, vector<16x256xf32>
    %c0_26 = arith.constant 0 : index
    %c0_27 = arith.constant 0 : index
    %35 = vector.load %arg9[%c0_26, %c0_27] : memref<256x512xf32, #tpu.memory_space<vmem>>, vector<256x512xf32>
    %cst_28 = arith.constant dense<0.000000e+00> : vector<16x512xf32>
    %36 = tpu.matmul %34, %35, %cst_28 {dimension_numbers = #tpu.dot_dimension_numbers<[1], [0], [0], [1], [0, 0, 1, 1], [], []>} : vector<16x256xf32>, vector<256x512xf32>, vector<16x512xf32> -> vector<16x512xf32>
    %37 = arith.addf %36, %8 : vector<16x512xf32>
    %38 = vector.extract_strided_slice %37 {offsets = [0, 0], sizes = [16, 384], strides = [1, 1]} : vector<16x512xf32> to vector<16x384xf32>
    %39 = arith.negf %38 : vector<16x384xf32>
    %40 = math.exp %39 : vector<16x384xf32>
    %cst_29 = arith.constant 1.000000e+00 : f32
    %41 = vector.broadcast %cst_29 : f32 to vector<16x384xf32>
    %42 = arith.addf %41, %40 : vector<16x384xf32>
    %43 = arith.divf %41, %42 : vector<16x384xf32>
    %44 = vector.extract_strided_slice %37 {offsets = [0, 384], sizes = [16, 128], strides = [1, 1]} : vector<16x512xf32> to vector<16x128xf32>
    %45 = math.tanh %44 : vector<16x128xf32>
    %46 = vector.extract_strided_slice %43 {offsets = [0, 0], sizes = [16, 128], strides = [1, 1]} : vector<16x384xf32> to vector<16x128xf32>
    %47 = vector.extract_strided_slice %43 {offsets = [0, 128], sizes = [16, 128], strides = [1, 1]} : vector<16x384xf32> to vector<16x128xf32>
    %48 = vector.extract_strided_slice %43 {offsets = [0, 256], sizes = [16, 128], strides = [1, 1]} : vector<16x384xf32> to vector<16x128xf32>
    %c0_30 = arith.constant 0 : index
    %c0_31 = arith.constant 0 : index
    %49 = vector.load %arg18[%c0_30, %c0_31] : memref<16x128xf32, #tpu.memory_space<vmem>>, vector<16x128xf32>
    %50 = arith.mulf %47, %49 : vector<16x128xf32>
    %51 = arith.mulf %46, %45 : vector<16x128xf32>
    %52 = arith.addf %50, %51 : vector<16x128xf32>
    %53 = math.tanh %52 : vector<16x128xf32>
    %54 = arith.mulf %48, %53 : vector<16x128xf32>
    %55 = math.tanh %54 : vector<16x128xf32>
    %56 = arith.mulf %28, %55 : vector<16x128xf32>
    %c0_32 = arith.constant 0 : index
    %c0_33 = arith.constant 0 : index
    %c0_34 = arith.constant 0 : index
    %57 = vector.load %arg12[%c0_32, %c0_33, %c0_34] : memref<4x16x128xf32, #tpu.memory_space<vmem>>, vector<1x16x128xf32>
    %58 = vector.shape_cast %57 : vector<1x16x128xf32> to vector<16x128xf32>
    %59 = vector.shape_cast %56 : vector<16x128xf32> to vector<1x16x128xf32>
    tpu.vector_store %arg12[%c0_32, %c0_33, %c0_34], %59 {strides = array<i32>} : memref<4x16x128xf32, #tpu.memory_space<vmem>>, vector<1x16x128xf32>,
    %c0_35 = arith.constant 0 : index
    %c128_36 = arith.constant 128 : index
    %60 = vector.load %arg14[%c0_35, %c128_36] : memref<16x256xf32, #tpu.memory_space<vmem>>, vector<16x128xf32>
    tpu.vector_store %arg14[%c0_35, %c128_36], %56 {strides = array<i32>} : memref<16x256xf32, #tpu.memory_space<vmem>>, vector<16x128xf32>,
    %c0_37 = arith.constant 0 : index
    %c0_38 = arith.constant 0 : index
    %61 = vector.load %arg16[%c0_37, %c0_38] : memref<16x128xf32, #tpu.memory_space<vmem>>, vector<16x128xf32>
    tpu.vector_store %arg16[%c0_37, %c0_38], %54 {strides = array<i32>} : memref<16x128xf32, #tpu.memory_space<vmem>>, vector<16x128xf32>,
    %c0_39 = arith.constant 0 : index
    %c0_40 = arith.constant 0 : index
    %62 = vector.load %arg17[%c0_39, %c0_40] : memref<16x128xf32, #tpu.memory_space<vmem>>, vector<16x128xf32>
    tpu.vector_store %arg17[%c0_39, %c0_40], %54 {strides = array<i32>} : memref<16x128xf32, #tpu.memory_space<vmem>>, vector<16x128xf32>,
    %c0_41 = arith.constant 0 : index
    %c0_42 = arith.constant 0 : index
    %63 = vector.load %arg18[%c0_41, %c0_42] : memref<16x128xf32, #tpu.memory_space<vmem>>, vector<16x128xf32>
    tpu.vector_store %arg18[%c0_41, %c0_42], %52 {strides = array<i32>} : memref<16x128xf32, #tpu.memory_space<vmem>>, vector<16x128xf32>,
    %c0_43 = arith.constant 0 : index
    %c0_44 = arith.constant 0 : index
    %64 = vector.load %arg16[%c0_43, %c0_44] : memref<16x128xf32, #tpu.memory_space<vmem>>, vector<16x128xf32>
    %c0_45 = arith.constant 0 : index
    %c0_46 = arith.constant 0 : index
    %65 = vector.load %arg10[%c0_45, %c0_46] : memref<128x512xf32, #tpu.memory_space<vmem>>, vector<128x512xf32>
    %cst_47 = arith.constant dense<0.000000e+00> : vector<16x512xf32>
    %66 = tpu.matmul %64, %65, %cst_47 {dimension_numbers = #tpu.dot_dimension_numbers<[1], [0], [0], [1], [0, 0, 1, 1], [], []>} : vector<16x128xf32>, vector<128x512xf32>, vector<16x512xf32> -> vector<16x512xf32>
    %c0_48 = arith.constant 0 : index
    %c0_49 = arith.constant 0 : index
    %67 = vector.load %arg11[%c0_48, %c0_49] : memref<1x512xf32, #tpu.memory_space<vmem>>, vector<1x512xf32>
    %68 = vector.broadcast %67 : vector<1x512xf32> to vector<16x512xf32>
    %69 = arith.addf %66, %68 : vector<16x512xf32>
    %c1 = arith.constant 1 : index
    %c0_50 = arith.constant 0 : index
    %c0_51 = arith.constant 0 : index
    %70 = vector.load %arg2[%c1, %c0_50, %c0_51] : memref<4x16x128xf32, #tpu.memory_space<vmem>>, vector<1x16x128xf32>
    %71 = vector.shape_cast %70 : vector<1x16x128xf32> to vector<16x128xf32>
    %c0_52 = arith.constant 0 : index
    %c0_53 = arith.constant 0 : index
    %72 = vector.load %arg14[%c0_52, %c0_53] : memref<16x256xf32, #tpu.memory_space<vmem>>, vector<16x128xf32>
    tpu.vector_store %arg14[%c0_52, %c0_53], %71 {strides = array<i32>} : memref<16x256xf32, #tpu.memory_space<vmem>>, vector<16x128xf32>,
    %c0_54 = arith.constant 0 : index
    %c0_55 = arith.constant 0 : index
    %73 = vector.load %arg14[%c0_54, %c0_55] : memref<16x256xf32, #tpu.memory_space<vmem>>, vector<16x256xf32>
    %c0_56 = arith.constant 0 : index
    %c0_57 = arith.constant 0 : index
    %74 = vector.load %arg7[%c0_56, %c0_57] : memref<256x512xf32, #tpu.memory_space<vmem>>, vector<256x512xf32>
    %cst_58 = arith.constant dense<0.000000e+00> : vector<16x512xf32>
    %75 = tpu.matmul %73, %74, %cst_58 {dimension_numbers = #tpu.dot_dimension_numbers<[1], [0], [0], [1], [0, 0, 1, 1], [], []>} : vector<16x256xf32>, vector<256x512xf32>, vector<16x512xf32> -> vector<16x512xf32>
    %c0_59 = arith.constant 0 : index
    %c0_60 = arith.constant 0 : index
    %76 = vector.load %arg8[%c0_59, %c0_60] : memref<1x512xf32, #tpu.memory_space<vmem>>, vector<1x512xf32>
    %77 = vector.broadcast %76 : vector<1x512xf32> to vector<16x512xf32>
    %78 = arith.addf %75, %77 : vector<16x512xf32>
    %79 = vector.extract_strided_slice %78 {offsets = [0, 0], sizes = [16, 384], strides = [1, 1]} : vector<16x512xf32> to vector<16x384xf32>
    %80 = arith.negf %79 : vector<16x384xf32>
    %81 = math.exp %80 : vector<16x384xf32>
    %cst_61 = arith.constant 1.000000e+00 : f32
    %82 = vector.broadcast %cst_61 : f32 to vector<16x384xf32>
    %83 = arith.addf %82, %81 : vector<16x384xf32>
    %84 = arith.divf %82, %83 : vector<16x384xf32>
    %85 = vector.extract_strided_slice %78 {offsets = [0, 384], sizes = [16, 128], strides = [1, 1]} : vector<16x512xf32> to vector<16x128xf32>
    %86 = math.tanh %85 : vector<16x128xf32>
    %87 = vector.extract_strided_slice %84 {offsets = [0, 0], sizes = [16, 128], strides = [1, 1]} : vector<16x384xf32> to vector<16x128xf32>
    %88 = vector.extract_strided_slice %84 {offsets = [0, 128], sizes = [16, 128], strides = [1, 1]} : vector<16x384xf32> to vector<16x128xf32>
    %89 = vector.extract_strided_slice %84 {offsets = [0, 256], sizes = [16, 128], strides = [1, 1]} : vector<16x384xf32> to vector<16x128xf32>
    %c0_62 = arith.constant 0 : index
    %c0_63 = arith.constant 0 : index
    %90 = vector.load %arg17[%c0_62, %c0_63] : memref<16x128xf32, #tpu.memory_space<vmem>>, vector<16x128xf32>
    %91 = arith.mulf %88, %90 : vector<16x128xf32>
    %c0_64 = arith.constant 0 : index
    %c0_65 = arith.constant 0 : index
    %92 = vector.load %arg15[%c0_64, %c0_65] : memref<16x256xf32, #tpu.memory_space<vmem>>, vector<16x128xf32>
    tpu.vector_store %arg15[%c0_64, %c0_65], %91 {strides = array<i32>} : memref<16x256xf32, #tpu.memory_space<vmem>>, vector<16x128xf32>,
    %93 = arith.mulf %87, %86 : vector<16x128xf32>
    %c0_66 = arith.constant 0 : index
    %c128_67 = arith.constant 128 : index
    %94 = vector.load %arg15[%c0_66, %c128_67] : memref<16x256xf32, #tpu.memory_space<vmem>>, vector<16x128xf32>
    tpu.vector_store %arg15[%c0_66, %c128_67], %93 {strides = array<i32>} : memref<16x256xf32, #tpu.memory_space<vmem>>, vector<16x128xf32>,
    %c0_68 = arith.constant 0 : index
    %c0_69 = arith.constant 0 : index
    %95 = vector.load %arg15[%c0_68, %c0_69] : memref<16x256xf32, #tpu.memory_space<vmem>>, vector<16x256xf32>
    %c0_70 = arith.constant 0 : index
    %c0_71 = arith.constant 0 : index
    %96 = vector.load %arg9[%c0_70, %c0_71] : memref<256x512xf32, #tpu.memory_space<vmem>>, vector<256x512xf32>
    %cst_72 = arith.constant dense<0.000000e+00> : vector<16x512xf32>
    %97 = tpu.matmul %95, %96, %cst_72 {dimension_numbers = #tpu.dot_dimension_numbers<[1], [0], [0], [1], [0, 0, 1, 1], [], []>} : vector<16x256xf32>, vector<256x512xf32>, vector<16x512xf32> -> vector<16x512xf32>
    %98 = arith.addf %97, %69 : vector<16x512xf32>
    %99 = vector.extract_strided_slice %98 {offsets = [0, 0], sizes = [16, 384], strides = [1, 1]} : vector<16x512xf32> to vector<16x384xf32>
    %100 = arith.negf %99 : vector<16x384xf32>
    %101 = math.exp %100 : vector<16x384xf32>
    %cst_73 = arith.constant 1.000000e+00 : f32
    %102 = vector.broadcast %cst_73 : f32 to vector<16x384xf32>
    %103 = arith.addf %102, %101 : vector<16x384xf32>
    %104 = arith.divf %102, %103 : vector<16x384xf32>
    %105 = vector.extract_strided_slice %98 {offsets = [0, 384], sizes = [16, 128], strides = [1, 1]} : vector<16x512xf32> to vector<16x128xf32>
    %106 = math.tanh %105 : vector<16x128xf32>
    %107 = vector.extract_strided_slice %104 {offsets = [0, 0], sizes = [16, 128], strides = [1, 1]} : vector<16x384xf32> to vector<16x128xf32>
    %108 = vector.extract_strided_slice %104 {offsets = [0, 128], sizes = [16, 128], strides = [1, 1]} : vector<16x384xf32> to vector<16x128xf32>
    %109 = vector.extract_strided_slice %104 {offsets = [0, 256], sizes = [16, 128], strides = [1, 1]} : vector<16x384xf32> to vector<16x128xf32>
    %c0_74 = arith.constant 0 : index
    %c0_75 = arith.constant 0 : index
    %110 = vector.load %arg18[%c0_74, %c0_75] : memref<16x128xf32, #tpu.memory_space<vmem>>, vector<16x128xf32>
    %111 = arith.mulf %108, %110 : vector<16x128xf32>
    %112 = arith.mulf %107, %106 : vector<16x128xf32>
    %113 = arith.addf %111, %112 : vector<16x128xf32>
    %114 = math.tanh %113 : vector<16x128xf32>
    %115 = arith.mulf %109, %114 : vector<16x128xf32>
    %116 = math.tanh %115 : vector<16x128xf32>
    %117 = arith.mulf %89, %116 : vector<16x128xf32>
    %c1_76 = arith.constant 1 : index
    %c0_77 = arith.constant 0 : index
    %c0_78 = arith.constant 0 : index
    %118 = vector.load %arg12[%c1_76, %c0_77, %c0_78] : memref<4x16x128xf32, #tpu.memory_space<vmem>>, vector<1x16x128xf32>
    %119 = vector.shape_cast %118 : vector<1x16x128xf32> to vector<16x128xf32>
    %120 = vector.shape_cast %117 : vector<16x128xf32> to vector<1x16x128xf32>
    tpu.vector_store %arg12[%c1_76, %c0_77, %c0_78], %120 {strides = array<i32>} : memref<4x16x128xf32, #tpu.memory_space<vmem>>, vector<1x16x128xf32>,
    %c0_79 = arith.constant 0 : index
    %c128_80 = arith.constant 128 : index
    %121 = vector.load %arg14[%c0_79, %c128_80] : memref<16x256xf32, #tpu.memory_space<vmem>>, vector<16x128xf32>
    tpu.vector_store %arg14[%c0_79, %c128_80], %117 {strides = array<i32>} : memref<16x256xf32, #tpu.memory_space<vmem>>, vector<16x128xf32>,
    %c0_81 = arith.constant 0 : index
    %c0_82 = arith.constant 0 : index
    %122 = vector.load %arg16[%c0_81, %c0_82] : memref<16x128xf32, #tpu.memory_space<vmem>>, vector<16x128xf32>
    tpu.vector_store %arg16[%c0_81, %c0_82], %115 {strides = array<i32>} : memref<16x128xf32, #tpu.memory_space<vmem>>, vector<16x128xf32>,
    %c0_83 = arith.constant 0 : index
    %c0_84 = arith.constant 0 : index
    %123 = vector.load %arg17[%c0_83, %c0_84] : memref<16x128xf32, #tpu.memory_space<vmem>>, vector<16x128xf32>
    tpu.vector_store %arg17[%c0_83, %c0_84], %115 {strides = array<i32>} : memref<16x128xf32, #tpu.memory_space<vmem>>, vector<16x128xf32>,
    %c0_85 = arith.constant 0 : index
    %c0_86 = arith.constant 0 : index
    %124 = vector.load %arg18[%c0_85, %c0_86] : memref<16x128xf32, #tpu.memory_space<vmem>>, vector<16x128xf32>
    tpu.vector_store %arg18[%c0_85, %c0_86], %113 {strides = array<i32>} : memref<16x128xf32, #tpu.memory_space<vmem>>, vector<16x128xf32>,
    %c1_i32 = arith.constant 1 : i32
    %125 = arith.cmpi eq, %arg1, %c1_i32 : i32
    %126 = arith.extui %125 : i1 to i32
    %c0_i32_87 = arith.constant 0 : i32
    %127 = arith.cmpi ne, %126, %c0_i32_87 : i32
    scf.if %127 {
      %c0_92 = arith.constant 0 : index
      %c0_93 = arith.constant 0 : index
      %c0_94 = arith.constant 0 : index
      %134 = vector.load %arg13[%c0_92, %c0_93, %c0_94] : memref<4x16x128xf32, #tpu.memory_space<vmem>>, vector<1x16x128xf32>
      %135 = vector.shape_cast %134 : vector<1x16x128xf32> to vector<16x128xf32>
      %136 = vector.shape_cast %117 : vector<16x128xf32> to vector<1x16x128xf32>
      tpu.vector_store %arg13[%c0_92, %c0_93, %c0_94], %136 {strides = array<i32>} : memref<4x16x128xf32, #tpu.memory_space<vmem>>, vector<1x16x128xf32>,
      %c1_95 = arith.constant 1 : index
      %c0_96 = arith.constant 0 : index
      %c0_97 = arith.constant 0 : index
      %137 = vector.load %arg13[%c1_95, %c0_96, %c0_97] : memref<4x16x128xf32, #tpu.memory_space<vmem>>, vector<1x16x128xf32>
      %138 = vector.shape_cast %137 : vector<1x16x128xf32> to vector<16x128xf32>
      %139 = vector.shape_cast %115 : vector<16x128xf32> to vector<1x16x128xf32>
      tpu.vector_store %arg13[%c1_95, %c0_96, %c0_97], %139 {strides = array<i32>} : memref<4x16x128xf32, #tpu.memory_space<vmem>>, vector<1x16x128xf32>,
      %c2 = arith.constant 2 : index
      %c0_98 = arith.constant 0 : index
      %c0_99 = arith.constant 0 : index
      %140 = vector.load %arg13[%c2, %c0_98, %c0_99] : memref<4x16x128xf32, #tpu.memory_space<vmem>>, vector<1x16x128xf32>
      %141 = vector.shape_cast %140 : vector<1x16x128xf32> to vector<16x128xf32>
      %142 = vector.shape_cast %115 : vector<16x128xf32> to vector<1x16x128xf32>
      tpu.vector_store %arg13[%c2, %c0_98, %c0_99], %142 {strides = array<i32>} : memref<4x16x128xf32, #tpu.memory_space<vmem>>, vector<1x16x128xf32>,
      %c3 = arith.constant 3 : index
      %c0_100 = arith.constant 0 : index
      %c0_101 = arith.constant 0 : index
      %143 = vector.load %arg13[%c3, %c0_100, %c0_101] : memref<4x16x128xf32, #tpu.memory_space<vmem>>, vector<1x16x128xf32>
      %144 = vector.shape_cast %143 : vector<1x16x128xf32> to vector<16x128xf32>
      %145 = vector.shape_cast %113 : vector<16x128xf32> to vector<1x16x128xf32>
      tpu.vector_store %arg13[%c3, %c0_100, %c0_101], %145 {strides = array<i32>} : memref<4x16x128xf32, #tpu.memory_space<vmem>>, vector<1x16x128xf32>,
    } else {
    }
    %c1_i32_88 = arith.constant 1 : i32
    %128 = arith.cmpi slt, %arg1, %c1_i32_88 : i32
    %129 = arith.extui %128 : i1 to i32
    %c0_i32_89 = arith.constant 0 : i32
    %130 = arith.cmpi ne, %129, %c0_i32_89 : i32
    scf.if %130 {
      %c0_92 = arith.constant 0 : index
      %c0_93 = arith.constant 0 : index
      %134 = vector.load %arg16[%c0_92, %c0_93] : memref<16x128xf32, #tpu.memory_space<vmem>>, vector<16x128xf32>
      %c0_94 = arith.constant 0 : index
      %c0_95 = arith.constant 0 : index
      %135 = vector.load %arg10[%c0_94, %c0_95] : memref<128x512xf32, #tpu.memory_space<vmem>>, vector<128x512xf32>
      %cst_96 = arith.constant dense<0.000000e+00> : vector<16x512xf32>
      %136 = tpu.matmul %134, %135, %cst_96 {dimension_numbers = #tpu.dot_dimension_numbers<[1], [0], [0], [1], [0, 0, 1, 1], [], []>} : vector<16x128xf32>, vector<128x512xf32>, vector<16x512xf32> -> vector<16x512xf32>
      %c0_97 = arith.constant 0 : index
      %c0_98 = arith.constant 0 : index
      %137 = vector.load %arg11[%c0_97, %c0_98] : memref<1x512xf32, #tpu.memory_space<vmem>>, vector<1x512xf32>
      %138 = vector.broadcast %137 : vector<1x512xf32> to vector<16x512xf32>
      %139 = arith.addf %136, %138 : vector<16x512xf32>
      %c2 = arith.constant 2 : index
      %c0_99 = arith.constant 0 : index
      %c0_100 = arith.constant 0 : index
      %140 = vector.load %arg2[%c2, %c0_99, %c0_100] : memref<4x16x128xf32, #tpu.memory_space<vmem>>, vector<1x16x128xf32>
      %141 = vector.shape_cast %140 : vector<1x16x128xf32> to vector<16x128xf32>
      %c0_101 = arith.constant 0 : index
      %c0_102 = arith.constant 0 : index
      %142 = vector.load %arg14[%c0_101, %c0_102] : memref<16x256xf32, #tpu.memory_space<vmem>>, vector<16x128xf32>
      tpu.vector_store %arg14[%c0_101, %c0_102], %141 {strides = array<i32>} : memref<16x256xf32, #tpu.memory_space<vmem>>, vector<16x128xf32>,
      %c0_103 = arith.constant 0 : index
      %c0_104 = arith.constant 0 : index
      %143 = vector.load %arg14[%c0_103, %c0_104] : memref<16x256xf32, #tpu.memory_space<vmem>>, vector<16x256xf32>
      %c0_105 = arith.constant 0 : index
      %c0_106 = arith.constant 0 : index
      %144 = vector.load %arg7[%c0_105, %c0_106] : memref<256x512xf32, #tpu.memory_space<vmem>>, vector<256x512xf32>
      %cst_107 = arith.constant dense<0.000000e+00> : vector<16x512xf32>
      %145 = tpu.matmul %143, %144, %cst_107 {dimension_numbers = #tpu.dot_dimension_numbers<[1], [0], [0], [1], [0, 0, 1, 1], [], []>} : vector<16x256xf32>, vector<256x512xf32>, vector<16x512xf32> -> vector<16x512xf32>
      %c0_108 = arith.constant 0 : index
      %c0_109 = arith.constant 0 : index
      %146 = vector.load %arg8[%c0_108, %c0_109] : memref<1x512xf32, #tpu.memory_space<vmem>>, vector<1x512xf32>
      %147 = vector.broadcast %146 : vector<1x512xf32> to vector<16x512xf32>
      %148 = arith.addf %145, %147 : vector<16x512xf32>
      %149 = vector.extract_strided_slice %148 {offsets = [0, 0], sizes = [16, 384], strides = [1, 1]} : vector<16x512xf32> to vector<16x384xf32>
      %150 = arith.negf %149 : vector<16x384xf32>
      %151 = math.exp %150 : vector<16x384xf32>
      %cst_110 = arith.constant 1.000000e+00 : f32
      %152 = vector.broadcast %cst_110 : f32 to vector<16x384xf32>
      %153 = arith.addf %152, %151 : vector<16x384xf32>
      %154 = arith.divf %152, %153 : vector<16x384xf32>
      %155 = vector.extract_strided_slice %148 {offsets = [0, 384], sizes = [16, 128], strides = [1, 1]} : vector<16x512xf32> to vector<16x128xf32>
      %156 = math.tanh %155 : vector<16x128xf32>
      %157 = vector.extract_strided_slice %154 {offsets = [0, 0], sizes = [16, 128], strides = [1, 1]} : vector<16x384xf32> to vector<16x128xf32>
      %158 = vector.extract_strided_slice %154 {offsets = [0, 128], sizes = [16, 128], strides = [1, 1]} : vector<16x384xf32> to vector<16x128xf32>
      %159 = vector.extract_strided_slice %154 {offsets = [0, 256], sizes = [16, 128], strides = [1, 1]} : vector<16x384xf32> to vector<16x128xf32>
      %c0_111 = arith.constant 0 : index
      %c0_112 = arith.constant 0 : index
      %160 = vector.load %arg17[%c0_111, %c0_112] : memref<16x128xf32, #tpu.memory_space<vmem>>, vector<16x128xf32>
      %161 = arith.mulf %158, %160 : vector<16x128xf32>
      %c0_113 = arith.constant 0 : index
      %c0_114 = arith.constant 0 : index
      %162 = vector.load %arg15[%c0_113, %c0_114] : memref<16x256xf32, #tpu.memory_space<vmem>>, vector<16x128xf32>
      tpu.vector_store %arg15[%c0_113, %c0_114], %161 {strides = array<i32>} : memref<16x256xf32, #tpu.memory_space<vmem>>, vector<16x128xf32>,
      %163 = arith.mulf %157, %156 : vector<16x128xf32>
      %c0_115 = arith.constant 0 : index
      %c128_116 = arith.constant 128 : index
      %164 = vector.load %arg15[%c0_115, %c128_116] : memref<16x256xf32, #tpu.memory_space<vmem>>, vector<16x128xf32>
      tpu.vector_store %arg15[%c0_115, %c128_116], %163 {strides = array<i32>} : memref<16x256xf32, #tpu.memory_space<vmem>>, vector<16x128xf32>,
      %c0_117 = arith.constant 0 : index
      %c0_118 = arith.constant 0 : index
      %165 = vector.load %arg15[%c0_117, %c0_118] : memref<16x256xf32, #tpu.memory_space<vmem>>, vector<16x256xf32>
      %c0_119 = arith.constant 0 : index
      %c0_120 = arith.constant 0 : index
      %166 = vector.load %arg9[%c0_119, %c0_120] : memref<256x512xf32, #tpu.memory_space<vmem>>, vector<256x512xf32>
      %cst_121 = arith.constant dense<0.000000e+00> : vector<16x512xf32>
      %167 = tpu.matmul %165, %166, %cst_121 {dimension_numbers = #tpu.dot_dimension_numbers<[1], [0], [0], [1], [0, 0, 1, 1], [], []>} : vector<16x256xf32>, vector<256x512xf32>, vector<16x512xf32> -> vector<16x512xf32>
      %168 = arith.addf %167, %139 : vector<16x512xf32>
      %169 = vector.extract_strided_slice %168 {offsets = [0, 0], sizes = [16, 384], strides = [1, 1]} : vector<16x512xf32> to vector<16x384xf32>
      %170 = arith.negf %169 : vector<16x384xf32>
      %171 = math.exp %170 : vector<16x384xf32>
      %cst_122 = arith.constant 1.000000e+00 : f32
      %172 = vector.broadcast %cst_122 : f32 to vector<16x384xf32>
      %173 = arith.addf %172, %171 : vector<16x384xf32>
      %174 = arith.divf %172, %173 : vector<16x384xf32>
      %175 = vector.extract_strided_slice %168 {offsets = [0, 384], sizes = [16, 128], strides = [1, 1]} : vector<16x512xf32> to vector<16x128xf32>
      %176 = math.tanh %175 : vector<16x128xf32>
      %177 = vector.extract_strided_slice %174 {offsets = [0, 0], sizes = [16, 128], strides = [1, 1]} : vector<16x384xf32> to vector<16x128xf32>
      %178 = vector.extract_strided_slice %174 {offsets = [0, 128], sizes = [16, 128], strides = [1, 1]} : vector<16x384xf32> to vector<16x128xf32>
      %179 = vector.extract_strided_slice %174 {offsets = [0, 256], sizes = [16, 128], strides = [1, 1]} : vector<16x384xf32> to vector<16x128xf32>
      %c0_123 = arith.constant 0 : index
      %c0_124 = arith.constant 0 : index
      %180 = vector.load %arg18[%c0_123, %c0_124] : memref<16x128xf32, #tpu.memory_space<vmem>>, vector<16x128xf32>
      %181 = arith.mulf %178, %180 : vector<16x128xf32>
      %182 = arith.mulf %177, %176 : vector<16x128xf32>
      %183 = arith.addf %181, %182 : vector<16x128xf32>
      %184 = math.tanh %183 : vector<16x128xf32>
      %185 = arith.mulf %179, %184 : vector<16x128xf32>
      %186 = math.tanh %185 : vector<16x128xf32>
      %187 = arith.mulf %159, %186 : vector<16x128xf32>
      %c2_125 = arith.constant 2 : index
      %c0_126 = arith.constant 0 : index
      %c0_127 = arith.constant 0 : index
      %188 = vector.load %arg12[%c2_125, %c0_126, %c0_127] : memref<4x16x128xf32, #tpu.memory_space<vmem>>, vector<1x16x128xf32>
      %189 = vector.shape_cast %188 : vector<1x16x128xf32> to vector<16x128xf32>
      %190 = vector.shape_cast %187 : vector<16x128xf32> to vector<1x16x128xf32>
      tpu.vector_store %arg12[%c2_125, %c0_126, %c0_127], %190 {strides = array<i32>} : memref<4x16x128xf32, #tpu.memory_space<vmem>>, vector<1x16x128xf32>,
      %c0_128 = arith.constant 0 : index
      %c128_129 = arith.constant 128 : index
      %191 = vector.load %arg14[%c0_128, %c128_129] : memref<16x256xf32, #tpu.memory_space<vmem>>, vector<16x128xf32>
      tpu.vector_store %arg14[%c0_128, %c128_129], %187 {strides = array<i32>} : memref<16x256xf32, #tpu.memory_space<vmem>>, vector<16x128xf32>,
      %c0_130 = arith.constant 0 : index
      %c0_131 = arith.constant 0 : index
      %192 = vector.load %arg16[%c0_130, %c0_131] : memref<16x128xf32, #tpu.memory_space<vmem>>, vector<16x128xf32>
      tpu.vector_store %arg16[%c0_130, %c0_131], %185 {strides = array<i32>} : memref<16x128xf32, #tpu.memory_space<vmem>>, vector<16x128xf32>,
      %c0_132 = arith.constant 0 : index
      %c0_133 = arith.constant 0 : index
      %193 = vector.load %arg17[%c0_132, %c0_133] : memref<16x128xf32, #tpu.memory_space<vmem>>, vector<16x128xf32>
      tpu.vector_store %arg17[%c0_132, %c0_133], %185 {strides = array<i32>} : memref<16x128xf32, #tpu.memory_space<vmem>>, vector<16x128xf32>,
      %c0_134 = arith.constant 0 : index
      %c0_135 = arith.constant 0 : index
      %194 = vector.load %arg18[%c0_134, %c0_135] : memref<16x128xf32, #tpu.memory_space<vmem>>, vector<16x128xf32>
      tpu.vector_store %arg18[%c0_134, %c0_135], %183 {strides = array<i32>} : memref<16x128xf32, #tpu.memory_space<vmem>>, vector<16x128xf32>,
    } else {
    }
    %c1_i32_90 = arith.constant 1 : i32
    %131 = arith.cmpi slt, %arg1, %c1_i32_90 : i32
    %132 = arith.extui %131 : i1 to i32
    %c0_i32_91 = arith.constant 0 : i32
    %133 = arith.cmpi ne, %132, %c0_i32_91 : i32
    scf.if %133 {
      %c0_92 = arith.constant 0 : index
      %c0_93 = arith.constant 0 : index
      %134 = vector.load %arg16[%c0_92, %c0_93] : memref<16x128xf32, #tpu.memory_space<vmem>>, vector<16x128xf32>
      %c0_94 = arith.constant 0 : index
      %c0_95 = arith.constant 0 : index
      %135 = vector.load %arg10[%c0_94, %c0_95] : memref<128x512xf32, #tpu.memory_space<vmem>>, vector<128x512xf32>
      %cst_96 = arith.constant dense<0.000000e+00> : vector<16x512xf32>
      %136 = tpu.matmul %134, %135, %cst_96 {dimension_numbers = #tpu.dot_dimension_numbers<[1], [0], [0], [1], [0, 0, 1, 1], [], []>} : vector<16x128xf32>, vector<128x512xf32>, vector<16x512xf32> -> vector<16x512xf32>
      %c0_97 = arith.constant 0 : index
      %c0_98 = arith.constant 0 : index
      %137 = vector.load %arg11[%c0_97, %c0_98] : memref<1x512xf32, #tpu.memory_space<vmem>>, vector<1x512xf32>
      %138 = vector.broadcast %137 : vector<1x512xf32> to vector<16x512xf32>
      %139 = arith.addf %136, %138 : vector<16x512xf32>
      %c3 = arith.constant 3 : index
      %c0_99 = arith.constant 0 : index
      %c0_100 = arith.constant 0 : index
      %140 = vector.load %arg2[%c3, %c0_99, %c0_100] : memref<4x16x128xf32, #tpu.memory_space<vmem>>, vector<1x16x128xf32>
      %141 = vector.shape_cast %140 : vector<1x16x128xf32> to vector<16x128xf32>
      %c0_101 = arith.constant 0 : index
      %c0_102 = arith.constant 0 : index
      %142 = vector.load %arg14[%c0_101, %c0_102] : memref<16x256xf32, #tpu.memory_space<vmem>>, vector<16x128xf32>
      tpu.vector_store %arg14[%c0_101, %c0_102], %141 {strides = array<i32>} : memref<16x256xf32, #tpu.memory_space<vmem>>, vector<16x128xf32>,
      %c0_103 = arith.constant 0 : index
      %c0_104 = arith.constant 0 : index
      %143 = vector.load %arg14[%c0_103, %c0_104] : memref<16x256xf32, #tpu.memory_space<vmem>>, vector<16x256xf32>
      %c0_105 = arith.constant 0 : index
      %c0_106 = arith.constant 0 : index
      %144 = vector.load %arg7[%c0_105, %c0_106] : memref<256x512xf32, #tpu.memory_space<vmem>>, vector<256x512xf32>
      %cst_107 = arith.constant dense<0.000000e+00> : vector<16x512xf32>
      %145 = tpu.matmul %143, %144, %cst_107 {dimension_numbers = #tpu.dot_dimension_numbers<[1], [0], [0], [1], [0, 0, 1, 1], [], []>} : vector<16x256xf32>, vector<256x512xf32>, vector<16x512xf32> -> vector<16x512xf32>
      %c0_108 = arith.constant 0 : index
      %c0_109 = arith.constant 0 : index
      %146 = vector.load %arg8[%c0_108, %c0_109] : memref<1x512xf32, #tpu.memory_space<vmem>>, vector<1x512xf32>
      %147 = vector.broadcast %146 : vector<1x512xf32> to vector<16x512xf32>
      %148 = arith.addf %145, %147 : vector<16x512xf32>
      %149 = vector.extract_strided_slice %148 {offsets = [0, 0], sizes = [16, 384], strides = [1, 1]} : vector<16x512xf32> to vector<16x384xf32>
      %150 = arith.negf %149 : vector<16x384xf32>
      %151 = math.exp %150 : vector<16x384xf32>
      %cst_110 = arith.constant 1.000000e+00 : f32
      %152 = vector.broadcast %cst_110 : f32 to vector<16x384xf32>
      %153 = arith.addf %152, %151 : vector<16x384xf32>
      %154 = arith.divf %152, %153 : vector<16x384xf32>
      %155 = vector.extract_strided_slice %148 {offsets = [0, 384], sizes = [16, 128], strides = [1, 1]} : vector<16x512xf32> to vector<16x128xf32>
      %156 = math.tanh %155 : vector<16x128xf32>
      %157 = vector.extract_strided_slice %154 {offsets = [0, 0], sizes = [16, 128], strides = [1, 1]} : vector<16x384xf32> to vector<16x128xf32>
      %158 = vector.extract_strided_slice %154 {offsets = [0, 128], sizes = [16, 128], strides = [1, 1]} : vector<16x384xf32> to vector<16x128xf32>
      %159 = vector.extract_strided_slice %154 {offsets = [0, 256], sizes = [16, 128], strides = [1, 1]} : vector<16x384xf32> to vector<16x128xf32>
      %c0_111 = arith.constant 0 : index
      %c0_112 = arith.constant 0 : index
      %160 = vector.load %arg17[%c0_111, %c0_112] : memref<16x128xf32, #tpu.memory_space<vmem>>, vector<16x128xf32>
      %161 = arith.mulf %158, %160 : vector<16x128xf32>
      %c0_113 = arith.constant 0 : index
      %c0_114 = arith.constant 0 : index
      %162 = vector.load %arg15[%c0_113, %c0_114] : memref<16x256xf32, #tpu.memory_space<vmem>>, vector<16x128xf32>
      tpu.vector_store %arg15[%c0_113, %c0_114], %161 {strides = array<i32>} : memref<16x256xf32, #tpu.memory_space<vmem>>, vector<16x128xf32>,
      %163 = arith.mulf %157, %156 : vector<16x128xf32>
      %c0_115 = arith.constant 0 : index
      %c128_116 = arith.constant 128 : index
      %164 = vector.load %arg15[%c0_115, %c128_116] : memref<16x256xf32, #tpu.memory_space<vmem>>, vector<16x128xf32>
      tpu.vector_store %arg15[%c0_115, %c128_116], %163 {strides = array<i32>} : memref<16x256xf32, #tpu.memory_space<vmem>>, vector<16x128xf32>,
      %c0_117 = arith.constant 0 : index
      %c0_118 = arith.constant 0 : index
      %165 = vector.load %arg15[%c0_117, %c0_118] : memref<16x256xf32, #tpu.memory_space<vmem>>, vector<16x256xf32>
      %c0_119 = arith.constant 0 : index
      %c0_120 = arith.constant 0 : index
      %166 = vector.load %arg9[%c0_119, %c0_120] : memref<256x512xf32, #tpu.memory_space<vmem>>, vector<256x512xf32>
      %cst_121 = arith.constant dense<0.000000e+00> : vector<16x512xf32>
      %167 = tpu.matmul %165, %166, %cst_121 {dimension_numbers = #tpu.dot_dimension_numbers<[1], [0], [0], [1], [0, 0, 1, 1], [], []>} : vector<16x256xf32>, vector<256x512xf32>, vector<16x512xf32> -> vector<16x512xf32>
      %168 = arith.addf %167, %139 : vector<16x512xf32>
      %169 = vector.extract_strided_slice %168 {offsets = [0, 0], sizes = [16, 384], strides = [1, 1]} : vector<16x512xf32> to vector<16x384xf32>
      %170 = arith.negf %169 : vector<16x384xf32>
      %171 = math.exp %170 : vector<16x384xf32>
      %cst_122 = arith.constant 1.000000e+00 : f32
      %172 = vector.broadcast %cst_122 : f32 to vector<16x384xf32>
      %173 = arith.addf %172, %171 : vector<16x384xf32>
      %174 = arith.divf %172, %173 : vector<16x384xf32>
      %175 = vector.extract_strided_slice %168 {offsets = [0, 384], sizes = [16, 128], strides = [1, 1]} : vector<16x512xf32> to vector<16x128xf32>
      %176 = math.tanh %175 : vector<16x128xf32>
      %177 = vector.extract_strided_slice %174 {offsets = [0, 0], sizes = [16, 128], strides = [1, 1]} : vector<16x384xf32> to vector<16x128xf32>
      %178 = vector.extract_strided_slice %174 {offsets = [0, 128], sizes = [16, 128], strides = [1, 1]} : vector<16x384xf32> to vector<16x128xf32>
      %179 = vector.extract_strided_slice %174 {offsets = [0, 256], sizes = [16, 128], strides = [1, 1]} : vector<16x384xf32> to vector<16x128xf32>
      %c0_123 = arith.constant 0 : index
      %c0_124 = arith.constant 0 : index
      %180 = vector.load %arg18[%c0_123, %c0_124] : memref<16x128xf32, #tpu.memory_space<vmem>>, vector<16x128xf32>
      %181 = arith.mulf %178, %180 : vector<16x128xf32>
      %182 = arith.mulf %177, %176 : vector<16x128xf32>
      %183 = arith.addf %181, %182 : vector<16x128xf32>
      %184 = math.tanh %183 : vector<16x128xf32>
      %185 = arith.mulf %179, %184 : vector<16x128xf32>
      %186 = math.tanh %185 : vector<16x128xf32>
      %187 = arith.mulf %159, %186 : vector<16x128xf32>
      %c3_125 = arith.constant 3 : index
      %c0_126 = arith.constant 0 : index
      %c0_127 = arith.constant 0 : index
      %188 = vector.load %arg12[%c3_125, %c0_126, %c0_127] : memref<4x16x128xf32, #tpu.memory_space<vmem>>, vector<1x16x128xf32>
      %189 = vector.shape_cast %188 : vector<1x16x128xf32> to vector<16x128xf32>
      %190 = vector.shape_cast %187 : vector<16x128xf32> to vector<1x16x128xf32>
      tpu.vector_store %arg12[%c3_125, %c0_126, %c0_127], %190 {strides = array<i32>} : memref<4x16x128xf32, #tpu.memory_space<vmem>>, vector<1x16x128xf32>,
      %c0_128 = arith.constant 0 : index
      %c128_129 = arith.constant 128 : index
      %191 = vector.load %arg14[%c0_128, %c128_129] : memref<16x256xf32, #tpu.memory_space<vmem>>, vector<16x128xf32>
      tpu.vector_store %arg14[%c0_128, %c128_129], %187 {strides = array<i32>} : memref<16x256xf32, #tpu.memory_space<vmem>>, vector<16x128xf32>,
      %c0_130 = arith.constant 0 : index
      %c0_131 = arith.constant 0 : index
      %192 = vector.load %arg16[%c0_130, %c0_131] : memref<16x128xf32, #tpu.memory_space<vmem>>, vector<16x128xf32>
      tpu.vector_store %arg16[%c0_130, %c0_131], %185 {strides = array<i32>} : memref<16x128xf32, #tpu.memory_space<vmem>>, vector<16x128xf32>,
      %c0_132 = arith.constant 0 : index
      %c0_133 = arith.constant 0 : index
      %193 = vector.load %arg17[%c0_132, %c0_133] : memref<16x128xf32, #tpu.memory_space<vmem>>, vector<16x128xf32>
      tpu.vector_store %arg17[%c0_132, %c0_133], %185 {strides = array<i32>} : memref<16x128xf32, #tpu.memory_space<vmem>>, vector<16x128xf32>,
      %c0_134 = arith.constant 0 : index
      %c0_135 = arith.constant 0 : index
      %194 = vector.load %arg18[%c0_134, %c0_135] : memref<16x128xf32, #tpu.memory_space<vmem>>, vector<16x128xf32>
      tpu.vector_store %arg18[%c0_134, %c0_135], %183 {strides = array<i32>} : memref<16x128xf32, #tpu.memory_space<vmem>>, vector<16x128xf32>,
    } else {
    }
    return
  }
  func.func @transform_0(%arg0: i32, %arg1: i32) -> (i32, i32, i32) {
    %c0_i32 = arith.constant 0 : i32
    %c0_i32_0 = arith.constant 0 : i32
    return %arg1, %arg0, %c0_i32 : i32, i32, i32
  }
  func.func @transform_1(%arg0: i32, %arg1: i32) -> (i32, i32) {
    %c0_i32 = arith.constant 0 : i32
    %c0_i32_0 = arith.constant 0 : i32
    return %arg0, %c0_i32 : i32, i32
  }
  func.func @transform_2(%arg0: i32, %arg1: i32) -> (i32, i32) {
    %c0_i32 = arith.constant 0 : i32
    %c0_i32_0 = arith.constant 0 : i32
    return %arg0, %c0_i32 : i32, i32
  }
  func.func @transform_3(%arg0: i32, %arg1: i32) -> (i32, i32) {
    %c0_i32 = arith.constant 0 : i32
    %c0_i32_0 = arith.constant 0 : i32
    return %arg0, %c0_i32 : i32, i32
  }
  func.func @transform_4(%arg0: i32, %arg1: i32) -> (i32, i32) {
    %c0_i32 = arith.constant 0 : i32
    %c0_i32_0 = arith.constant 0 : i32
    return %arg0, %c0_i32 : i32, i32
  }
  func.func @transform_5(%arg0: i32, %arg1: i32) -> (i32, i32) {
    %c0_i32 = arith.constant 0 : i32
    %c0_i32_0 = arith.constant 0 : i32
    %c0_i32_1 = arith.constant 0 : i32
    return %c0_i32, %c0_i32_0 : i32, i32
  }
  func.func @transform_6(%arg0: i32, %arg1: i32) -> (i32, i32) {
    %c0_i32 = arith.constant 0 : i32
    %c0_i32_0 = arith.constant 0 : i32
    %c0_i32_1 = arith.constant 0 : i32
    return %c0_i32, %c0_i32_0 : i32, i32
  }
  func.func @transform_7(%arg0: i32, %arg1: i32) -> (i32, i32) {
    %c0_i32 = arith.constant 0 : i32
    %c0_i32_0 = arith.constant 0 : i32
    %c0_i32_1 = arith.constant 0 : i32
    return %c0_i32, %c0_i32_0 : i32, i32
  }
  func.func @transform_8(%arg0: i32, %arg1: i32) -> (i32, i32) {
    %c0_i32 = arith.constant 0 : i32
    %c0_i32_0 = arith.constant 0 : i32
    %c0_i32_1 = arith.constant 0 : i32
    return %c0_i32, %c0_i32_0 : i32, i32
  }
  func.func @transform_9(%arg0: i32, %arg1: i32) -> (i32, i32) {
    %c0_i32 = arith.constant 0 : i32
    %c0_i32_0 = arith.constant 0 : i32
    %c0_i32_1 = arith.constant 0 : i32
    return %c0_i32, %c0_i32_0 : i32, i32
  }
  func.func @transform_10(%arg0: i32, %arg1: i32) -> (i32, i32, i32) {
    %c0_i32 = arith.constant 0 : i32
    %c0_i32_0 = arith.constant 0 : i32
    return %arg1, %arg0, %c0_i32 : i32, i32, i32
  }
  func.func @transform_11(%arg0: i32, %arg1: i32) -> (i32, i32, i32) {
    %c0_i32 = arith.constant 0 : i32
    %c0_i32_0 = arith.constant 0 : i32
    %c0_i32_1 = arith.constant 0 : i32
    return %c0_i32, %arg0, %c0_i32_0 : i32, i32, i32
  }
}

</mosaic_0001>

<llo_original>
// kernel: _nested_lstm_sequence_jit.1
$region0: #{_nested_lstm_sequence_jit.1}
  #allocation0 [shape = 'u32[]', space=smem, size = 0x4, offset = 0x4, fixed_abs, tag = 'smem constant byte address 0x4 - core index']
  #allocation1 [shape = 'u32[144,128]{1,0:T(1,128)}', space=vmem, size = 0x12000, scoped, tag = 'internal scratch']
  #allocation2 [shape = 'f32[16,256]{1,0:T(8,128)}', space=vmem, size = 0x4000, scoped, tag = 'scratch operand']
  #allocation3 [shape = 'f32[16,256]{1,0:T(8,128)}', space=vmem, size = 0x4000, scoped, tag = 'scratch operand']
  #allocation4 [shape = 'f32[16,128]{1,0:T(8,128)}', space=vmem, size = 0x2000, scoped, tag = 'scratch operand']
  #allocation5 [shape = 'f32[16,128]{1,0:T(8,128)}', space=vmem, size = 0x2000, scoped, tag = 'scratch operand']
  #allocation6 [shape = 'f32[16,128]{1,0:T(8,128)}', space=vmem, size = 0x2000, scoped, tag = 'scratch operand']
  %s0 = inlined_call_operand.vmem [shape: f32[8,16,128], index: 0, kind: input, shape index: {}]
  %s1 = inlined_call_operand.vmem [shape: f32[16,128], index: 1, kind: input, shape index: {}]
  %s2 = inlined_call_operand.vmem [shape: f32[16,128], index: 2, kind: input, shape index: {}]
  %s3 = inlined_call_operand.vmem [shape: f32[16,128], index: 3, kind: input, shape index: {}]
  %s4 = inlined_call_operand.vmem [shape: f32[16,128], index: 4, kind: input, shape index: {}]
  %s5 = inlined_call_operand.hbm [shape: f32[256,512], index: 5, kind: input, shape index: {}]
  %s6 = inlined_call_operand.vmem [shape: f32[1,512], index: 6, kind: input, shape index: {}]
  %s7 = inlined_call_operand.hbm [shape: f32[256,512], index: 7, kind: input, shape index: {}]
  %s8 = inlined_call_operand.hbm [shape: f32[128,512], index: 8, kind: input, shape index: {}]
  %s9 = inlined_call_operand.vmem [shape: f32[1,512], index: 9, kind: input, shape index: {}]
  %s10 = inlined_call_operand.vmem [shape: f32[8,16,128], index: 10, kind: output, shape index: {0}]
  %s11 = inlined_call_operand.vmem [shape: f32[4,16,128], index: 11, kind: output, shape index: {1}]
  %12 = xla_tuple %s10, %s11
  %s13 = sld [smem:[#allocation0]]
  $region105: #{_nested_lstm_sequence_jit.1} parent=0
    _
  %s15 = ssub.s32 1, %s13
  %s16 = scalar_select 0, %s15, %s13
  $region1: #{_nested_lstm_sequence_jit.1} parent=0
    #allocation7 [shape = 'u8[524288]{0}', space=vmem, size = 0x80000, scoped, tag = 'input window, operand 5, single buffered']
    #allocation8 [shape = 's32[2]{0}', space=sflag, size = 0x8, scoped, tag = 'scoped memory for _nested_lstm_sequence_jit.1']
    #allocation9 [shape = 'u8[524288]{0}', space=vmem, size = 0x80000, scoped, tag = 'input window, operand 7, single buffered']
    #allocation10 [shape = 's32[1]{0}', space=sflag, size = 0x4, scoped, tag = 'scoped memory for _nested_lstm_sequence_jit.1']
    #allocation11 [shape = 'u8[262144]{0}', space=vmem, size = 0x40000, scoped, tag = 'input window, operand 8, single buffered']
    %17 = vsyncpa [#allocation8], 0
    %18 = vsyncpa [#allocation10], 0
    loop: start=0, step=1, limit=4
    $region2: #{_nested_lstm_sequence_jit.1} parent=1 // loop_pre_header
      _
    $region3: #{_nested_lstm_sequence_jit.1} parent=1 // loop_header
      %s20 = sphi 0, %s24
      %p21 = scmp.ge.s32.totalorder %s20, 4
      %s27 = sphi 0, %s39
      %s28 = sphi 0, %s35
      %s29 = sphi 0, %s27
      %s30 = sphi 0, %s28
      %s31 = sphi 0, %s29
      %s32 = sphi 0, %s30
      %s44 = sphi 0, %s46
      %s47 = sphi 0, %s44
      %s48 = sphi 0, %s47
      %s64 = sphi 0, %s48
      %s70 = sphi 0, %s72
      %s73 = sphi 0, %s70
      %s74 = sphi 0, %s73
      %s90 = sphi 0, %s74
      %s96 = sphi 0, %s98
      %s99 = sphi 0, %s96
      %s100 = sphi 0, %s99
      %s116 = sphi 0, %s100
      %s122 = sphi 0, %s124
      %s125 = sphi 0, %s122
      %s126 = sphi 0, %s125
      %s142 = sphi 0, %s126
      %s148 = sphi 0, %s150
      %s151 = sphi 0, %s148
      %s152 = sphi 0, %s151
      %s168 = sphi 0, %s152
      %s172 = sphi 0, %s172
      %s174 = sphi 0, %s172
      %s175 = sphi 0, %s174
      %s189 = sphi 0, %s175
      %s193 = sphi 0, %s193
      %s195 = sphi 0, %s193
      %s196 = sphi 0, %s195
      %s210 = sphi 0, %s196
      %s214 = sphi 0, %s214
      %s216 = sphi 0, %s214
      %s217 = sphi 0, %s216
      %s231 = sphi 0, %s217
      %s235 = sphi 0, %s235
      %s237 = sphi 0, %s235
      %s238 = sphi 0, %s237
      %s252 = sphi 0, %s238
      %s256 = sphi 0, %s256
      %s258 = sphi 0, %s256
      %s259 = sphi 0, %s258
      %s273 = sphi 0, %s259
      %s281 = sphi 0, %s283
      %s284 = sphi 0, %s281
      %s285 = sphi 0, %s284
      %s301 = sphi 0, %s285
      %s307 = sphi 0, %s309
      %s310 = sphi 0, %s307
      %s311 = sphi 0, %s310
      %s327 = sphi 0, %s311
    $region4: #{_nested_lstm_sequence_jit.1} parent=1 // loop_header_branch
      %23 = sbr.rel (%p21) target = $region8
    $region5: #{_nested_lstm_sequence_jit.1} parent=1 // loop_body
      %s25 = ssub.s32 %s20, 1
      %s26 = ssub.s32 %s20, 2
      %s33 = sadd.s32 1, %s28
      %p34 = scmp.ge.s32.totalorder %s33, 2
      %s35 = scalar_select %p34, 0, %s33
      %s36 = sadd.s32 1, %s27
      %s37 = scalar_select %p34, %s36, %s27
      %p38 = scmp.ge.s32.totalorder %s37, 1
      %s39 = scalar_select %p38, 0, %s37
      %s40 = ssub.s32 %s28, %s35
      %s41 = ssub.s32 %s27, %s39
      %s42 = sor.u32 %s40, %s41
      %p43 = scmp.eq.s32.totalorder %s42, 0
      %s45 = sadd.s32 %s44, 1
      %s46 = scalar_select %p43, %s44, %s45
      %p49 = pneg %p43
      %p50 = scmp.eq.s32.totalorder %s20, 1
      %p51 = por %p49, %p50
      %p52 = scmp.ne.s32.totalorder %s44, %s47
      %p53 = scmp.eq.s32.totalorder %s20, 0
      %p54 = por %p52, %p53
      %p55 = scmp.ne.s32.totalorder %s44, %s47
      %p56 = scmp.eq.s32.totalorder %s25, 1
      %p57 = por %p55, %p56
      %p58 = scmp.ne.s32.totalorder %s47, %s48
      %p59 = scmp.eq.s32.totalorder %s25, 0
      %p60 = por %p58, %p59
      %p61 = scmp.ne.s32.totalorder %s47, %s48
      %p62 = scmp.eq.s32.totalorder %s26, 1
      %p63 = por %p61, %p62
      %p65 = scmp.ne.s32.totalorder %s48, %s64
      %p66 = scmp.eq.s32.totalorder %s26, 0
      %p67 = por %p65, %p66
      %s68 = ssub.s32 %s27, %s39
      %p69 = scmp.eq.s32.totalorder %s68, 0
      %s71 = sadd.s32 %s70, 1
      %s72 = scalar_select %p69, %s70, %s71
      %p75 = pneg %p69
      %p76 = scmp.eq.s32.totalorder %s20, 1
      %p77 = por %p75, %p76
      %p78 = scmp.ne.s32.totalorder %s70, %s73
      %p79 = scmp.eq.s32.totalorder %s20, 0
      %p80 = por %p78, %p79
      %p81 = scmp.ne.s32.totalorder %s70, %s73
      %p82 = scmp.eq.s32.totalorder %s25, 1
      %p83 = por %p81, %p82
      %p84 = scmp.ne.s32.totalorder %s73, %s74
      %p85 = scmp.eq.s32.totalorder %s25, 0
      %p86 = por %p84, %p85
      %p87 = scmp.ne.s32.totalorder %s73, %s74
      %p88 = scmp.eq.s32.totalorder %s26, 1
      %p89 = por %p87, %p88
      %p91 = scmp.ne.s32.totalorder %s74, %s90
      %p92 = scmp.eq.s32.totalorder %s26, 0
      %p93 = por %p91, %p92
      %s94 = ssub.s32 %s27, %s39
      %p95 = scmp.eq.s32.totalorder %s94, 0
      %s97 = sadd.s32 %s96, 1
      %s98 = scalar_select %p95, %s96, %s97
      %p101 = pneg %p95
      %p102 = scmp.eq.s32.totalorder %s20, 1
      %p103 = por %p101, %p102
      %p104 = scmp.ne.s32.totalorder %s96, %s99
      %p105 = scmp.eq.s32.totalorder %s20, 0
      %p106 = por %p104, %p105
      %p107 = scmp.ne.s32.totalorder %s96, %s99
      %p108 = scmp.eq.s32.totalorder %s25, 1
      %p109 = por %p107, %p108
      %p110 = scmp.ne.s32.totalorder %s99, %s100
      %p111 = scmp.eq.s32.totalorder %s25, 0
      %p112 = por %p110, %p111
      %p113 = scmp.ne.s32.totalorder %s99, %s100
      %p114 = scmp.eq.s32.totalorder %s26, 1
      %p115 = por %p113, %p114
      %p117 = scmp.ne.s32.totalorder %s100, %s116
      %p118 = scmp.eq.s32.totalorder %s26, 0
      %p119 = por %p117, %p118
      %s120 = ssub.s32 %s27, %s39
      %p121 = scmp.eq.s32.totalorder %s120, 0
      %s123 = sadd.s32 %s122, 1
      %s124 = scalar_select %p121, %s122, %s123
      %p127 = pneg %p121
      %p128 = scmp.eq.s32.totalorder %s20, 1
      %p129 = por %p127, %p128
      %p130 = scmp.ne.s32.totalorder %s122, %s125
      %p131 = scmp.eq.s32.totalorder %s20, 0
      %p132 = por %p130, %p131
      %p133 = scmp.ne.s32.totalorder %s122, %s125
      %p134 = scmp.eq.s32.totalorder %s25, 1
      %p135 = por %p133, %p134
      %p136 = scmp.ne.s32.totalorder %s125, %s126
      %p137 = scmp.eq.s32.totalorder %s25, 0
      %p138 = por %p136, %p137
      %p139 = scmp.ne.s32.totalorder %s125, %s126
      %p140 = scmp.eq.s32.totalorder %s26, 1
      %p141 = por %p139, %p140
      %p143 = scmp.ne.s32.totalorder %s126, %s142
      %p144 = scmp.eq.s32.totalorder %s26, 0
      %p145 = por %p143, %p144
      %s146 = ssub.s32 %s27, %s39
      %p147 = scmp.eq.s32.totalorder %s146, 0
      %s149 = sadd.s32 %s148, 1
      %s150 = scalar_select %p147, %s148, %s149
      %p153 = pneg %p147
      %p154 = scmp.eq.s32.totalorder %s20, 1
      %p155 = por %p153, %p154
      %p156 = scmp.ne.s32.totalorder %s148, %s151
      %p157 = scmp.eq.s32.totalorder %s20, 0
      %p158 = por %p156, %p157
      %p159 = scmp.ne.s32.totalorder %s148, %s151
      %p160 = scmp.eq.s32.totalorder %s25, 1
      %p161 = por %p159, %p160
      %p162 = scmp.ne.s32.totalorder %s151, %s152
      %p163 = scmp.eq.s32.totalorder %s25, 0
      %p164 = por %p162, %p163
      %p165 = scmp.ne.s32.totalorder %s151, %s152
      %p166 = scmp.eq.s32.totalorder %s26, 1
      %p167 = por %p165, %p166
      %p169 = scmp.ne.s32.totalorder %s152, %s168
      %p170 = scmp.eq.s32.totalorder %s26, 0
      %p171 = por %p169, %p170
      %s173 = sadd.s32 %s172, 1
      %p176 = scmp.eq.s32.totalorder %s20, 1
      %p177 = scmp.ne.s32.totalorder %s172, %s174
      %p178 = scmp.eq.s32.totalorder %s20, 0
      %p179 = por %p177, %p178
      %p180 = scmp.ne.s32.totalorder %s172, %s174
      %p181 = scmp.eq.s32.totalorder %s25, 1
      %p182 = por %p180, %p181
      %p183 = scmp.ne.s32.totalorder %s174, %s175
      %p184 = scmp.eq.s32.totalorder %s25, 0
      %p185 = por %p183, %p184
      %p186 = scmp.ne.s32.totalorder %s174, %s175
      %p187 = scmp.eq.s32.totalorder %s26, 1
      %p188 = por %p186, %p187
      %p190 = scmp.ne.s32.totalorder %s175, %s189
      %p191 = scmp.eq.s32.totalorder %s26, 0
      %p192 = por %p190, %p191
      %s194 = sadd.s32 %s193, 1
      %p197 = scmp.eq.s32.totalorder %s20, 1
      %p198 = scmp.ne.s32.totalorder %s193, %s195
      %p199 = scmp.eq.s32.totalorder %s20, 0
      %p200 = por %p198, %p199
      %p201 = scmp.ne.s32.totalorder %s193, %s195
      %p202 = scmp.eq.s32.totalorder %s25, 1
      %p203 = por %p201, %p202
      %p204 = scmp.ne.s32.totalorder %s195, %s196
      %p205 = scmp.eq.s32.totalorder %s25, 0
      %p206 = por %p204, %p205
      %p207 = scmp.ne.s32.totalorder %s195, %s196
      %p208 = scmp.eq.s32.totalorder %s26, 1
      %p209 = por %p207, %p208
      %p211 = scmp.ne.s32.totalorder %s196, %s210
      %p212 = scmp.eq.s32.totalorder %s26, 0
      %p213 = por %p211, %p212
      %s215 = sadd.s32 %s214, 1
      %p218 = scmp.eq.s32.totalorder %s20, 1
      %p219 = scmp.ne.s32.totalorder %s214, %s216
      %p220 = scmp.eq.s32.totalorder %s20, 0
      %p221 = por %p219, %p220
      %p222 = scmp.ne.s32.totalorder %s214, %s216
      %p223 = scmp.eq.s32.totalorder %s25, 1
      %p224 = por %p222, %p223
      %p225 = scmp.ne.s32.totalorder %s216, %s217
      %p226 = scmp.eq.s32.totalorder %s25, 0
      %p227 = por %p225, %p226
      %p228 = scmp.ne.s32.totalorder %s216, %s217
      %p229 = scmp.eq.s32.totalorder %s26, 1
      %p230 = por %p228, %p229
      %p232 = scmp.ne.s32.totalorder %s217, %s231
      %p233 = scmp.eq.s32.totalorder %s26, 0
      %p234 = por %p232, %p233
      %s236 = sadd.s32 %s235, 1
      %p239 = scmp.eq.s32.totalorder %s20, 1
      %p240 = scmp.ne.s32.totalorder %s235, %s237
      %p241 = scmp.eq.s32.totalorder %s20, 0
      %p242 = por %p240, %p241
      %p243 = scmp.ne.s32.totalorder %s235, %s237
      %p244 = scmp.eq.s32.totalorder %s25, 1
      %p245 = por %p243, %p244
      %p246 = scmp.ne.s32.totalorder %s237, %s238
      %p247 = scmp.eq.s32.totalorder %s25, 0
      %p248 = por %p246, %p247
      %p249 = scmp.ne.s32.totalorder %s237, %s238
      %p250 = scmp.eq.s32.totalorder %s26, 1
      %p251 = por %p249, %p250
      %p253 = scmp.ne.s32.totalorder %s238, %s252
      %p254 = scmp.eq.s32.totalorder %s26, 0
      %p255 = por %p253, %p254
      %s257 = sadd.s32 %s256, 1
      %p260 = scmp.eq.s32.totalorder %s20, 1
      %p261 = scmp.ne.s32.totalorder %s256, %s258
      %p262 = scmp.eq.s32.totalorder %s20, 0
      %p263 = por %p261, %p262
      %p264 = scmp.ne.s32.totalorder %s256, %s258
      %p265 = scmp.eq.s32.totalorder %s25, 1
      %p266 = por %p264, %p265
      %p267 = scmp.ne.s32.totalorder %s258, %s259
      %p268 = scmp.eq.s32.totalorder %s25, 0
      %p269 = por %p267, %p268
      %p270 = scmp.ne.s32.totalorder %s258, %s259
      %p271 = scmp.eq.s32.totalorder %s26, 1
      %p272 = por %p270, %p271
      %p274 = scmp.ne.s32.totalorder %s259, %s273
      %p275 = scmp.eq.s32.totalorder %s26, 0
      %p276 = por %p274, %p275
      %s277 = ssub.s32 %s28, %s35
      %s278 = ssub.s32 %s27, %s39
      %s279 = sor.u32 %s277, %s278
      %p280 = scmp.eq.s32.totalorder %s279, 0
      %s282 = sadd.s32 %s281, 1
      %s283 = scalar_select %p280, %s281, %s282
      %p286 = pneg %p280
      %p287 = scmp.eq.s32.totalorder %s20, 1
      %p288 = por %p286, %p287
      %p289 = scmp.ne.s32.totalorder %s281, %s284
      %p290 = scmp.eq.s32.totalorder %s20, 0
      %p291 = por %p289, %p290
      %p292 = scmp.ne.s32.totalorder %s281, %s284
      %p293 = scmp.eq.s32.totalorder %s25, 1
      %p294 = por %p292, %p293
      %p295 = scmp.ne.s32.totalorder %s284, %s285
      %p296 = scmp.eq.s32.totalorder %s25, 0
      %p297 = por %p295, %p296
      %p298 = scmp.ne.s32.totalorder %s284, %s285
      %p299 = scmp.eq.s32.totalorder %s26, 1
      %p300 = por %p298, %p299
      %p302 = scmp.ne.s32.totalorder %s285, %s301
      %p303 = scmp.eq.s32.totalorder %s26, 0
      %p304 = por %p302, %p303
      %s305 = ssub.s32 %s27, %s39
      %p306 = scmp.eq.s32.totalorder %s305, 0
      %s308 = sadd.s32 %s307, 1
      %s309 = scalar_select %p306, %s307, %s308
      %p312 = pneg %p306
      %p313 = scmp.eq.s32.totalorder %s20, 1
      %p314 = por %p312, %p313
      %p315 = scmp.ne.s32.totalorder %s307, %s310
      %p316 = scmp.eq.s32.totalorder %s20, 0
      %p317 = por %p315, %p316
      %p318 = scmp.ne.s32.totalorder %s307, %s310
      %p319 = scmp.eq.s32.totalorder %s25, 1
      %p320 = por %p318, %p319
      %p321 = scmp.ne.s32.totalorder %s310, %s311
      %p322 = scmp.eq.s32.totalorder %s25, 0
      %p323 = por %p321, %p322
      %p324 = scmp.ne.s32.totalorder %s310, %s311
      %p325 = scmp.eq.s32.totalorder %s26, 1
      %p326 = por %p324, %p325
      %p328 = scmp.ne.s32.totalorder %s311, %s327
      %p329 = scmp.eq.s32.totalorder %s26, 0
      %p330 = por %p328, %p329
      %p331 = scmp.le.s32.totalorder 1, %s20
      %p332 = scmp.lt.s32.totalorder %s20, 3
      %p333 = pnand %p331, %p332
      %p334 = pneg %p333
      // Predicated region
      $region9: #{_nested_lstm_sequence_jit.1} parent=5 // pred_check
        _
      $region10: #{_nested_lstm_sequence_jit.1} parent=5 // pred_check_branch
        %336 = sbr.rel (%p333) target = $region12
      $region11: #{_nested_lstm_sequence_jit.1} parent=5 // pred_region
        %s337 = ssub.s32 %s20, 1
        // Predicated region
        $region13: #{_nested_lstm_sequence_jit.1} parent=11 // pred_check
          %p338 = pneg %p86
        $region14: #{_nested_lstm_sequence_jit.1} parent=11 // pred_check_branch
          %340 = sbr.rel (%p338) target = $region16
        $region15: #{_nested_lstm_sequence_jit.1} parent=11 // pred_region
          %s341 = smul.u32 2, %s29
          %p342 = scmp.lt.s32.totalorder %s341, 1
          %s343 = scalar_select %p342, %s341, 1
          %s344 = smul.addr %s343, 8
          %s345 = scalar_lea.vmem %s1, %s344
          %s346 = smul.u32 2, %s29
        $region16: #{_nested_lstm_sequence_jit.1} parent=11 // pred_fallthru
          _
        // Predicated region
        $region17: #{_nested_lstm_sequence_jit.1} parent=11 // pred_check
          %p347 = pneg %p112
        $region18: #{_nested_lstm_sequence_jit.1} parent=11 // pred_check_branch
          %349 = sbr.rel (%p347) target = $region20
        $region19: #{_nested_lstm_sequence_jit.1} parent=11 // pred_region
          %s350 = smul.u32 2, %s29
          %p351 = scmp.lt.s32.totalorder %s350, 1
          %s352 = scalar_select %p351, %s350, 1
          %s353 = smul.addr %s352, 8
          %s354 = scalar_lea.vmem %s2, %s353
          %s355 = smul.u32 2, %s29
        $region20: #{_nested_lstm_sequence_jit.1} parent=11 // pred_fallthru
          _
        // Predicated region
        $region21: #{_nested_lstm_sequence_jit.1} parent=11 // pred_check
          %p356 = pneg %p138
        $region22: #{_nested_lstm_sequence_jit.1} parent=11 // pred_check_branch
          %358 = sbr.rel (%p356) target = $region24
        $region23: #{_nested_lstm_sequence_jit.1} parent=11 // pred_region
          %s359 = smul.u32 2, %s29
          %p360 = scmp.lt.s32.totalorder %s359, 1
          %s361 = scalar_select %p360, %s359, 1
          %s362 = smul.addr %s361, 8
          %s363 = scalar_lea.vmem %s3, %s362
          %s364 = smul.u32 2, %s29
        $region24: #{_nested_lstm_sequence_jit.1} parent=11 // pred_fallthru
          _
        // Predicated region
        $region25: #{_nested_lstm_sequence_jit.1} parent=11 // pred_check
          %p365 = pneg %p164
        $region26: #{_nested_lstm_sequence_jit.1} parent=11 // pred_check_branch
          %367 = sbr.rel (%p365) target = $region28
        $region27: #{_nested_lstm_sequence_jit.1} parent=11 // pred_region
          %s368 = smul.u32 2, %s29
          %p369 = scmp.lt.s32.totalorder %s368, 1
          %s370 = scalar_select %p369, %s368, 1
          %s371 = smul.addr %s370, 8
          %s372 = scalar_lea.vmem %s4, %s371
          %s373 = smul.u32 2, %s29
        $region28: #{_nested_lstm_sequence_jit.1} parent=11 // pred_fallthru
          _
        // Predicated region
        $region29: #{_nested_lstm_sequence_jit.1} parent=11 // pred_check
          %p374 = pneg %p185
        $region30: #{_nested_lstm_sequence_jit.1} parent=11 // pred_check_branch
          %376 = sbr.rel (%p374) target = $region32
        $region31: #{_nested_lstm_sequence_jit.1} parent=11 // pred_region
          %s378 = ssub.s32 16384, 16384
          %379 = vsyncadd [#allocation8], %s378
          %s380 = sshll.u32 [#allocation7], 4
          %s381 = int_to_ptr.vmem [resolvable:$true] %s380
          %386 = dma.hbm_to_vmem [thread:$0]  %s5, 16384, %s381, [#allocation8], 512, 512, 32
        $region32: #{_nested_lstm_sequence_jit.1} parent=11 // pred_fallthru
          _
        // Predicated region
        $region33: #{_nested_lstm_sequence_jit.1} parent=11 // pred_check
          %p387 = pneg %p206
        $region34: #{_nested_lstm_sequence_jit.1} parent=11 // pred_check_branch
          %389 = sbr.rel (%p387) target = $region36
        $region35: #{_nested_lstm_sequence_jit.1} parent=11 // pred_region
          _
        $region36: #{_nested_lstm_sequence_jit.1} parent=11 // pred_fallthru
          _
        // Predicated region
        $region37: #{_nested_lstm_sequence_jit.1} parent=11 // pred_check
          %p390 = pneg %p227
        $region38: #{_nested_lstm_sequence_jit.1} parent=11 // pred_check_branch
          %392 = sbr.rel (%p390) target = $region40
        $region39: #{_nested_lstm_sequence_jit.1} parent=11 // pred_region
          %s394 = ssub.s32 16384, 16384
          %395 = vsyncadd [#allocation10], %s394
          %s396 = sshll.u32 [#allocation9], 4
          %s397 = int_to_ptr.vmem [resolvable:$true] %s396
          %402 = dma.hbm_to_vmem [thread:$0]  %s7, 16384, %s397, [#allocation10], 512, 512, 32
        $region40: #{_nested_lstm_sequence_jit.1} parent=11 // pred_fallthru
          _
        // Predicated region
        $region41: #{_nested_lstm_sequence_jit.1} parent=11 // pred_check
          %p403 = pneg %p248
        $region42: #{_nested_lstm_sequence_jit.1} parent=11 // pred_check_branch
          %405 = sbr.rel (%p403) target = $region44
        $region43: #{_nested_lstm_sequence_jit.1} parent=11 // pred_region
          %s407 = ssub.s32 8192, 8192
          %408 = vsyncadd [#allocation10], %s407
          %s409 = sshll.u32 [#allocation11], 4
          %s410 = int_to_ptr.vmem [resolvable:$true] %s409
          %415 = dma.hbm_to_vmem [thread:$0]  %s8, 8192, %s410, [#allocation10], 512, 512, 32
        $region44: #{_nested_lstm_sequence_jit.1} parent=11 // pred_fallthru
          _
        // Predicated region
        $region45: #{_nested_lstm_sequence_jit.1} parent=11 // pred_check
          %p416 = pneg %p269
        $region46: #{_nested_lstm_sequence_jit.1} parent=11 // pred_check_branch
          %418 = sbr.rel (%p416) target = $region48
        $region47: #{_nested_lstm_sequence_jit.1} parent=11 // pred_region
          _
        $region48: #{_nested_lstm_sequence_jit.1} parent=11 // pred_fallthru
          _
      $region12: #{_nested_lstm_sequence_jit.1} parent=5 // pred_fallthru
        _
      %p419 = scmp.lt.s32.totalorder %s20, 2
      // Predicated region
      $region49: #{_nested_lstm_sequence_jit.1} parent=5 // pred_check
        %p420 = pneg %p419
      $region50: #{_nested_lstm_sequence_jit.1} parent=5 // pred_check_branch
        %422 = sbr.rel (%p420) target = $region52
      $region51: #{_nested_lstm_sequence_jit.1} parent=5 // pred_region
        // Predicated region
        $region53: #{_nested_lstm_sequence_jit.1} parent=51 // pred_check
          %p423 = pneg %p54
        $region54: #{_nested_lstm_sequence_jit.1} parent=51 // pred_check_branch
          %425 = sbr.rel (%p423) target = $region56
        $region55: #{_nested_lstm_sequence_jit.1} parent=51 // pred_region
          %s426 = smul.u32 4, %s28
          %s427 = smul.u32 2, %s27
          %p428 = scmp.lt.s32.totalorder %s426, 7
          %s429 = scalar_select %p428, %s426, 7
          %p430 = scmp.lt.s32.totalorder %s427, 1
          %s431 = scalar_select %p430, %s427, 1
          %s432 = smul.addr %s429, 2
          %s433 = sadd.s32 %s431, %s432
          %s434 = smul.addr %s433, 8
          %s435 = scalar_lea.vmem %s0, %s434
          %s436 = smul.u32 4, %s28
          %s437 = smul.u32 2, %s27
        $region56: #{_nested_lstm_sequence_jit.1} parent=51 // pred_fallthru
          _
      $region52: #{_nested_lstm_sequence_jit.1} parent=5 // pred_fallthru
        _
      %p438 = scmp.le.s32.totalorder 1, %s20
      %p439 = scmp.lt.s32.totalorder %s20, 3
      %p440 = pnand %p438, %p439
      %p441 = pneg %p440
      // Predicated region
      $region57: #{_nested_lstm_sequence_jit.1} parent=5 // pred_check
        _
      $region58: #{_nested_lstm_sequence_jit.1} parent=5 // pred_check_branch
        %443 = sbr.rel (%p440) target = $region60
      $region59: #{_nested_lstm_sequence_jit.1} parent=5 // pred_region
        %s444 = ssub.s32 %s20, 1
        // Predicated region
        $region61: #{_nested_lstm_sequence_jit.1} parent=59 // pred_check
          %p445 = pneg %p185
        $region62: #{_nested_lstm_sequence_jit.1} parent=59 // pred_check_branch
          %447 = sbr.rel (%p445) target = $region64
        $region63: #{_nested_lstm_sequence_jit.1} parent=59 // pred_region
          %448 = dma.done [#allocation8], 16384
        $region64: #{_nested_lstm_sequence_jit.1} parent=59 // pred_fallthru
          _
        // Predicated region
        $region65: #{_nested_lstm_sequence_jit.1} parent=59 // pred_check
          %p449 = pneg %p227
        $region66: #{_nested_lstm_sequence_jit.1} parent=59 // pred_check_branch
          %451 = sbr.rel (%p449) target = $region68
        $region67: #{_nested_lstm_sequence_jit.1} parent=59 // pred_region
          %452 = dma.done [#allocation10], 16384
        $region68: #{_nested_lstm_sequence_jit.1} parent=59 // pred_fallthru
          _
        // Predicated region
        $region69: #{_nested_lstm_sequence_jit.1} parent=59 // pred_check
          %p453 = pneg %p248
        $region70: #{_nested_lstm_sequence_jit.1} parent=59 // pred_check_branch
          %455 = sbr.rel (%p453) target = $region72
        $region71: #{_nested_lstm_sequence_jit.1} parent=59 // pred_region
          %456 = dma.done [#allocation10], 8192
        $region72: #{_nested_lstm_sequence_jit.1} parent=59 // pred_fallthru
          _
        %s457 = smul.u32 4, %s30
        %s458 = smul.u32 2, %s29
        %p459 = scmp.lt.s32.totalorder %s457, 7
        %s460 = scalar_select %p459, %s457, 7
        %p461 = scmp.lt.s32.totalorder %s458, 1
        %s462 = scalar_select %p461, %s458, 1
        %s463 = smul.addr %s460, 2
        %s464 = sadd.s32 %s462, %s463
        %s465 = smul.addr %s464, 8
        %s466 = scalar_lea.vmem %s0, %s465
        %p467 = pneg %p60
        %p468 = pneg %p57
        %s469 = smul.u32 2, %s29
        %p470 = scmp.lt.s32.totalorder %s469, 1
        %s471 = scalar_select %p470, %s469, 1
        %s472 = smul.addr %s471, 8
        %s473 = scalar_lea.vmem %s1, %s472
        %p474 = pneg %p86
        %p475 = pneg %p83
        %s476 = smul.u32 2, %s29
        %p477 = scmp.lt.s32.totalorder %s476, 1
        %s478 = scalar_select %p477, %s476, 1
        %s479 = smul.addr %s478, 8
        %s480 = scalar_lea.vmem %s2, %s479
        %p481 = pneg %p112
        %p482 = pneg %p109
        %s483 = smul.u32 2, %s29
        %p484 = scmp.lt.s32.totalorder %s483, 1
        %s485 = scalar_select %p484, %s483, 1
        %s486 = smul.addr %s485, 8
        %s487 = scalar_lea.vmem %s3, %s486
        %p488 = pneg %p138
        %p489 = pneg %p135
        %s490 = smul.u32 2, %s29
        %p491 = scmp.lt.s32.totalorder %s490, 1
        %s492 = scalar_select %p491, %s490, 1
        %s493 = smul.addr %s492, 8
        %s494 = scalar_lea.vmem %s4, %s493
        %p495 = pneg %p164
        %p496 = pneg %p161
        %p497 = pneg %p185
        %p498 = pneg %p182
        %p499 = pneg %p206
        %p500 = pneg %p203
        %p501 = pneg %p227
        %p502 = pneg %p224
        %p503 = pneg %p248
        %p504 = pneg %p245
        %p505 = pneg %p269
        %p506 = pneg %p266
        %p507 = pneg %p297
        %p508 = pneg %p294
        %s509 = smul.u32 4, %s30
        %s510 = smul.u32 2, %s29
        %p511 = scmp.lt.s32.totalorder %s509, 7
        %s512 = scalar_select %p511, %s509, 7
        %p513 = scmp.lt.s32.totalorder %s510, 1
        %s514 = scalar_select %p513, %s510, 1
        %s515 = smul.addr %s512, 2
        %s516 = sadd.s32 %s514, %s515
        %s517 = smul.addr %s516, 8
        %s518 = scalar_lea.vmem %s10, %s517
        %p519 = pneg %p323
        %p520 = pneg %p320
        %s521 = smul.u32 2, %s29
        %p522 = scmp.lt.s32.totalorder %s521, 1
        %s523 = scalar_select %p522, %s521, 1
        %s524 = smul.addr %s523, 8
        %s525 = scalar_lea.vmem %s11, %s524
        %s526 = smul.u32 4, %s30
        %s527 = smul.u32 2, %s29
        %p528 = scmp.lt.s32.totalorder %s526, 7
        %s529 = scalar_select %p528, %s526, 7
        %p530 = scmp.lt.s32.totalorder %s527, 1
        %s531 = scalar_select %p530, %s527, 1
        %s532 = smul.addr %s529, 2
        %s533 = sadd.s32 %s531, %s532
        %s534 = smul.addr %s533, 8
        %s535 = scalar_lea.vmem %s0, %s534
        %s536 = smul.u32 4, %s30
        %s537 = smul.u32 2, %s29
        %s538 = smul.u32 2, %s29
        %p539 = scmp.lt.s32.totalorder %s538, 1
        %s540 = scalar_select %p539, %s538, 1
        %s541 = smul.addr %s540, 8
        %s542 = scalar_lea.vmem %s1, %s541
        %s543 = smul.u32 2, %s29
        %s544 = smul.u32 2, %s29
        %p545 = scmp.lt.s32.totalorder %s544, 1
        %s546 = scalar_select %p545, %s544, 1
        %s547 = smul.addr %s546, 8
        %s548 = scalar_lea.vmem %s2, %s547
        %s549 = smul.u32 2, %s29
        %s550 = smul.u32 2, %s29
        %p551 = scmp.lt.s32.totalorder %s550, 1
        %s552 = scalar_select %p551, %s550, 1
        %s553 = smul.addr %s552, 8
        %s554 = scalar_lea.vmem %s3, %s553
        %s555 = smul.u32 2, %s29
        %s556 = smul.u32 2, %s29
        %p557 = scmp.lt.s32.totalorder %s556, 1
        %s558 = scalar_select %p557, %s556, 1
        %s559 = smul.addr %s558, 8
        %s560 = scalar_lea.vmem %s4, %s559
        %s561 = smul.u32 2, %s29
        %s562 = smul.u32 4, %s30
        %s563 = smul.u32 2, %s29
        %p564 = scmp.lt.s32.totalorder %s562, 7
        %s565 = scalar_select %p564, %s562, 7
        %p566 = scmp.lt.s32.totalorder %s563, 1
        %s567 = scalar_select %p566, %s563, 1
        %s568 = smul.addr %s565, 2
        %s569 = sadd.s32 %s567, %s568
        %s570 = smul.addr %s569, 8
        %s571 = scalar_lea.vmem %s10, %s570
        %s572 = smul.u32 4, %s30
        %s573 = smul.u32 2, %s29
        %s574 = smul.u32 2, %s29
        %p575 = scmp.lt.s32.totalorder %s574, 1
        %s576 = scalar_select %p575, %s574, 1
        %s577 = smul.addr %s576, 8
        %s578 = scalar_lea.vmem %s11, %s577
        %s579 = smul.u32 2, %s29
        %p580 = scmp.eq.s32.totalorder %s30, 0
        // Predicated region
        $region73: #{_nested_lstm_sequence_jit.1} parent=59 // pred_check
          %p581 = pneg %p580
        $region74: #{_nested_lstm_sequence_jit.1} parent=59 // pred_check_branch
          %583 = sbr.rel (%p581) target = $region76
        $region75: #{_nested_lstm_sequence_jit.1} parent=59 // pred_region
          %v584 = vld [vmem:[%s542] sm:$0xff]
          %v585 = vld [vmem:[%s542 + $0x8] sm:$0xff]
          %586 = vst [vmem:[#allocation2 + $0x8] sm:$0xff] %v584
          %587 = vst [vmem:[#allocation2 + $0x18] sm:$0xff] %v585
          %v588 = vld [vmem:[%s554] sm:$0xff]
          %v589 = vld [vmem:[%s554 + $0x8] sm:$0xff]
          %590 = vst [vmem:[#allocation4] sm:$0xff] %v588
          %591 = vst [vmem:[#allocation4 + $0x8] sm:$0xff] %v589
          %v592 = vld [vmem:[%s548] sm:$0xff]
          %v593 = vld [vmem:[%s548 + $0x8] sm:$0xff]
          %594 = vst [vmem:[#allocation5] sm:$0xff] %v592
          %595 = vst [vmem:[#allocation5 + $0x8] sm:$0xff] %v593
          %v596 = vld [vmem:[%s560] sm:$0xff]
          %v597 = vld [vmem:[%s560 + $0x8] sm:$0xff]
          %598 = vst [vmem:[#allocation6] sm:$0xff] %v596
          %599 = vst [vmem:[#allocation6 + $0x8] sm:$0xff] %v597
        $region76: #{_nested_lstm_sequence_jit.1} parent=59 // pred_fallthru
          _
        %v600 = vld [vmem:[#allocation4] sm:$0xff]
        %v601 = vld [vmem:[#allocation4 + $0x8] sm:$0xff]
        %v602 = vld [vmem:[#allocation11] sm:$0xff]
        %v603 = vld [vmem:[#allocation11 + $0x8] sm:$0xff]
        %v604 = vld [vmem:[#allocation11 + $0x10] sm:$0xff]
        %v605 = vld [vmem:[#allocation11 + $0x18] sm:$0xff]
        %v606 = vld [vmem:[#allocation11 + $0x20] sm:$0xff]
        %v607 = vld [vmem:[#allocation11 + $0x28] sm:$0xff]
        %v608 = vld [vmem:[#allocation11 + $0x30] sm:$0xff]
        %v609 = vld [vmem:[#allocation11 + $0x38] sm:$0xff]
        %v610 = vld [vmem:[#allocation11 + $0x40] sm:$0xff]
        %v611 = vld [vmem:[#allocation11 + $0x48] sm:$0xff]
        %v612 = vld [vmem:[#allocation11 + $0x50] sm:$0xff]
        %v613 = vld [vmem:[#allocation11 + $0x58] sm:$0xff]
        %v614 = vld [vmem:[#allocation11 + $0x60] sm:$0xff]
        %v615 = vld [vmem:[#allocation11 + $0x68] sm:$0xff]
        %v616 = vld [vmem:[#allocation11 + $0x70] sm:$0xff]
        %v617 = vld [vmem:[#allocation11 + $0x78] sm:$0xff]
        %v618 = vld [vmem:[#allocation11 + $0x80] sm:$0xff]
        %v619 = vld [vmem:[#allocation11 + $0x88] sm:$0xff]
        %v620 = vld [vmem:[#allocation11 + $0x90] sm:$0xff]
        %v621 = vld [vmem:[#allocation11 + $0x98] sm:$0xff]
        %v622 = vld [vmem:[#allocation11 + $0xa0] sm:$0xff]
        %v623 = vld [vmem:[#allocation11 + $0xa8] sm:$0xff]
        %v624 = vld [vmem:[#allocation11 + $0xb0] sm:$0xff]
        %v625 = vld [vmem:[#allocation11 + $0xb8] sm:$0xff]
        %v626 = vld [vmem:[#allocation11 + $0xc0] sm:$0xff]
        %v627 = vld [vmem:[#allocation11 + $0xc8] sm:$0xff]
        %v628 = vld [vmem:[#allocation11 + $0xd0] sm:$0xff]
        %v629 = vld [vmem:[#allocation11 + $0xd8] sm:$0xff]
        %v630 = vld [vmem:[#allocation11 + $0xe0] sm:$0xff]
        %v631 = vld [vmem:[#allocation11 + $0xe8] sm:$0xff]
        %v632 = vld [vmem:[#allocation11 + $0xf0] sm:$0xff]
        %v633 = vld [vmem:[#allocation11 + $0xf8] sm:$0xff]
        %v634 = vld [vmem:[#allocation11 + $0x100] sm:$0xff]
        %v635 = vld [vmem:[#allocation11 + $0x108] sm:$0xff]
        %v636 = vld [vmem:[#allocation11 + $0x110] sm:$0xff]
        %v637 = vld [vmem:[#allocation11 + $0x118] sm:$0xff]
        %v638 = vld [vmem:[#allocation11 + $0x120] sm:$0xff]
        %v639 = vld [vmem:[#allocation11 + $0x128] sm:$0xff]
        %v640 = vld [vmem:[#allocation11 + $0x130] sm:$0xff]
        %v641 = vld [vmem:[#allocation11 + $0x138] sm:$0xff]
        %v642 = vld [vmem:[#allocation11 + $0x140] sm:$0xff]
        %v643 = vld [vmem:[#allocation11 + $0x148] sm:$0xff]
        %v644 = vld [vmem:[#allocation11 + $0x150] sm:$0xff]
        %v645 = vld [vmem:[#allocation11 + $0x158] sm:$0xff]
        %v646 = vld [vmem:[#allocation11 + $0x160] sm:$0xff]
        %v647 = vld [vmem:[#allocation11 + $0x168] sm:$0xff]
        %v648 = vld [vmem:[#allocation11 + $0x170] sm:$0xff]
        %v649 = vld [vmem:[#allocation11 + $0x178] sm:$0xff]
        %v650 = vld [vmem:[#allocation11 + $0x180] sm:$0xff]
        %v651 = vld [vmem:[#allocation11 + $0x188] sm:$0xff]
        %v652 = vld [vmem:[#allocation11 + $0x190] sm:$0xff]
        %v653 = vld [vmem:[#allocation11 + $0x198] sm:$0xff]
        %v654 = vld [vmem:[#allocation11 + $0x1a0] sm:$0xff]
        %v655 = vld [vmem:[#allocation11 + $0x1a8] sm:$0xff]
        %v656 = vld [vmem:[#allocation11 + $0x1b0] sm:$0xff]
        %v657 = vld [vmem:[#allocation11 + $0x1b8] sm:$0xff]
        %v658 = vld [vmem:[#allocation11 + $0x1c0] sm:$0xff]
        %v659 = vld [vmem:[#allocation11 + $0x1c8] sm:$0xff]
        %v660 = vld [vmem:[#allocation11 + $0x1d0] sm:$0xff]
        %v661 = vld [vmem:[#allocation11 + $0x1d8] sm:$0xff]
        %v662 = vld [vmem:[#allocation11 + $0x1e0] sm:$0xff]
        %v663 = vld [vmem:[#allocation11 + $0x1e8] sm:$0xff]
        %v664 = vld [vmem:[#allocation11 + $0x1f0] sm:$0xff]
        %v665 = vld [vmem:[#allocation11 + $0x1f8] sm:$0xff]
        %v666 = vld [vmem:[%s9] sm:$0xf]
        %v668 = vlaneseq
        %v669 = vshrl.u32 %v668, 7
        %v670 = vsub.s32 0, %v669
        %v671 = vrot.slane %v666, %v670
        %v672 = vlaneseq
        %v673 = vshrl.u32 %v672, 7
        %v674 = vsub.s32 1, %v673
        %v675 = vrot.slane %v666, %v674
        %v676 = vlaneseq
        %v677 = vshrl.u32 %v676, 7
        %v678 = vsub.s32 2, %v677
        %v679 = vrot.slane %v666, %v678
        %v680 = vlaneseq
        %v681 = vshrl.u32 %v680, 7
        %v682 = vsub.s32 3, %v681
        %v683 = vrot.slane %v666, %v682
        %688 = vmatprep.subr.mxu0 %v603
        %689 = vmatpush1.msra.mxu0 %v602
        %690 = vmatprep.subr.mxu0 %v607
        %691 = vmatpush1.msra.mxu0 %v606
        %692 = vmatprep.subr.mxu0 %v611
        %693 = vmatpush1.msra.mxu0 %v610
        %694 = vmatprep.subr.mxu0 %v615
        %695 = vmatpush1.msra.mxu0 %v614
        %696 = vmatprep.subr.mxu0 %v619
        %697 = vmatpush1.msra.mxu0 %v618
        %698 = vmatprep.subr.mxu0 %v623
        %699 = vmatpush1.msra.mxu0 %v622
        %700 = vmatprep.subr.mxu0 %v627
        %701 = vmatpush1.msra.mxu0 %v626
        %702 = vmatprep.subr.mxu0 %v631
        %703 = vmatpush1.msra.mxu0 %v630
        %704 = vmatprep.subr.mxu0 %v635
        %705 = vmatpush1.msra.mxu0 %v634
        %706 = vmatprep.subr.mxu0 %v639
        %707 = vmatpush1.msra.mxu0 %v638
        %708 = vmatprep.subr.mxu0 %v643
        %709 = vmatpush1.msra.mxu0 %v642
        %710 = vmatprep.subr.mxu0 %v647
        %711 = vmatpush1.msra.mxu0 %v646
        %712 = vmatprep.subr.mxu0 %v651
        %713 = vmatpush1.msra.mxu0 %v650
        %714 = vmatprep.subr.mxu0 %v655
        %715 = vmatpush1.msra.mxu0 %v654
        %716 = vmatprep.subr.mxu0 %v659
        %717 = vmatpush1.msra.mxu0 %v658
        %718 = vmatprep.subr.mxu0 %v663
        %719 = vmatpush1.msra.mxu0 %v662
        %720 = vmatprep.subr.mxu0 0.0
        %721 = vmatpush1.msra.mxu0 0.0
        %722 = vmatprep.subr.mxu0 0.0
        %723 = vmatpush1.msra.mxu0 0.0
        %724 = vmatprep.subr.mxu0 0.0
        %725 = vmatpush1.msra.mxu0 0.0
        %726 = vmatprep.subr.mxu0 0.0
        %727 = vmatpush1.msra.mxu0 0.0
        %728 = vmatprep.subr.mxu0 0.0
        %729 = vmatpush1.msra.mxu0 0.0
        %730 = vmatprep.subr.mxu0 0.0
        %731 = vmatpush1.msra.mxu0 0.0
        %732 = vmatprep.subr.mxu0 0.0
        %733 = vmatpush1.msra.mxu0 0.0
        %734 = vmatprep.subr.mxu0 0.0
        %735 = vmatpush1.msra.mxu0 0.0
        %736 = vmatprep.subr.mxu0 0.0
        %737 = vmatpush1.msra.mxu0 0.0
        %738 = vmatprep.subr.mxu0 0.0
        %739 = vmatpush1.msra.mxu0 0.0
        %740 = vmatprep.subr.mxu0 0.0
        %741 = vmatpush1.msra.mxu0 0.0
        %742 = vmatprep.subr.mxu0 0.0
        %743 = vmatpush1.msra.mxu0 0.0
        %744 = vmatprep.subr.mxu0 0.0
        %745 = vmatpush1.msra.mxu0 0.0
        %746 = vmatprep.subr.mxu0 0.0
        %747 = vmatpush1.msra.mxu0 0.0
        %748 = vmatprep.subr.mxu0 0.0
        %749 = vmatpush1.msra.mxu0 0.0
        %750 = vmatprep.subr.mxu0 0.0
        %751 = vmatpush1.msra.mxu0 0.0
        %752 = vmatprep.mubr.f32.mxu0 0.0
        %753 = vmatmul.mubr.f32.gmra.mrb[0].mxu0 %v600
        %v754 = vpop.f32.mrb[0].mxu0
        %v755 = vadd.f32 %v671, %v754
        %v756 = vpop.f32.mrb[0].mxu0
        %v757 = vadd.f32 %v675, %v756
        %758 = vmatprep.mubr.f32.mxu0 0.0
        %759 = vmatmul.mubr.f32.gmra.mrb[0].mxu0 %v601
        %v760 = vpop.f32.mrb[0].mxu0
        %v761 = vadd.f32 %v671, %v760
        %v762 = vpop.f32.mrb[0].mxu0
        %v763 = vadd.f32 %v675, %v762
        %764 = vdwg.mxu0
        %765 = vmatprep.subr.mxu0 %v605
        %766 = vmatpush1.msra.mxu0 %v604
        %767 = vmatprep.subr.mxu0 %v609
        %768 = vmatpush1.msra.mxu0 %v608
        %769 = vmatprep.subr.mxu0 %v613
        %770 = vmatpush1.msra.mxu0 %v612
        %771 = vmatprep.subr.mxu0 %v617
        %772 = vmatpush1.msra.mxu0 %v616
        %773 = vmatprep.subr.mxu0 %v621
        %774 = vmatpush1.msra.mxu0 %v620
        %775 = vmatprep.subr.mxu0 %v625
        %776 = vmatpush1.msra.mxu0 %v624
        %777 = vmatprep.subr.mxu0 %v629
        %778 = vmatpush1.msra.mxu0 %v628
        %779 = vmatprep.subr.mxu0 %v633
        %780 = vmatpush1.msra.mxu0 %v632
        %781 = vmatprep.subr.mxu0 %v637
        %782 = vmatpush1.msra.mxu0 %v636
        %783 = vmatprep.subr.mxu0 %v641
        %784 = vmatpush1.msra.mxu0 %v640
        %785 = vmatprep.subr.mxu0 %v645
        %786 = vmatpush1.msra.mxu0 %v644
        %787 = vmatprep.subr.mxu0 %v649
        %788 = vmatpush1.msra.mxu0 %v648
        %789 = vmatprep.subr.mxu0 %v653
        %790 = vmatpush1.msra.mxu0 %v652
        %791 = vmatprep.subr.mxu0 %v657
        %792 = vmatpush1.msra.mxu0 %v656
        %793 = vmatprep.subr.mxu0 %v661
        %794 = vmatpush1.msra.mxu0 %v660
        %795 = vmatprep.subr.mxu0 %v665
        %796 = vmatpush1.msra.mxu0 %v664
        %797 = vmatprep.subr.mxu0 0.0
        %798 = vmatpush1.msra.mxu0 0.0
        %799 = vmatprep.subr.mxu0 0.0
        %800 = vmatpush1.msra.mxu0 0.0
        %801 = vmatprep.subr.mxu0 0.0
        %802 = vmatpush1.msra.mxu0 0.0
        %803 = vmatprep.subr.mxu0 0.0
        %804 = vmatpush1.msra.mxu0 0.0
        %805 = vmatprep.subr.mxu0 0.0
        %806 = vmatpush1.msra.mxu0 0.0
        %807 = vmatprep.subr.mxu0 0.0
        %808 = vmatpush1.msra.mxu0 0.0
        %809 = vmatprep.subr.mxu0 0.0
        %810 = vmatpush1.msra.mxu0 0.0
        %811 = vmatprep.subr.mxu0 0.0
        %812 = vmatpush1.msra.mxu0 0.0
        %813 = vmatprep.subr.mxu0 0.0
        %814 = vmatpush1.msra.mxu0 0.0
        %815 = vmatprep.subr.mxu0 0.0
        %816 = vmatpush1.msra.mxu0 0.0
        %817 = vmatprep.subr.mxu0 0.0
        %818 = vmatpush1.msra.mxu0 0.0
        %819 = vmatprep.subr.mxu0 0.0
        %820 = vmatpush1.msra.mxu0 0.0
        %821 = vmatprep.subr.mxu0 0.0
        %822 = vmatpush1.msra.mxu0 0.0
        %823 = vmatprep.subr.mxu0 0.0
        %824 = vmatpush1.msra.mxu0 0.0
        %825 = vmatprep.subr.mxu0 0.0
        %826 = vmatpush1.msra.mxu0 0.0
        %827 = vmatprep.subr.mxu0 0.0
        %828 = vmatpush1.msra.mxu0 0.0
        %829 = vmatprep.mubr.f32.mxu0 0.0
        %830 = vmatmul.mubr.f32.gmra.mrb[0].mxu0 %v600
        %v831 = vpop.f32.mrb[0].mxu0
        %v832 = vadd.f32 %v679, %v831
        %v833 = vpop.f32.mrb[0].mxu0
        %v834 = vadd.f32 %v683, %v833
        %835 = vmatprep.mubr.f32.mxu0 0.0
        %836 = vmatmul.mubr.f32.gmra.mrb[0].mxu0 %v601
        %v837 = vpop.f32.mrb[0].mxu0
        %v838 = vadd.f32 %v679, %v837
        %v839 = vpop.f32.mrb[0].mxu0
        %v840 = vadd.f32 %v683, %v839
        %841 = vdwg.mxu0
        %v842 = vld [vmem:[%s535] sm:$0xff]
        %v843 = vld [vmem:[%s535 + $0x8] sm:$0xff]
        %844 = vst [vmem:[#allocation2] sm:$0xff] %v842
        %845 = vst [vmem:[#allocation2 + $0x10] sm:$0xff] %v843
        %v846 = vld [vmem:[#allocation2] sm:$0xff]
        %v847 = vld [vmem:[#allocation2 + $0x8] sm:$0xff]
        %v848 = vld [vmem:[#allocation2 + $0x10] sm:$0xff]
        %v849 = vld [vmem:[#allocation2 + $0x18] sm:$0xff]
        %v850 = vld [vmem:[#allocation7] sm:$0xff]
        %v851 = vld [vmem:[#allocation7 + $0x8] sm:$0xff]
        %v852 = vld [vmem:[#allocation7 + $0x10] sm:$0xff]
        %v853 = vld [vmem:[#allocation7 + $0x18] sm:$0xff]
        %v854 = vld [vmem:[#allocation7 + $0x20] sm:$0xff]
        %v855 = vld [vmem:[#allocation7 + $0x28] sm:$0xff]
        %v856 = vld [vmem:[#allocation7 + $0x30] sm:$0xff]
        %v857 = vld [vmem:[#allocation7 + $0x38] sm:$0xff]
        %v858 = vld [vmem:[#allocation7 + $0x40] sm:$0xff]
        %v859 = vld [vmem:[#allocation7 + $0x48] sm:$0xff]
        %v860 = vld [vmem:[#allocation7 + $0x50] sm:$0xff]
        %v861 = vld [vmem:[#allocation7 + $0x58] sm:$0xff]
        %v862 = vld [vmem:[#allocation7 + $0x60] sm:$0xff]
        %v863 = vld [vmem:[#allocation7 + $0x68] sm:$0xff]
        %v864 = vld [vmem:[#allocation7 + $0x70] sm:$0xff]
        %v865 = vld [vmem:[#allocation7 + $0x78] sm:$0xff]
        %v866 = vld [vmem:[#allocation7 + $0x80] sm:$0xff]
        %v867 = vld [vmem:[#allocation7 + $0x88] sm:$0xff]
        %v868 = vld [vmem:[#allocation7 + $0x90] sm:$0xff]
        %v869 = vld [vmem:[#allocation7 + $0x98] sm:$0xff]
        %v870 = vld [vmem:[#allocation7 + $0xa0] sm:$0xff]
        %v871 = vld [vmem:[#allocation7 + $0xa8] sm:$0xff]
        %v872 = vld [vmem:[#allocation7 + $0xb0] sm:$0xff]
        %v873 = vld [vmem:[#allocation7 + $0xb8] sm:$0xff]
        %v874 = vld [vmem:[#allocation7 + $0xc0] sm:$0xff]
        %v875 = vld [vmem:[#allocation7 + $0xc8] sm:$0xff]
        %v876 = vld [vmem:[#allocation7 + $0xd0] sm:$0xff]
        %v877 = vld [vmem:[#allocation7 + $0xd8] sm:$0xff]
        %v878 = vld [vmem:[#allocation7 + $0xe0] sm:$0xff]
        %v879 = vld [vmem:[#allocation7 + $0xe8] sm:$0xff]
        %v880 = vld [vmem:[#allocation7 + $0xf0] sm:$0xff]
        %v881 = vld [vmem:[#allocation7 + $0xf8] sm:$0xff]
        %v882 = vld [vmem:[#allocation7 + $0x100] sm:$0xff]
        %v883 = vld [vmem:[#allocation7 + $0x108] sm:$0xff]
        %v884 = vld [vmem:[#allocation7 + $0x110] sm:$0xff]
        %v885 = vld [vmem:[#allocation7 + $0x118] sm:$0xff]
        %v886 = vld [vmem:[#allocation7 + $0x120] sm:$0xff]
        %v887 = vld [vmem:[#allocation7 + $0x128] sm:$0xff]
        %v888 = vld [vmem:[#allocation7 + $0x130] sm:$0xff]
        %v889 = vld [vmem:[#allocation7 + $0x138] sm:$0xff]
        %v890 = vld [vmem:[#allocation7 + $0x140] sm:$0xff]
        %v891 = vld [vmem:[#allocation7 + $0x148] sm:$0xff]
        %v892 = vld [vmem:[#allocation7 + $0x150] sm:$0xff]
        %v893 = vld [vmem:[#allocation7 + $0x158] sm:$0xff]
        %v894 = vld [vmem:[#allocation7 + $0x160] sm:$0xff]
        %v895 = vld [vmem:[#allocation7 + $0x168] sm:$0xff]
        %v896 = vld [vmem:[#allocation7 + $0x170] sm:$0xff]
        %v897 = vld [vmem:[#allocation7 + $0x178] sm:$0xff]
        %v898 = vld [vmem:[#allocation7 + $0x180] sm:$0xff]
        %v899 = vld [vmem:[#allocation7 + $0x188] sm:$0xff]
        %v900 = vld [vmem:[#allocation7 + $0x190] sm:$0xff]
        %v901 = vld [vmem:[#allocation7 + $0x198] sm:$0xff]
        %v902 = vld [vmem:[#allocation7 + $0x1a0] sm:$0xff]
        %v903 = vld [vmem:[#allocation7 + $0x1a8] sm:$0xff]
        %v904 = vld [vmem:[#allocation7 + $0x1b0] sm:$0xff]
        %v905 = vld [vmem:[#allocation7 + $0x1b8] sm:$0xff]
        %v906 = vld [vmem:[#allocation7 + $0x1c0] sm:$0xff]
        %v907 = vld [vmem:[#allocation7 + $0x1c8] sm:$0xff]
        %v908 = vld [vmem:[#allocation7 + $0x1d0] sm:$0xff]
        %v909 = vld [vmem:[#allocation7 + $0x1d8] sm:$0xff]
        %v910 = vld [vmem:[#allocation7 + $0x1e0] sm:$0xff]
        %v911 = vld [vmem:[#allocation7 + $0x1e8] sm:$0xff]
        %v912 = vld [vmem:[#allocation7 + $0x1f0] sm:$0xff]
        %v913 = vld [vmem:[#allocation7 + $0x1f8] sm:$0xff]
        %v914 = vld [vmem:[#allocation7 + $0x200] sm:$0xff]
        %v915 = vld [vmem:[#allocation7 + $0x208] sm:$0xff]
        %v916 = vld [vmem:[#allocation7 + $0x210] sm:$0xff]
        %v917 = vld [vmem:[#allocation7 + $0x218] sm:$0xff]
        %v918 = vld [vmem:[#allocation7 + $0x220] sm:$0xff]
        %v919 = vld [vmem:[#allocation7 + $0x228] sm:$0xff]
        %v920 = vld [vmem:[#allocation7 + $0x230] sm:$0xff]
        %v921 = vld [vmem:[#allocation7 + $0x238] sm:$0xff]
        %v922 = vld [vmem:[#allocation7 + $0x240] sm:$0xff]
        %v923 = vld [vmem:[#allocation7 + $0x248] sm:$0xff]
        %v924 = vld [vmem:[#allocation7 + $0x250] sm:$0xff]
        %v925 = vld [vmem:[#allocation7 + $0x258] sm:$0xff]
        %v926 = vld [vmem:[#allocation7 + $0x260] sm:$0xff]
        %v927 = vld [vmem:[#allocation7 + $0x268] sm:$0xff]
        %v928 = vld [vmem:[#allocation7 + $0x270] sm:$0xff]
        %v929 = vld [vmem:[#allocation7 + $0x278] sm:$0xff]
        %v930 = vld [vmem:[#allocation7 + $0x280] sm:$0xff]
        %v931 = vld [vmem:[#allocation7 + $0x288] sm:$0xff]
        %v932 = vld [vmem:[#allocation7 + $0x290] sm:$0xff]
        %v933 = vld [vmem:[#allocation7 + $0x298] sm:$0xff]
        %v934 = vld [vmem:[#allocation7 + $0x2a0] sm:$0xff]
        %v935 = vld [vmem:[#allocation7 + $0x2a8] sm:$0xff]
        %v936 = vld [vmem:[#allocation7 + $0x2b0] sm:$0xff]
        %v937 = vld [vmem:[#allocation7 + $0x2b8] sm:$0xff]
        %v938 = vld [vmem:[#allocation7 + $0x2c0] sm:$0xff]
        %v939 = vld [vmem:[#allocation7 + $0x2c8] sm:$0xff]
        %v940 = vld [vmem:[#allocation7 + $0x2d0] sm:$0xff]
        %v941 = vld [vmem:[#allocation7 + $0x2d8] sm:$0xff]
        %v942 = vld [vmem:[#allocation7 + $0x2e0] sm:$0xff]
        %v943 = vld [vmem:[#allocation7 + $0x2e8] sm:$0xff]
        %v944 = vld [vmem:[#allocation7 + $0x2f0] sm:$0xff]
        %v945 = vld [vmem:[#allocation7 + $0x2f8] sm:$0xff]
        %v946 = vld [vmem:[#allocation7 + $0x300] sm:$0xff]
        %v947 = vld [vmem:[#allocation7 + $0x308] sm:$0xff]
        %v948 = vld [vmem:[#allocation7 + $0x310] sm:$0xff]
        %v949 = vld [vmem:[#allocation7 + $0x318] sm:$0xff]
        %v950 = vld [vmem:[#allocation7 + $0x320] sm:$0xff]
        %v951 = vld [vmem:[#allocation7 + $0x328] sm:$0xff]
        %v952 = vld [vmem:[#allocation7 + $0x330] sm:$0xff]
        %v953 = vld [vmem:[#allocation7 + $0x338] sm:$0xff]
        %v954 = vld [vmem:[#allocation7 + $0x340] sm:$0xff]
        %v955 = vld [vmem:[#allocation7 + $0x348] sm:$0xff]
        %v956 = vld [vmem:[#allocation7 + $0x350] sm:$0xff]
        %v957 = vld [vmem:[#allocation7 + $0x358] sm:$0xff]
        %v958 = vld [vmem:[#allocation7 + $0x360] sm:$0xff]
        %v959 = vld [vmem:[#allocation7 + $0x368] sm:$0xff]
        %v960 = vld [vmem:[#allocation7 + $0x370] sm:$0xff]
        %v961 = vld [vmem:[#allocation7 + $0x378] sm:$0xff]
        %v962 = vld [vmem:[#allocation7 + $0x380] sm:$0xff]
        %v963 = vld [vmem:[#allocation7 + $0x388] sm:$0xff]
        %v964 = vld [vmem:[#allocation7 + $0x390] sm:$0xff]
        %v965 = vld [vmem:[#allocation7 + $0x398] sm:$0xff]
        %v966 = vld [vmem:[#allocation7 + $0x3a0] sm:$0xff]
        %v967 = vld [vmem:[#allocation7 + $0x3a8] sm:$0xff]
        %v968 = vld [vmem:[#allocation7 + $0x3b0] sm:$0xff]
        %v969 = vld [vmem:[#allocation7 + $0x3b8] sm:$0xff]
        %v970 = vld [vmem:[#allocation7 + $0x3c0] sm:$0xff]
        %v971 = vld [vmem:[#allocation7 + $0x3c8] sm:$0xff]
        %v972 = vld [vmem:[#allocation7 + $0x3d0] sm:$0xff]
        %v973 = vld [vmem:[#allocation7 + $0x3d8] sm:$0xff]
        %v974 = vld [vmem:[#allocation7 + $0x3e0] sm:$0xff]
        %v975 = vld [vmem:[#allocation7 + $0x3e8] sm:$0xff]
        %v976 = vld [vmem:[#allocation7 + $0x3f0] sm:$0xff]
        %v977 = vld [vmem:[#allocation7 + $0x3f8] sm:$0xff]
        %v978 = vld [vmem:[%s6] sm:$0xf]
        %v980 = vlaneseq
        %v981 = vshrl.u32 %v980, 7
        %v982 = vsub.s32 0, %v981
        %v983 = vrot.slane %v978, %v982
        %v984 = vlaneseq
        %v985 = vshrl.u32 %v984, 7
        %v986 = vsub.s32 1, %v985
        %v987 = vrot.slane %v978, %v986
        %v988 = vlaneseq
        %v989 = vshrl.u32 %v988, 7
        %v990 = vsub.s32 2, %v989
        %v991 = vrot.slane %v978, %v990
        %v992 = vlaneseq
        %v993 = vshrl.u32 %v992, 7
        %v994 = vsub.s32 3, %v993
        %v995 = vrot.slane %v978, %v994
        %1000 = vmatprep.subr.mxu0 %v851
        %1001 = vmatpush1.msra.mxu0 %v850
        %1002 = vmatprep.subr.mxu0 %v855
        %1003 = vmatpush1.msra.mxu0 %v854
        %1004 = vmatprep.subr.mxu0 %v859
        %1005 = vmatpush1.msra.mxu0 %v858
        %1006 = vmatprep.subr.mxu0 %v863
        %1007 = vmatpush1.msra.mxu0 %v862
        %1008 = vmatprep.subr.mxu0 %v867
        %1009 = vmatpush1.msra.mxu0 %v866
        %1010 = vmatprep.subr.mxu0 %v871
        %1011 = vmatpush1.msra.mxu0 %v870
        %1012 = vmatprep.subr.mxu0 %v875
        %1013 = vmatpush1.msra.mxu0 %v874
        %1014 = vmatprep.subr.mxu0 %v879
        %1015 = vmatpush1.msra.mxu0 %v878
        %1016 = vmatprep.subr.mxu0 %v883
        %1017 = vmatpush1.msra.mxu0 %v882
        %1018 = vmatprep.subr.mxu0 %v887
        %1019 = vmatpush1.msra.mxu0 %v886
        %1020 = vmatprep.subr.mxu0 %v891
        %1021 = vmatpush1.msra.mxu0 %v890
        %1022 = vmatprep.subr.mxu0 %v895
        %1023 = vmatpush1.msra.mxu0 %v894
        %1024 = vmatprep.subr.mxu0 %v899
        %1025 = vmatpush1.msra.mxu0 %v898
        %1026 = vmatprep.subr.mxu0 %v903
        %1027 = vmatpush1.msra.mxu0 %v902
        %1028 = vmatprep.subr.mxu0 %v907
        %1029 = vmatpush1.msra.mxu0 %v906
        %1030 = vmatprep.subr.mxu0 %v911
        %1031 = vmatpush1.msra.mxu0 %v910
        %1032 = vmatprep.subr.mxu0 %v915
        %1033 = vmatpush1.msra.mxu0 %v914
        %1034 = vmatprep.subr.mxu0 %v919
        %1035 = vmatpush1.msra.mxu0 %v918
        %1036 = vmatprep.subr.mxu0 %v923
        %1037 = vmatpush1.msra.mxu0 %v922
        %1038 = vmatprep.subr.mxu0 %v927
        %1039 = vmatpush1.msra.mxu0 %v926
        %1040 = vmatprep.subr.mxu0 %v931
        %1041 = vmatpush1.msra.mxu0 %v930
        %1042 = vmatprep.subr.mxu0 %v935
        %1043 = vmatpush1.msra.mxu0 %v934
        %1044 = vmatprep.subr.mxu0 %v939
        %1045 = vmatpush1.msra.mxu0 %v938
        %1046 = vmatprep.subr.mxu0 %v943
        %1047 = vmatpush1.msra.mxu0 %v942
        %1048 = vmatprep.subr.mxu0 %v947
        %1049 = vmatpush1.msra.mxu0 %v946
        %1050 = vmatprep.subr.mxu0 %v951
        %1051 = vmatpush1.msra.mxu0 %v950
        %1052 = vmatprep.subr.mxu0 %v955
        %1053 = vmatpush1.msra.mxu0 %v954
        %1054 = vmatprep.subr.mxu0 %v959
        %1055 = vmatpush1.msra.mxu0 %v958
        %1056 = vmatprep.subr.mxu0 %v963
        %1057 = vmatpush1.msra.mxu0 %v962
        %1058 = vmatprep.subr.mxu0 %v967
        %1059 = vmatpush1.msra.mxu0 %v966
        %1060 = vmatprep.subr.mxu0 %v971
        %1061 = vmatpush1.msra.mxu0 %v970
        %1062 = vmatprep.subr.mxu0 %v975
        %1063 = vmatpush1.msra.mxu0 %v974
        %1064 = vmatprep.mubr.f32.mxu0 %v847
        %1065 = vmatmul.mubr.f32.gmra.mrb[0].mxu0 %v846
        %v1066 = vpop.f32.mrb[0].mxu0
        %v1067 = vadd.f32 %v983, %v1066
        %v1068 = vpop.f32.mrb[0].mxu0
        %v1069 = vadd.f32 %v987, %v1068
        %1070 = vmatprep.mubr.f32.mxu0 %v849
        %1071 = vmatmul.mubr.f32.gmra.mrb[0].mxu0 %v848
        %v1072 = vpop.f32.mrb[0].mxu0
        %v1073 = vadd.f32 %v983, %v1072
        %v1074 = vpop.f32.mrb[0].mxu0
        %v1075 = vadd.f32 %v987, %v1074
        %1076 = vdwg.mxu0
        %1077 = vmatprep.subr.mxu0 %v853
        %1078 = vmatpush1.msra.mxu0 %v852
        %1079 = vmatprep.subr.mxu0 %v857
        %1080 = vmatpush1.msra.mxu0 %v856
        %1081 = vmatprep.subr.mxu0 %v861
        %1082 = vmatpush1.msra.mxu0 %v860
        %1083 = vmatprep.subr.mxu0 %v865
        %1084 = vmatpush1.msra.mxu0 %v864
        %1085 = vmatprep.subr.mxu0 %v869
        %1086 = vmatpush1.msra.mxu0 %v868
        %1087 = vmatprep.subr.mxu0 %v873
        %1088 = vmatpush1.msra.mxu0 %v872
        %1089 = vmatprep.subr.mxu0 %v877
        %1090 = vmatpush1.msra.mxu0 %v876
        %1091 = vmatprep.subr.mxu0 %v881
        %1092 = vmatpush1.msra.mxu0 %v880
        %1093 = vmatprep.subr.mxu0 %v885
        %1094 = vmatpush1.msra.mxu0 %v884
        %1095 = vmatprep.subr.mxu0 %v889
        %1096 = vmatpush1.msra.mxu0 %v888
        %1097 = vmatprep.subr.mxu0 %v893
        %1098 = vmatpush1.msra.mxu0 %v892
        %1099 = vmatprep.subr.mxu0 %v897
        %1100 = vmatpush1.msra.mxu0 %v896
        %1101 = vmatprep.subr.mxu0 %v901
        %1102 = vmatpush1.msra.mxu0 %v900
        %1103 = vmatprep.subr.mxu0 %v905
        %1104 = vmatpush1.msra.mxu0 %v904
        %1105 = vmatprep.subr.mxu0 %v909
        %1106 = vmatpush1.msra.mxu0 %v908
        %1107 = vmatprep.subr.mxu0 %v913
        %1108 = vmatpush1.msra.mxu0 %v912
        %1109 = vmatprep.subr.mxu0 %v917
        %1110 = vmatpush1.msra.mxu0 %v916
        %1111 = vmatprep.subr.mxu0 %v921
        %1112 = vmatpush1.msra.mxu0 %v920
        %1113 = vmatprep.subr.mxu0 %v925
        %1114 = vmatpush1.msra.mxu0 %v924
        %1115 = vmatprep.subr.mxu0 %v929
        %1116 = vmatpush1.msra.mxu0 %v928
        %1117 = vmatprep.subr.mxu0 %v933
        %1118 = vmatpush1.msra.mxu0 %v932
        %1119 = vmatprep.subr.mxu0 %v937
        %1120 = vmatpush1.msra.mxu0 %v936
        %1121 = vmatprep.subr.mxu0 %v941
        %1122 = vmatpush1.msra.mxu0 %v940
        %1123 = vmatprep.subr.mxu0 %v945
        %1124 = vmatpush1.msra.mxu0 %v944
        %1125 = vmatprep.subr.mxu0 %v949
        %1126 = vmatpush1.msra.mxu0 %v948
        %1127 = vmatprep.subr.mxu0 %v953
        %1128 = vmatpush1.msra.mxu0 %v952
        %1129 = vmatprep.subr.mxu0 %v957
        %1130 = vmatpush1.msra.mxu0 %v956
        %1131 = vmatprep.subr.mxu0 %v961
        %1132 = vmatpush1.msra.mxu0 %v960
        %1133 = vmatprep.subr.mxu0 %v965
        %1134 = vmatpush1.msra.mxu0 %v964
        %1135 = vmatprep.subr.mxu0 %v969
        %1136 = vmatpush1.msra.mxu0 %v968
        %1137 = vmatprep.subr.mxu0 %v973
        %1138 = vmatpush1.msra.mxu0 %v972
        %1139 = vmatprep.subr.mxu0 %v977
        %1140 = vmatpush1.msra.mxu0 %v976
        %1141 = vmatprep.mubr.f32.mxu0 %v847
        %1142 = vmatmul.mubr.f32.gmra.mrb[0].mxu0 %v846
        %v1143 = vpop.f32.mrb[0].mxu0
        %v1144 = vadd.f32 %v991, %v1143
        %v1145 = vpop.f32.mrb[0].mxu0
        %v1146 = vadd.f32 %v995, %v1145
        %1147 = vmatprep.mubr.f32.mxu0 %v849
        %1148 = vmatmul.mubr.f32.gmra.mrb[0].mxu0 %v848
        %v1149 = vpop.f32.mrb[0].mxu0
        %v1150 = vadd.f32 %v991, %v1149
        %v1151 = vpop.f32.mrb[0].mxu0
        %v1152 = vadd.f32 %v995, %v1151
        %1153 = vdwg.mxu0
        %v1154 = vxor.u32 %v1067, 2147483648
        %v1155 = vxor.u32 %v1069, 2147483648
        %v1156 = vxor.u32 %v1144, 2147483648
        %v1157 = vxor.u32 %v1073, 2147483648
        %v1158 = vxor.u32 %v1075, 2147483648
        %v1159 = vxor.u32 %v1150, 2147483648
        %v1160 = vmul.f32 %v1154, 1.442695
        %v1161 = vpow.pop %v1160
        %v1162 = vmul.f32 %v1155, 1.442695
        %v1163 = vpow.pop %v1162
        %v1164 = vmul.f32 %v1156, 1.442695
        %v1165 = vpow.pop %v1164
        %v1166 = vmul.f32 %v1157, 1.442695
        %v1167 = vpow.pop %v1166
        %v1168 = vmul.f32 %v1158, 1.442695
        %v1169 = vpow.pop %v1168
        %v1170 = vmul.f32 %v1159, 1.442695
        %v1171 = vpow.pop %v1170
        %v1172 = vadd.f32 %v1161, 1.0
        %v1173 = vadd.f32 %v1163, 1.0
        %v1174 = vadd.f32 %v1165, 1.0
        %v1175 = vadd.f32 %v1167, 1.0
        %v1176 = vadd.f32 %v1169, 1.0
        %v1177 = vadd.f32 %v1171, 1.0
        %v1178 = vrcp.pop %v1172
        %v1179 = vmul.f32 1.0, %v1178
        %v1180 = vrcp.pop %v1173
        %v1181 = vmul.f32 1.0, %v1180
        %v1182 = vrcp.pop %v1174
        %v1183 = vmul.f32 1.0, %v1182
        %v1184 = vrcp.pop %v1175
        %v1185 = vmul.f32 1.0, %v1184
        %v1186 = vrcp.pop %v1176
        %v1187 = vmul.f32 1.0, %v1186
        %v1188 = vrcp.pop %v1177
        %v1189 = vmul.f32 1.0, %v1188
        %v1190 = vtanh.pop %v1146
        %v1191 = vtanh.pop %v1152
        %v1192 = vld [vmem:[#allocation5] sm:$0xff]
        %v1193 = vld [vmem:[#allocation5 + $0x8] sm:$0xff]
        %v1194 = vmul.f32 %v1181, %v1192
        %v1195 = vmul.f32 %v1187, %v1193
        %1196 = vst [vmem:[#allocation3] sm:$0xff] %v1194
        %1197 = vst [vmem:[#allocation3 + $0x10] sm:$0xff] %v1195
        %v1198 = vmul.f32 %v1179, %v1190
        %v1199 = vmul.f32 %v1185, %v1191
        %1200 = vst [vmem:[#allocation3 + $0x8] sm:$0xff] %v1198
        %1201 = vst [vmem:[#allocation3 + $0x18] sm:$0xff] %v1199
        %v1202 = vld [vmem:[#allocation3] sm:$0xff]
        %v1203 = vld [vmem:[#allocation3 + $0x8] sm:$0xff]
        %v1204 = vld [vmem:[#allocation3 + $0x10] sm:$0xff]
        %v1205 = vld [vmem:[#allocation3 + $0x18] sm:$0xff]
        %v1206 = vld [vmem:[#allocation9] sm:$0xff]
        %v1207 = vld [vmem:[#allocation9 + $0x8] sm:$0xff]
        %v1208 = vld [vmem:[#allocation9 + $0x10] sm:$0xff]
        %v1209 = vld [vmem:[#allocation9 + $0x18] sm:$0xff]
        %v1210 = vld [vmem:[#allocation9 + $0x20] sm:$0xff]
        %v1211 = vld [vmem:[#allocation9 + $0x28] sm:$0xff]
        %v1212 = vld [vmem:[#allocation9 + $0x30] sm:$0xff]
        %v1213 = vld [vmem:[#allocation9 + $0x38] sm:$0xff]
        %v1214 = vld [vmem:[#allocation9 + $0x40] sm:$0xff]
        %v1215 = vld [vmem:[#allocation9 + $0x48] sm:$0xff]
        %v1216 = vld [vmem:[#allocation9 + $0x50] sm:$0xff]
        %v1217 = vld [vmem:[#allocation9 + $0x58] sm:$0xff]
        %v1218 = vld [vmem:[#allocation9 + $0x60] sm:$0xff]
        %v1219 = vld [vmem:[#allocation9 + $0x68] sm:$0xff]
        %v1220 = vld [vmem:[#allocation9 + $0x70] sm:$0xff]
        %v1221 = vld [vmem:[#allocation9 + $0x78] sm:$0xff]
        %v1222 = vld [vmem:[#allocation9 + $0x80] sm:$0xff]
        %v1223 = vld [vmem:[#allocation9 + $0x88] sm:$0xff]
        %v1224 = vld [vmem:[#allocation9 + $0x90] sm:$0xff]
        %v1225 = vld [vmem:[#allocation9 + $0x98] sm:$0xff]
        %v1226 = vld [vmem:[#allocation9 + $0xa0] sm:$0xff]
        %v1227 = vld [vmem:[#allocation9 + $0xa8] sm:$0xff]
        %v1228 = vld [vmem:[#allocation9 + $0xb0] sm:$0xff]
        %v1229 = vld [vmem:[#allocation9 + $0xb8] sm:$0xff]
        %v1230 = vld [vmem:[#allocation9 + $0xc0] sm:$0xff]
        %v1231 = vld [vmem:[#allocation9 + $0xc8] sm:$0xff]
        %v1232 = vld [vmem:[#allocation9 + $0xd0] sm:$0xff]
        %v1233 = vld [vmem:[#allocation9 + $0xd8] sm:$0xff]
        %v1234 = vld [vmem:[#allocation9 + $0xe0] sm:$0xff]
        %v1235 = vld [vmem:[#allocation9 + $0xe8] sm:$0xff]
        %v1236 = vld [vmem:[#allocation9 + $0xf0] sm:$0xff]
        %v1237 = vld [vmem:[#allocation9 + $0xf8] sm:$0xff]
        %v1238 = vld [vmem:[#allocation9 + $0x100] sm:$0xff]
        %v1239 = vld [vmem:[#allocation9 + $0x108] sm:$0xff]
        %v1240 = vld [vmem:[#allocation9 + $0x110] sm:$0xff]
        %v1241 = vld [vmem:[#allocation9 + $0x118] sm:$0xff]
        %v1242 = vld [vmem:[#allocation9 + $0x120] sm:$0xff]
        %v1243 = vld [vmem:[#allocation9 + $0x128] sm:$0xff]
        %v1244 = vld [vmem:[#allocation9 + $0x130] sm:$0xff]
        %v1245 = vld [vmem:[#allocation9 + $0x138] sm:$0xff]
        %v1246 = vld [vmem:[#allocation9 + $0x140] sm:$0xff]
        %v1247 = vld [vmem:[#allocation9 + $0x148] sm:$0xff]
        %v1248 = vld [vmem:[#allocation9 + $0x150] sm:$0xff]
        %v1249 = vld [vmem:[#allocation9 + $0x158] sm:$0xff]
        %v1250 = vld [vmem:[#allocation9 + $0x160] sm:$0xff]
        %v1251 = vld [vmem:[#allocation9 + $0x168] sm:$0xff]
        %v1252 = vld [vmem:[#allocation9 + $0x170] sm:$0xff]
        %v1253 = vld [vmem:[#allocation9 + $0x178] sm:$0xff]
        %v1254 = vld [vmem:[#allocation9 + $0x180] sm:$0xff]
        %v1255 = vld [vmem:[#allocation9 + $0x188] sm:$0xff]
        %v1256 = vld [vmem:[#allocation9 + $0x190] sm:$0xff]
        %v1257 = vld [vmem:[#allocation9 + $0x198] sm:$0xff]
        %v1258 = vld [vmem:[#allocation9 + $0x1a0] sm:$0xff]
        %v1259 = vld [vmem:[#allocation9 + $0x1a8] sm:$0xff]
        %v1260 = vld [vmem:[#allocation9 + $0x1b0] sm:$0xff]
        %v1261 = vld [vmem:[#allocation9 + $0x1b8] sm:$0xff]
        %v1262 = vld [vmem:[#allocation9 + $0x1c0] sm:$0xff]
        %v1263 = vld [vmem:[#allocation9 + $0x1c8] sm:$0xff]
        %v1264 = vld [vmem:[#allocation9 + $0x1d0] sm:$0xff]
        %v1265 = vld [vmem:[#allocation9 + $0x1d8] sm:$0xff]
        %v1266 = vld [vmem:[#allocation9 + $0x1e0] sm:$0xff]
        %v1267 = vld [vmem:[#allocation9 + $0x1e8] sm:$0xff]
        %v1268 = vld [vmem:[#allocation9 + $0x1f0] sm:$0xff]
        %v1269 = vld [vmem:[#allocation9 + $0x1f8] sm:$0xff]
        %v1270 = vld [vmem:[#allocation9 + $0x200] sm:$0xff]
        %v1271 = vld [vmem:[#allocation9 + $0x208] sm:$0xff]
        %v1272 = vld [vmem:[#allocation9 + $0x210] sm:$0xff]
        %v1273 = vld [vmem:[#allocation9 + $0x218] sm:$0xff]
        %v1274 = vld [vmem:[#allocation9 + $0x220] sm:$0xff]
        %v1275 = vld [vmem:[#allocation9 + $0x228] sm:$0xff]
        %v1276 = vld [vmem:[#allocation9 + $0x230] sm:$0xff]
        %v1277 = vld [vmem:[#allocation9 + $0x238] sm:$0xff]
        %v1278 = vld [vmem:[#allocation9 + $0x240] sm:$0xff]
        %v1279 = vld [vmem:[#allocation9 + $0x248] sm:$0xff]
        %v1280 = vld [vmem:[#allocation9 + $0x250] sm:$0xff]
        %v1281 = vld [vmem:[#allocation9 + $0x258] sm:$0xff]
        %v1282 = vld [vmem:[#allocation9 + $0x260] sm:$0xff]
        %v1283 = vld [vmem:[#allocation9 + $0x268] sm:$0xff]
        %v1284 = vld [vmem:[#allocation9 + $0x270] sm:$0xff]
        %v1285 = vld [vmem:[#allocation9 + $0x278] sm:$0xff]
        %v1286 = vld [vmem:[#allocation9 + $0x280] sm:$0xff]
        %v1287 = vld [vmem:[#allocation9 + $0x288] sm:$0xff]
        %v1288 = vld [vmem:[#allocation9 + $0x290] sm:$0xff]
        %v1289 = vld [vmem:[#allocation9 + $0x298] sm:$0xff]
        %v1290 = vld [vmem:[#allocation9 + $0x2a0] sm:$0xff]
        %v1291 = vld [vmem:[#allocation9 + $0x2a8] sm:$0xff]
        %v1292 = vld [vmem:[#allocation9 + $0x2b0] sm:$0xff]
        %v1293 = vld [vmem:[#allocation9 + $0x2b8] sm:$0xff]
        %v1294 = vld [vmem:[#allocation9 + $0x2c0] sm:$0xff]
        %v1295 = vld [vmem:[#allocation9 + $0x2c8] sm:$0xff]
        %v1296 = vld [vmem:[#allocation9 + $0x2d0] sm:$0xff]
        %v1297 = vld [vmem:[#allocation9 + $0x2d8] sm:$0xff]
        %v1298 = vld [vmem:[#allocation9 + $0x2e0] sm:$0xff]
        %v1299 = vld [vmem:[#allocation9 + $0x2e8] sm:$0xff]
        %v1300 = vld [vmem:[#allocation9 + $0x2f0] sm:$0xff]
        %v1301 = vld [vmem:[#allocation9 + $0x2f8] sm:$0xff]
        %v1302 = vld [vmem:[#allocation9 + $0x300] sm:$0xff]
        %v1303 = vld [vmem:[#allocation9 + $0x308] sm:$0xff]
        %v1304 = vld [vmem:[#allocation9 + $0x310] sm:$0xff]
        %v1305 = vld [vmem:[#allocation9 + $0x318] sm:$0xff]
        %v1306 = vld [vmem:[#allocation9 + $0x320] sm:$0xff]
        %v1307 = vld [vmem:[#allocation9 + $0x328] sm:$0xff]
        %v1308 = vld [vmem:[#allocation9 + $0x330] sm:$0xff]
        %v1309 = vld [vmem:[#allocation9 + $0x338] sm:$0xff]
        %v1310 = vld [vmem:[#allocation9 + $0x340] sm:$0xff]
        %v1311 = vld [vmem:[#allocation9 + $0x348] sm:$0xff]
        %v1312 = vld [vmem:[#allocation9 + $0x350] sm:$0xff]
        %v1313 = vld [vmem:[#allocation9 + $0x358] sm:$0xff]
        %v1314 = vld [vmem:[#allocation9 + $0x360] sm:$0xff]
        %v1315 = vld [vmem:[#allocation9 + $0x368] sm:$0xff]
        %v1316 = vld [vmem:[#allocation9 + $0x370] sm:$0xff]
        %v1317 = vld [vmem:[#allocation9 + $0x378] sm:$0xff]
        %v1318 = vld [vmem:[#allocation9 + $0x380] sm:$0xff]
        %v1319 = vld [vmem:[#allocation9 + $0x388] sm:$0xff]
        %v1320 = vld [vmem:[#allocation9 + $0x390] sm:$0xff]
        %v1321 = vld [vmem:[#allocation9 + $0x398] sm:$0xff]
        %v1322 = vld [vmem:[#allocation9 + $0x3a0] sm:$0xff]
        %v1323 = vld [vmem:[#allocation9 + $0x3a8] sm:$0xff]
        %v1324 = vld [vmem:[#allocation9 + $0x3b0] sm:$0xff]
        %v1325 = vld [vmem:[#allocation9 + $0x3b8] sm:$0xff]
        %v1326 = vld [vmem:[#allocation9 + $0x3c0] sm:$0xff]
        %v1327 = vld [vmem:[#allocation9 + $0x3c8] sm:$0xff]
        %v1328 = vld [vmem:[#allocation9 + $0x3d0] sm:$0xff]
        %v1329 = vld [vmem:[#allocation9 + $0x3d8] sm:$0xff]
        %v1330 = vld [vmem:[#allocation9 + $0x3e0] sm:$0xff]
        %v1331 = vld [vmem:[#allocation9 + $0x3e8] sm:$0xff]
        %v1332 = vld [vmem:[#allocation9 + $0x3f0] sm:$0xff]
        %v1333 = vld [vmem:[#allocation9 + $0x3f8] sm:$0xff]
        %1334 = vmatprep.subr.mxu0 %v1207
        %1335 = vmatpush1.msra.mxu0 %v1206
        %1336 = vmatprep.subr.mxu0 %v1211
        %1337 = vmatpush1.msra.mxu0 %v1210
        %1338 = vmatprep.subr.mxu0 %v1215
        %1339 = vmatpush1.msra.mxu0 %v1214
        %1340 = vmatprep.subr.mxu0 %v1219
        %1341 = vmatpush1.msra.mxu0 %v1218
        %1342 = vmatprep.subr.mxu0 %v1223
        %1343 = vmatpush1.msra.mxu0 %v1222
        %1344 = vmatprep.subr.mxu0 %v1227
        %1345 = vmatpush1.msra.mxu0 %v1226
        %1346 = vmatprep.subr.mxu0 %v1231
        %1347 = vmatpush1.msra.mxu0 %v1230
        %1348 = vmatprep.subr.mxu0 %v1235
        %1349 = vmatpush1.msra.mxu0 %v1234
        %1350 = vmatprep.subr.mxu0 %v1239
        %1351 = vmatpush1.msra.mxu0 %v1238
        %1352 = vmatprep.subr.mxu0 %v1243
        %1353 = vmatpush1.msra.mxu0 %v1242
        %1354 = vmatprep.subr.mxu0 %v1247
        %1355 = vmatpush1.msra.mxu0 %v1246
        %1356 = vmatprep.subr.mxu0 %v1251
        %1357 = vmatpush1.msra.mxu0 %v1250
        %1358 = vmatprep.subr.mxu0 %v1255
        %1359 = vmatpush1.msra.mxu0 %v1254
        %1360 = vmatprep.subr.mxu0 %v1259
        %1361 = vmatpush1.msra.mxu0 %v1258
        %1362 = vmatprep.subr.mxu0 %v1263
        %1363 = vmatpush1.msra.mxu0 %v1262
        %1364 = vmatprep.subr.mxu0 %v1267
        %1365 = vmatpush1.msra.mxu0 %v1266
        %1366 = vmatprep.subr.mxu0 %v1271
        %1367 = vmatpush1.msra.mxu0 %v1270
        %1368 = vmatprep.subr.mxu0 %v1275
        %1369 = vmatpush1.msra.mxu0 %v1274
        %1370 = vmatprep.subr.mxu0 %v1279
        %1371 = vmatpush1.msra.mxu0 %v1278
        %1372 = vmatprep.subr.mxu0 %v1283
        %1373 = vmatpush1.msra.mxu0 %v1282
        %1374 = vmatprep.subr.mxu0 %v1287
        %1375 = vmatpush1.msra.mxu0 %v1286
        %1376 = vmatprep.subr.mxu0 %v1291
        %1377 = vmatpush1.msra.mxu0 %v1290
        %1378 = vmatprep.subr.mxu0 %v1295
        %1379 = vmatpush1.msra.mxu0 %v1294
        %1380 = vmatprep.subr.mxu0 %v1299
        %1381 = vmatpush1.msra.mxu0 %v1298
        %1382 = vmatprep.subr.mxu0 %v1303
        %1383 = vmatpush1.msra.mxu0 %v1302
        %1384 = vmatprep.subr.mxu0 %v1307
        %1385 = vmatpush1.msra.mxu0 %v1306
        %1386 = vmatprep.subr.mxu0 %v1311
        %1387 = vmatpush1.msra.mxu0 %v1310
        %1388 = vmatprep.subr.mxu0 %v1315
        %1389 = vmatpush1.msra.mxu0 %v1314
        %1390 = vmatprep.subr.mxu0 %v1319
        %1391 = vmatpush1.msra.mxu0 %v1318
        %1392 = vmatprep.subr.mxu0 %v1323
        %1393 = vmatpush1.msra.mxu0 %v1322
        %1394 = vmatprep.subr.mxu0 %v1327
        %1395 = vmatpush1.msra.mxu0 %v1326
        %1396 = vmatprep.subr.mxu0 %v1331
        %1397 = vmatpush1.msra.mxu0 %v1330
        %1398 = vmatprep.mubr.f32.mxu0 %v1203
        %1399 = vmatmul.mubr.f32.gmra.mrb[0].mxu0 %v1202
        %v1400 = vpop.f32.mrb[0].mxu0
        %v1401 = vadd.f32 %v755, %v1400
        %v1402 = vpop.f32.mrb[0].mxu0
        %v1403 = vadd.f32 %v757, %v1402
        %1404 = vmatprep.mubr.f32.mxu0 %v1205
        %1405 = vmatmul.mubr.f32.gmra.mrb[0].mxu0 %v1204
        %v1406 = vpop.f32.mrb[0].mxu0
        %v1407 = vadd.f32 %v761, %v1406
        %v1408 = vpop.f32.mrb[0].mxu0
        %v1409 = vadd.f32 %v763, %v1408
        %1410 = vdwg.mxu0
        %1411 = vmatprep.subr.mxu0 %v1209
        %1412 = vmatpush1.msra.mxu0 %v1208
        %1413 = vmatprep.subr.mxu0 %v1213
        %1414 = vmatpush1.msra.mxu0 %v1212
        %1415 = vmatprep.subr.mxu0 %v1217
        %1416 = vmatpush1.msra.mxu0 %v1216
        %1417 = vmatprep.subr.mxu0 %v1221
        %1418 = vmatpush1.msra.mxu0 %v1220
        %1419 = vmatprep.subr.mxu0 %v1225
        %1420 = vmatpush1.msra.mxu0 %v1224
        %1421 = vmatprep.subr.mxu0 %v1229
        %1422 = vmatpush1.msra.mxu0 %v1228
        %1423 = vmatprep.subr.mxu0 %v1233
        %1424 = vmatpush1.msra.mxu0 %v1232
        %1425 = vmatprep.subr.mxu0 %v1237
        %1426 = vmatpush1.msra.mxu0 %v1236
        %1427 = vmatprep.subr.mxu0 %v1241
        %1428 = vmatpush1.msra.mxu0 %v1240
        %1429 = vmatprep.subr.mxu0 %v1245
        %1430 = vmatpush1.msra.mxu0 %v1244
        %1431 = vmatprep.subr.mxu0 %v1249
        %1432 = vmatpush1.msra.mxu0 %v1248
        %1433 = vmatprep.subr.mxu0 %v1253
        %1434 = vmatpush1.msra.mxu0 %v1252
        %1435 = vmatprep.subr.mxu0 %v1257
        %1436 = vmatpush1.msra.mxu0 %v1256
        %1437 = vmatprep.subr.mxu0 %v1261
        %1438 = vmatpush1.msra.mxu0 %v1260
        %1439 = vmatprep.subr.mxu0 %v1265
        %1440 = vmatpush1.msra.mxu0 %v1264
        %1441 = vmatprep.subr.mxu0 %v1269
        %1442 = vmatpush1.msra.mxu0 %v1268
        %1443 = vmatprep.subr.mxu0 %v1273
        %1444 = vmatpush1.msra.mxu0 %v1272
        %1445 = vmatprep.subr.mxu0 %v1277
        %1446 = vmatpush1.msra.mxu0 %v1276
        %1447 = vmatprep.subr.mxu0 %v1281
        %1448 = vmatpush1.msra.mxu0 %v1280
        %1449 = vmatprep.subr.mxu0 %v1285
        %1450 = vmatpush1.msra.mxu0 %v1284
        %1451 = vmatprep.subr.mxu0 %v1289
        %1452 = vmatpush1.msra.mxu0 %v1288
        %1453 = vmatprep.subr.mxu0 %v1293
        %1454 = vmatpush1.msra.mxu0 %v1292
        %1455 = vmatprep.subr.mxu0 %v1297
        %1456 = vmatpush1.msra.mxu0 %v1296
        %1457 = vmatprep.subr.mxu0 %v1301
        %1458 = vmatpush1.msra.mxu0 %v1300
        %1459 = vmatprep.subr.mxu0 %v1305
        %1460 = vmatpush1.msra.mxu0 %v1304
        %1461 = vmatprep.subr.mxu0 %v1309
        %1462 = vmatpush1.msra.mxu0 %v1308
        %1463 = vmatprep.subr.mxu0 %v1313
        %1464 = vmatpush1.msra.mxu0 %v1312
        %1465 = vmatprep.subr.mxu0 %v1317
        %1466 = vmatpush1.msra.mxu0 %v1316
        %1467 = vmatprep.subr.mxu0 %v1321
        %1468 = vmatpush1.msra.mxu0 %v1320
        %1469 = vmatprep.subr.mxu0 %v1325
        %1470 = vmatpush1.msra.mxu0 %v1324
        %1471 = vmatprep.subr.mxu0 %v1329
        %1472 = vmatpush1.msra.mxu0 %v1328
        %1473 = vmatprep.subr.mxu0 %v1333
        %1474 = vmatpush1.msra.mxu0 %v1332
        %1475 = vmatprep.mubr.f32.mxu0 %v1203
        %1476 = vmatmul.mubr.f32.gmra.mrb[0].mxu0 %v1202
        %v1477 = vpop.f32.mrb[0].mxu0
        %v1478 = vadd.f32 %v832, %v1477
        %v1479 = vpop.f32.mrb[0].mxu0
        %v1480 = vadd.f32 %v834, %v1479
        %1481 = vmatprep.mubr.f32.mxu0 %v1205
        %1482 = vmatmul.mubr.f32.gmra.mrb[0].mxu0 %v1204
        %v1483 = vpop.f32.mrb[0].mxu0
        %v1484 = vadd.f32 %v838, %v1483
        %v1485 = vpop.f32.mrb[0].mxu0
        %v1486 = vadd.f32 %v840, %v1485
        %1487 = vdwg.mxu0
        %v1488 = vxor.u32 %v1401, 2147483648
        %v1489 = vxor.u32 %v1403, 2147483648
        %v1490 = vxor.u32 %v1478, 2147483648
        %v1491 = vxor.u32 %v1407, 2147483648
        %v1492 = vxor.u32 %v1409, 2147483648
        %v1493 = vxor.u32 %v1484, 2147483648
        %v1494 = vmul.f32 %v1488, 1.442695
        %v1495 = vpow.pop %v1494
        %v1496 = vmul.f32 %v1489, 1.442695
        %v1497 = vpow.pop %v1496
        %v1498 = vmul.f32 %v1490, 1.442695
        %v1499 = vpow.pop %v1498
        %v1500 = vmul.f32 %v1491, 1.442695
        %v1501 = vpow.pop %v1500
        %v1502 = vmul.f32 %v1492, 1.442695
        %v1503 = vpow.pop %v1502
        %v1504 = vmul.f32 %v1493, 1.442695
        %v1505 = vpow.pop %v1504
        %v1506 = vadd.f32 %v1495, 1.0
        %v1507 = vadd.f32 %v1497, 1.0
        %v1508 = vadd.f32 %v1499, 1.0
        %v1509 = vadd.f32 %v1501, 1.0
        %v1510 = vadd.f32 %v1503, 1.0
        %v1511 = vadd.f32 %v1505, 1.0
        %v1512 = vrcp.pop %v1506
        %v1513 = vmul.f32 1.0, %v1512
        %v1514 = vrcp.pop %v1507
        %v1515 = vmul.f32 1.0, %v1514
        %v1516 = vrcp.pop %v1508
        %v1517 = vmul.f32 1.0, %v1516
        %v1518 = vrcp.pop %v1509
        %v1519 = vmul.f32 1.0, %v1518
        %v1520 = vrcp.pop %v1510
        %v1521 = vmul.f32 1.0, %v1520
        %v1522 = vrcp.pop %v1511
        %v1523 = vmul.f32 1.0, %v1522
        %v1524 = vtanh.pop %v1480
        %v1525 = vtanh.pop %v1486
        %v1526 = vld [vmem:[#allocation6] sm:$0xff]
        %v1527 = vld [vmem:[#allocation6 + $0x8] sm:$0xff]
        %v1528 = vmul.f32 %v1515, %v1526
        %v1529 = vmul.f32 %v1521, %v1527
        %v1530 = vmul.f32 %v1513, %v1524
        %v1531 = vmul.f32 %v1519, %v1525
        %v1532 = vadd.f32 %v1528, %v1530
        %v1533 = vadd.f32 %v1529, %v1531
        %v1534 = vtanh.pop %v1532
        %v1535 = vtanh.pop %v1533
        %v1536 = vmul.f32 %v1517, %v1534
        %v1537 = vmul.f32 %v1523, %v1535
        %v1538 = vtanh.pop %v1536
        %v1539 = vtanh.pop %v1537
        %v1540 = vmul.f32 %v1183, %v1538
        %v1541 = vmul.f32 %v1189, %v1539
        %1542 = vst [vmem:[%s571] sm:$0xff] %v1540
        %1543 = vst [vmem:[%s571 + $0x8] sm:$0xff] %v1541
        %1544 = vst [vmem:[#allocation2 + $0x8] sm:$0xff] %v1540
        %1545 = vst [vmem:[#allocation2 + $0x18] sm:$0xff] %v1541
        %1546 = vst [vmem:[#allocation4] sm:$0xff] %v1536
        %1547 = vst [vmem:[#allocation4 + $0x8] sm:$0xff] %v1537
        %1548 = vst [vmem:[#allocation5] sm:$0xff] %v1536
        %1549 = vst [vmem:[#allocation5 + $0x8] sm:$0xff] %v1537
        %1550 = vst [vmem:[#allocation6] sm:$0xff] %v1532
        %1551 = vst [vmem:[#allocation6 + $0x8] sm:$0xff] %v1533
        %v1552 = vld [vmem:[#allocation4] sm:$0xff]
        %v1553 = vld [vmem:[#allocation4 + $0x8] sm:$0xff]
        %v1554 = vld [vmem:[#allocation11] sm:$0xff]
        %v1555 = vld [vmem:[#allocation11 + $0x8] sm:$0xff]
        %v1556 = vld [vmem:[#allocation11 + $0x10] sm:$0xff]
        %v1557 = vld [vmem:[#allocation11 + $0x18] sm:$0xff]
        %v1558 = vld [vmem:[#allocation11 + $0x20] sm:$0xff]
        %v1559 = vld [vmem:[#allocation11 + $0x28] sm:$0xff]
        %v1560 = vld [vmem:[#allocation11 + $0x30] sm:$0xff]
        %v1561 = vld [vmem:[#allocation11 + $0x38] sm:$0xff]
        %v1562 = vld [vmem:[#allocation11 + $0x40] sm:$0xff]
        %v1563 = vld [vmem:[#allocation11 + $0x48] sm:$0xff]
        %v1564 = vld [vmem:[#allocation11 + $0x50] sm:$0xff]
        %v1565 = vld [vmem:[#allocation11 + $0x58] sm:$0xff]
        %v1566 = vld [vmem:[#allocation11 + $0x60] sm:$0xff]
        %v1567 = vld [vmem:[#allocation11 + $0x68] sm:$0xff]
        %v1568 = vld [vmem:[#allocation11 + $0x70] sm:$0xff]
        %v1569 = vld [vmem:[#allocation11 + $0x78] sm:$0xff]
        %v1570 = vld [vmem:[#allocation11 + $0x80] sm:$0xff]
        %v1571 = vld [vmem:[#allocation11 + $0x88] sm:$0xff]
        %v1572 = vld [vmem:[#allocation11 + $0x90] sm:$0xff]
        %v1573 = vld [vmem:[#allocation11 + $0x98] sm:$0xff]
        %v1574 = vld [vmem:[#allocation11 + $0xa0] sm:$0xff]
        %v1575 = vld [vmem:[#allocation11 + $0xa8] sm:$0xff]
        %v1576 = vld [vmem:[#allocation11 + $0xb0] sm:$0xff]
        %v1577 = vld [vmem:[#allocation11 + $0xb8] sm:$0xff]
        %v1578 = vld [vmem:[#allocation11 + $0xc0] sm:$0xff]
        %v1579 = vld [vmem:[#allocation11 + $0xc8] sm:$0xff]
        %v1580 = vld [vmem:[#allocation11 + $0xd0] sm:$0xff]
        %v1581 = vld [vmem:[#allocation11 + $0xd8] sm:$0xff]
        %v1582 = vld [vmem:[#allocation11 + $0xe0] sm:$0xff]
        %v1583 = vld [vmem:[#allocation11 + $0xe8] sm:$0xff]
        %v1584 = vld [vmem:[#allocation11 + $0xf0] sm:$0xff]
        %v1585 = vld [vmem:[#allocation11 + $0xf8] sm:$0xff]
        %v1586 = vld [vmem:[#allocation11 + $0x100] sm:$0xff]
        %v1587 = vld [vmem:[#allocation11 + $0x108] sm:$0xff]
        %v1588 = vld [vmem:[#allocation11 + $0x110] sm:$0xff]
        %v1589 = vld [vmem:[#allocation11 + $0x118] sm:$0xff]
        %v1590 = vld [vmem:[#allocation11 + $0x120] sm:$0xff]
        %v1591 = vld [vmem:[#allocation11 + $0x128] sm:$0xff]
        %v1592 = vld [vmem:[#allocation11 + $0x130] sm:$0xff]
        %v1593 = vld [vmem:[#allocation11 + $0x138] sm:$0xff]
        %v1594 = vld [vmem:[#allocation11 + $0x140] sm:$0xff]
        %v1595 = vld [vmem:[#allocation11 + $0x148] sm:$0xff]
        %v1596 = vld [vmem:[#allocation11 + $0x150] sm:$0xff]
        %v1597 = vld [vmem:[#allocation11 + $0x158] sm:$0xff]
        %v1598 = vld [vmem:[#allocation11 + $0x160] sm:$0xff]
        %v1599 = vld [vmem:[#allocation11 + $0x168] sm:$0xff]
        %v1600 = vld [vmem:[#allocation11 + $0x170] sm:$0xff]
        %v1601 = vld [vmem:[#allocation11 + $0x178] sm:$0xff]
        %v1602 = vld [vmem:[#allocation11 + $0x180] sm:$0xff]
        %v1603 = vld [vmem:[#allocation11 + $0x188] sm:$0xff]
        %v1604 = vld [vmem:[#allocation11 + $0x190] sm:$0xff]
        %v1605 = vld [vmem:[#allocation11 + $0x198] sm:$0xff]
        %v1606 = vld [vmem:[#allocation11 + $0x1a0] sm:$0xff]
        %v1607 = vld [vmem:[#allocation11 + $0x1a8] sm:$0xff]
        %v1608 = vld [vmem:[#allocation11 + $0x1b0] sm:$0xff]
        %v1609 = vld [vmem:[#allocation11 + $0x1b8] sm:$0xff]
        %v1610 = vld [vmem:[#allocation11 + $0x1c0] sm:$0xff]
        %v1611 = vld [vmem:[#allocation11 + $0x1c8] sm:$0xff]
        %v1612 = vld [vmem:[#allocation11 + $0x1d0] sm:$0xff]
        %v1613 = vld [vmem:[#allocation11 + $0x1d8] sm:$0xff]
        %v1614 = vld [vmem:[#allocation11 + $0x1e0] sm:$0xff]
        %v1615 = vld [vmem:[#allocation11 + $0x1e8] sm:$0xff]
        %v1616 = vld [vmem:[#allocation11 + $0x1f0] sm:$0xff]
        %v1617 = vld [vmem:[#allocation11 + $0x1f8] sm:$0xff]
        %v1618 = vld [vmem:[%s9] sm:$0xf]
        %v1620 = vlaneseq
        %v1621 = vshrl.u32 %v1620, 7
        %v1622 = vsub.s32 0, %v1621
        %v1623 = vrot.slane %v1618, %v1622
        %v1624 = vlaneseq
        %v1625 = vshrl.u32 %v1624, 7
        %v1626 = vsub.s32 1, %v1625
        %v1627 = vrot.slane %v1618, %v1626
        %v1628 = vlaneseq
        %v1629 = vshrl.u32 %v1628, 7
        %v1630 = vsub.s32 2, %v1629
        %v1631 = vrot.slane %v1618, %v1630
        %v1632 = vlaneseq
        %v1633 = vshrl.u32 %v1632, 7
        %v1634 = vsub.s32 3, %v1633
        %v1635 = vrot.slane %v1618, %v1634
        %1640 = vmatprep.subr.mxu0 %v1555
        %1641 = vmatpush1.msra.mxu0 %v1554
        %1642 = vmatprep.subr.mxu0 %v1559
        %1643 = vmatpush1.msra.mxu0 %v1558
        %1644 = vmatprep.subr.mxu0 %v1563
        %1645 = vmatpush1.msra.mxu0 %v1562
        %1646 = vmatprep.subr.mxu0 %v1567
        %1647 = vmatpush1.msra.mxu0 %v1566
        %1648 = vmatprep.subr.mxu0 %v1571
        %1649 = vmatpush1.msra.mxu0 %v1570
        %1650 = vmatprep.subr.mxu0 %v1575
        %1651 = vmatpush1.msra.mxu0 %v1574
        %1652 = vmatprep.subr.mxu0 %v1579
        %1653 = vmatpush1.msra.mxu0 %v1578
        %1654 = vmatprep.subr.mxu0 %v1583
        %1655 = vmatpush1.msra.mxu0 %v1582
        %1656 = vmatprep.subr.mxu0 %v1587
        %1657 = vmatpush1.msra.mxu0 %v1586
        %1658 = vmatprep.subr.mxu0 %v1591
        %1659 = vmatpush1.msra.mxu0 %v1590
        %1660 = vmatprep.subr.mxu0 %v1595
        %1661 = vmatpush1.msra.mxu0 %v1594
        %1662 = vmatprep.subr.mxu0 %v1599
        %1663 = vmatpush1.msra.mxu0 %v1598
        %1664 = vmatprep.subr.mxu0 %v1603
        %1665 = vmatpush1.msra.mxu0 %v1602
        %1666 = vmatprep.subr.mxu0 %v1607
        %1667 = vmatpush1.msra.mxu0 %v1606
        %1668 = vmatprep.subr.mxu0 %v1611
        %1669 = vmatpush1.msra.mxu0 %v1610
        %1670 = vmatprep.subr.mxu0 %v1615
        %1671 = vmatpush1.msra.mxu0 %v1614
        %1672 = vmatprep.subr.mxu0 0.0
        %1673 = vmatpush1.msra.mxu0 0.0
        %1674 = vmatprep.subr.mxu0 0.0
        %1675 = vmatpush1.msra.mxu0 0.0
        %1676 = vmatprep.subr.mxu0 0.0
        %1677 = vmatpush1.msra.mxu0 0.0
        %1678 = vmatprep.subr.mxu0 0.0
        %1679 = vmatpush1.msra.mxu0 0.0
        %1680 = vmatprep.subr.mxu0 0.0
        %1681 = vmatpush1.msra.mxu0 0.0
        %1682 = vmatprep.subr.mxu0 0.0
        %1683 = vmatpush1.msra.mxu0 0.0
        %1684 = vmatprep.subr.mxu0 0.0
        %1685 = vmatpush1.msra.mxu0 0.0
        %1686 = vmatprep.subr.mxu0 0.0
        %1687 = vmatpush1.msra.mxu0 0.0
        %1688 = vmatprep.subr.mxu0 0.0
        %1689 = vmatpush1.msra.mxu0 0.0
        %1690 = vmatprep.subr.mxu0 0.0
        %1691 = vmatpush1.msra.mxu0 0.0
        %1692 = vmatprep.subr.mxu0 0.0
        %1693 = vmatpush1.msra.mxu0 0.0
        %1694 = vmatprep.subr.mxu0 0.0
        %1695 = vmatpush1.msra.mxu0 0.0
        %1696 = vmatprep.subr.mxu0 0.0
        %1697 = vmatpush1.msra.mxu0 0.0
        %1698 = vmatprep.subr.mxu0 0.0
        %1699 = vmatpush1.msra.mxu0 0.0
        %1700 = vmatprep.subr.mxu0 0.0
        %1701 = vmatpush1.msra.mxu0 0.0
        %1702 = vmatprep.subr.mxu0 0.0
        %1703 = vmatpush1.msra.mxu0 0.0
        %1704 = vmatprep.mubr.f32.mxu0 0.0
        %1705 = vmatmul.mubr.f32.gmra.mrb[0].mxu0 %v1552
        %v1706 = vpop.f32.mrb[0].mxu0
        %v1707 = vadd.f32 %v1623, %v1706
        %v1708 = vpop.f32.mrb[0].mxu0
        %v1709 = vadd.f32 %v1627, %v1708
        %1710 = vmatprep.mubr.f32.mxu0 0.0
        %1711 = vmatmul.mubr.f32.gmra.mrb[0].mxu0 %v1553
        %v1712 = vpop.f32.mrb[0].mxu0
        %v1713 = vadd.f32 %v1623, %v1712
        %v1714 = vpop.f32.mrb[0].mxu0
        %v1715 = vadd.f32 %v1627, %v1714
        %1716 = vdwg.mxu0
        %1717 = vmatprep.subr.mxu0 %v1557
        %1718 = vmatpush1.msra.mxu0 %v1556
        %1719 = vmatprep.subr.mxu0 %v1561
        %1720 = vmatpush1.msra.mxu0 %v1560
        %1721 = vmatprep.subr.mxu0 %v1565
        %1722 = vmatpush1.msra.mxu0 %v1564
        %1723 = vmatprep.subr.mxu0 %v1569
        %1724 = vmatpush1.msra.mxu0 %v1568
        %1725 = vmatprep.subr.mxu0 %v1573
        %1726 = vmatpush1.msra.mxu0 %v1572
        %1727 = vmatprep.subr.mxu0 %v1577
        %1728 = vmatpush1.msra.mxu0 %v1576
        %1729 = vmatprep.subr.mxu0 %v1581
        %1730 = vmatpush1.msra.mxu0 %v1580
        %1731 = vmatprep.subr.mxu0 %v1585
        %1732 = vmatpush1.msra.mxu0 %v1584
        %1733 = vmatprep.subr.mxu0 %v1589
        %1734 = vmatpush1.msra.mxu0 %v1588
        %1735 = vmatprep.subr.mxu0 %v1593
        %1736 = vmatpush1.msra.mxu0 %v1592
        %1737 = vmatprep.subr.mxu0 %v1597
        %1738 = vmatpush1.msra.mxu0 %v1596
        %1739 = vmatprep.subr.mxu0 %v1601
        %1740 = vmatpush1.msra.mxu0 %v1600
        %1741 = vmatprep.subr.mxu0 %v1605
        %1742 = vmatpush1.msra.mxu0 %v1604
        %1743 = vmatprep.subr.mxu0 %v1609
        %1744 = vmatpush1.msra.mxu0 %v1608
        %1745 = vmatprep.subr.mxu0 %v1613
        %1746 = vmatpush1.msra.mxu0 %v1612
        %1747 = vmatprep.subr.mxu0 %v1617
        %1748 = vmatpush1.msra.mxu0 %v1616
        %1749 = vmatprep.subr.mxu0 0.0
        %1750 = vmatpush1.msra.mxu0 0.0
        %1751 = vmatprep.subr.mxu0 0.0
        %1752 = vmatpush1.msra.mxu0 0.0
        %1753 = vmatprep.subr.mxu0 0.0
        %1754 = vmatpush1.msra.mxu0 0.0
        %1755 = vmatprep.subr.mxu0 0.0
        %1756 = vmatpush1.msra.mxu0 0.0
        %1757 = vmatprep.subr.mxu0 0.0
        %1758 = vmatpush1.msra.mxu0 0.0
        %1759 = vmatprep.subr.mxu0 0.0
        %1760 = vmatpush1.msra.mxu0 0.0
        %1761 = vmatprep.subr.mxu0 0.0
        %1762 = vmatpush1.msra.mxu0 0.0
        %1763 = vmatprep.subr.mxu0 0.0
        %1764 = vmatpush1.msra.mxu0 0.0
        %1765 = vmatprep.subr.mxu0 0.0
        %1766 = vmatpush1.msra.mxu0 0.0
        %1767 = vmatprep.subr.mxu0 0.0
        %1768 = vmatpush1.msra.mxu0 0.0
        %1769 = vmatprep.subr.mxu0 0.0
        %1770 = vmatpush1.msra.mxu0 0.0
        %1771 = vmatprep.subr.mxu0 0.0
        %1772 = vmatpush1.msra.mxu0 0.0
        %1773 = vmatprep.subr.mxu0 0.0
        %1774 = vmatpush1.msra.mxu0 0.0
        %1775 = vmatprep.subr.mxu0 0.0
        %1776 = vmatpush1.msra.mxu0 0.0
        %1777 = vmatprep.subr.mxu0 0.0
        %1778 = vmatpush1.msra.mxu0 0.0
        %1779 = vmatprep.subr.mxu0 0.0
        %1780 = vmatpush1.msra.mxu0 0.0
        %1781 = vmatprep.mubr.f32.mxu0 0.0
        %1782 = vmatmul.mubr.f32.gmra.mrb[0].mxu0 %v1552
        %v1783 = vpop.f32.mrb[0].mxu0
        %v1784 = vadd.f32 %v1631, %v1783
        %v1785 = vpop.f32.mrb[0].mxu0
        %v1786 = vadd.f32 %v1635, %v1785
        %1787 = vmatprep.mubr.f32.mxu0 0.0
        %1788 = vmatmul.mubr.f32.gmra.mrb[0].mxu0 %v1553
        %v1789 = vpop.f32.mrb[0].mxu0
        %v1790 = vadd.f32 %v1631, %v1789
        %v1791 = vpop.f32.mrb[0].mxu0
        %v1792 = vadd.f32 %v1635, %v1791
        %1793 = vdwg.mxu0
        %s1794 = scalar_lea.vmem %s535, 16
        %v1795 = vld [vmem:[%s1794] sm:$0xff]
        %v1796 = vld [vmem:[%s1794 + $0x8] sm:$0xff]
        %1797 = vst [vmem:[#allocation2] sm:$0xff] %v1795
        %1798 = vst [vmem:[#allocation2 + $0x10] sm:$0xff] %v1796
        %v1799 = vld [vmem:[#allocation2] sm:$0xff]
        %v1800 = vld [vmem:[#allocation2 + $0x8] sm:$0xff]
        %v1801 = vld [vmem:[#allocation2 + $0x10] sm:$0xff]
        %v1802 = vld [vmem:[#allocation2 + $0x18] sm:$0xff]
        %v1803 = vld [vmem:[#allocation7] sm:$0xff]
        %v1804 = vld [vmem:[#allocation7 + $0x8] sm:$0xff]
        %v1805 = vld [vmem:[#allocation7 + $0x10] sm:$0xff]
        %v1806 = vld [vmem:[#allocation7 + $0x18] sm:$0xff]
        %v1807 = vld [vmem:[#allocation7 + $0x20] sm:$0xff]
        %v1808 = vld [vmem:[#allocation7 + $0x28] sm:$0xff]
        %v1809 = vld [vmem:[#allocation7 + $0x30] sm:$0xff]
        %v1810 = vld [vmem:[#allocation7 + $0x38] sm:$0xff]
        %v1811 = vld [vmem:[#allocation7 + $0x40] sm:$0xff]
        %v1812 = vld [vmem:[#allocation7 + $0x48] sm:$0xff]
        %v1813 = vld [vmem:[#allocation7 + $0x50] sm:$0xff]
        %v1814 = vld [vmem:[#allocation7 + $0x58] sm:$0xff]
        %v1815 = vld [vmem:[#allocation7 + $0x60] sm:$0xff]
        %v1816 = vld [vmem:[#allocation7 + $0x68] sm:$0xff]
        %v1817 = vld [vmem:[#allocation7 + $0x70] sm:$0xff]
        %v1818 = vld [vmem:[#allocation7 + $0x78] sm:$0xff]
        %v1819 = vld [vmem:[#allocation7 + $0x80] sm:$0xff]
        %v1820 = vld [vmem:[#allocation7 + $0x88] sm:$0xff]
        %v1821 = vld [vmem:[#allocation7 + $0x90] sm:$0xff]
        %v1822 = vld [vmem:[#allocation7 + $0x98] sm:$0xff]
        %v1823 = vld [vmem:[#allocation7 + $0xa0] sm:$0xff]
        %v1824 = vld [vmem:[#allocation7 + $0xa8] sm:$0xff]
        %v1825 = vld [vmem:[#allocation7 + $0xb0] sm:$0xff]
        %v1826 = vld [vmem:[#allocation7 + $0xb8] sm:$0xff]
        %v1827 = vld [vmem:[#allocation7 + $0xc0] sm:$0xff]
        %v1828 = vld [vmem:[#allocation7 + $0xc8] sm:$0xff]
        %v1829 = vld [vmem:[#allocation7 + $0xd0] sm:$0xff]
        %v1830 = vld [vmem:[#allocation7 + $0xd8] sm:$0xff]
        %v1831 = vld [vmem:[#allocation7 + $0xe0] sm:$0xff]
        %v1832 = vld [vmem:[#allocation7 + $0xe8] sm:$0xff]
        %v1833 = vld [vmem:[#allocation7 + $0xf0] sm:$0xff]
        %v1834 = vld [vmem:[#allocation7 + $0xf8] sm:$0xff]
        %v1835 = vld [vmem:[#allocation7 + $0x100] sm:$0xff]
        %v1836 = vld [vmem:[#allocation7 + $0x108] sm:$0xff]
        %v1837 = vld [vmem:[#allocation7 + $0x110] sm:$0xff]
        %v1838 = vld [vmem:[#allocation7 + $0x118] sm:$0xff]
        %v1839 = vld [vmem:[#allocation7 + $0x120] sm:$0xff]
        %v1840 = vld [vmem:[#allocation7 + $0x128] sm:$0xff]
        %v1841 = vld [vmem:[#allocation7 + $0x130] sm:$0xff]
        %v1842 = vld [vmem:[#allocation7 + $0x138] sm:$0xff]
        %v1843 = vld [vmem:[#allocation7 + $0x140] sm:$0xff]
        %v1844 = vld [vmem:[#allocation7 + $0x148] sm:$0xff]
        %v1845 = vld [vmem:[#allocation7 + $0x150] sm:$0xff]
        %v1846 = vld [vmem:[#allocation7 + $0x158] sm:$0xff]
        %v1847 = vld [vmem:[#allocation7 + $0x160] sm:$0xff]
        %v1848 = vld [vmem:[#allocation7 + $0x168] sm:$0xff]
        %v1849 = vld [vmem:[#allocation7 + $0x170] sm:$0xff]
        %v1850 = vld [vmem:[#allocation7 + $0x178] sm:$0xff]
        %v1851 = vld [vmem:[#allocation7 + $0x180] sm:$0xff]
        %v1852 = vld [vmem:[#allocation7 + $0x188] sm:$0xff]
        %v1853 = vld [vmem:[#allocation7 + $0x190] sm:$0xff]
        %v1854 = vld [vmem:[#allocation7 + $0x198] sm:$0xff]
        %v1855 = vld [vmem:[#allocation7 + $0x1a0] sm:$0xff]
        %v1856 = vld [vmem:[#allocation7 + $0x1a8] sm:$0xff]
        %v1857 = vld [vmem:[#allocation7 + $0x1b0] sm:$0xff]
        %v1858 = vld [vmem:[#allocation7 + $0x1b8] sm:$0xff]
        %v1859 = vld [vmem:[#allocation7 + $0x1c0] sm:$0xff]
        %v1860 = vld [vmem:[#allocation7 + $0x1c8] sm:$0xff]
        %v1861 = vld [vmem:[#allocation7 + $0x1d0] sm:$0xff]
        %v1862 = vld [vmem:[#allocation7 + $0x1d8] sm:$0xff]
        %v1863 = vld [vmem:[#allocation7 + $0x1e0] sm:$0xff]
        %v1864 = vld [vmem:[#allocation7 + $0x1e8] sm:$0xff]
        %v1865 = vld [vmem:[#allocation7 + $0x1f0] sm:$0xff]
        %v1866 = vld [vmem:[#allocation7 + $0x1f8] sm:$0xff]
        %v1867 = vld [vmem:[#allocation7 + $0x200] sm:$0xff]
        %v1868 = vld [vmem:[#allocation7 + $0x208] sm:$0xff]
        %v1869 = vld [vmem:[#allocation7 + $0x210] sm:$0xff]
        %v1870 = vld [vmem:[#allocation7 + $0x218] sm:$0xff]
        %v1871 = vld [vmem:[#allocation7 + $0x220] sm:$0xff]
        %v1872 = vld [vmem:[#allocation7 + $0x228] sm:$0xff]
        %v1873 = vld [vmem:[#allocation7 + $0x230] sm:$0xff]
        %v1874 = vld [vmem:[#allocation7 + $0x238] sm:$0xff]
        %v1875 = vld [vmem:[#allocation7 + $0x240] sm:$0xff]
        %v1876 = vld [vmem:[#allocation7 + $0x248] sm:$0xff]
        %v1877 = vld [vmem:[#allocation7 + $0x250] sm:$0xff]
        %v1878 = vld [vmem:[#allocation7 + $0x258] sm:$0xff]
        %v1879 = vld [vmem:[#allocation7 + $0x260] sm:$0xff]
        %v1880 = vld [vmem:[#allocation7 + $0x268] sm:$0xff]
        %v1881 = vld [vmem:[#allocation7 + $0x270] sm:$0xff]
        %v1882 = vld [vmem:[#allocation7 + $0x278] sm:$0xff]
        %v1883 = vld [vmem:[#allocation7 + $0x280] sm:$0xff]
        %v1884 = vld [vmem:[#allocation7 + $0x288] sm:$0xff]
        %v1885 = vld [vmem:[#allocation7 + $0x290] sm:$0xff]
        %v1886 = vld [vmem:[#allocation7 + $0x298] sm:$0xff]
        %v1887 = vld [vmem:[#allocation7 + $0x2a0] sm:$0xff]
        %v1888 = vld [vmem:[#allocation7 + $0x2a8] sm:$0xff]
        %v1889 = vld [vmem:[#allocation7 + $0x2b0] sm:$0xff]
        %v1890 = vld [vmem:[#allocation7 + $0x2b8] sm:$0xff]
        %v1891 = vld [vmem:[#allocation7 + $0x2c0] sm:$0xff]
        %v1892 = vld [vmem:[#allocation7 + $0x2c8] sm:$0xff]
        %v1893 = vld [vmem:[#allocation7 + $0x2d0] sm:$0xff]
        %v1894 = vld [vmem:[#allocation7 + $0x2d8] sm:$0xff]
        %v1895 = vld [vmem:[#allocation7 + $0x2e0] sm:$0xff]
        %v1896 = vld [vmem:[#allocation7 + $0x2e8] sm:$0xff]
        %v1897 = vld [vmem:[#allocation7 + $0x2f0] sm:$0xff]
        %v1898 = vld [vmem:[#allocation7 + $0x2f8] sm:$0xff]
        %v1899 = vld [vmem:[#allocation7 + $0x300] sm:$0xff]
        %v1900 = vld [vmem:[#allocation7 + $0x308] sm:$0xff]
        %v1901 = vld [vmem:[#allocation7 + $0x310] sm:$0xff]
        %v1902 = vld [vmem:[#allocation7 + $0x318] sm:$0xff]
        %v1903 = vld [vmem:[#allocation7 + $0x320] sm:$0xff]
        %v1904 = vld [vmem:[#allocation7 + $0x328] sm:$0xff]
        %v1905 = vld [vmem:[#allocation7 + $0x330] sm:$0xff]
        %v1906 = vld [vmem:[#allocation7 + $0x338] sm:$0xff]
        %v1907 = vld [vmem:[#allocation7 + $0x340] sm:$0xff]
        %v1908 = vld [vmem:[#allocation7 + $0x348] sm:$0xff]
        %v1909 = vld [vmem:[#allocation7 + $0x350] sm:$0xff]
        %v1910 = vld [vmem:[#allocation7 + $0x358] sm:$0xff]
        %v1911 = vld [vmem:[#allocation7 + $0x360] sm:$0xff]
        %v1912 = vld [vmem:[#allocation7 + $0x368] sm:$0xff]
        %v1913 = vld [vmem:[#allocation7 + $0x370] sm:$0xff]
        %v1914 = vld [vmem:[#allocation7 + $0x378] sm:$0xff]
        %v1915 = vld [vmem:[#allocation7 + $0x380] sm:$0xff]
        %v1916 = vld [vmem:[#allocation7 + $0x388] sm:$0xff]
        %v1917 = vld [vmem:[#allocation7 + $0x390] sm:$0xff]
        %v1918 = vld [vmem:[#allocation7 + $0x398] sm:$0xff]
        %v1919 = vld [vmem:[#allocation7 + $0x3a0] sm:$0xff]
        %v1920 = vld [vmem:[#allocation7 + $0x3a8] sm:$0xff]
        %v1921 = vld [vmem:[#allocation7 + $0x3b0] sm:$0xff]
        %v1922 = vld [vmem:[#allocation7 + $0x3b8] sm:$0xff]
        %v1923 = vld [vmem:[#allocation7 + $0x3c0] sm:$0xff]
        %v1924 = vld [vmem:[#allocation7 + $0x3c8] sm:$0xff]
        %v1925 = vld [vmem:[#allocation7 + $0x3d0] sm:$0xff]
        %v1926 = vld [vmem:[#allocation7 + $0x3d8] sm:$0xff]
        %v1927 = vld [vmem:[#allocation7 + $0x3e0] sm:$0xff]
        %v1928 = vld [vmem:[#allocation7 + $0x3e8] sm:$0xff]
        %v1929 = vld [vmem:[#allocation7 + $0x3f0] sm:$0xff]
        %v1930 = vld [vmem:[#allocation7 + $0x3f8] sm:$0xff]
        %v1931 = vld [vmem:[%s6] sm:$0xf]
        %v1933 = vlaneseq
        %v1934 = vshrl.u32 %v1933, 7
        %v1935 = vsub.s32 0, %v1934
        %v1936 = vrot.slane %v1931, %v1935
        %v1937 = vlaneseq
        %v1938 = vshrl.u32 %v1937, 7
        %v1939 = vsub.s32 1, %v1938
        %v1940 = vrot.slane %v1931, %v1939
        %v1941 = vlaneseq
        %v1942 = vshrl.u32 %v1941, 7
        %v1943 = vsub.s32 2, %v1942
        %v1944 = vrot.slane %v1931, %v1943
        %v1945 = vlaneseq
        %v1946 = vshrl.u32 %v1945, 7
        %v1947 = vsub.s32 3, %v1946
        %v1948 = vrot.slane %v1931, %v1947
        %1953 = vmatprep.subr.mxu0 %v1804
        %1954 = vmatpush1.msra.mxu0 %v1803
        %1955 = vmatprep.subr.mxu0 %v1808
        %1956 = vmatpush1.msra.mxu0 %v1807
        %1957 = vmatprep.subr.mxu0 %v1812
        %1958 = vmatpush1.msra.mxu0 %v1811
        %1959 = vmatprep.subr.mxu0 %v1816
        %1960 = vmatpush1.msra.mxu0 %v1815
        %1961 = vmatprep.subr.mxu0 %v1820
        %1962 = vmatpush1.msra.mxu0 %v1819
        %1963 = vmatprep.subr.mxu0 %v1824
        %1964 = vmatpush1.msra.mxu0 %v1823
        %1965 = vmatprep.subr.mxu0 %v1828
        %1966 = vmatpush1.msra.mxu0 %v1827
        %1967 = vmatprep.subr.mxu0 %v1832
        %1968 = vmatpush1.msra.mxu0 %v1831
        %1969 = vmatprep.subr.mxu0 %v1836
        %1970 = vmatpush1.msra.mxu0 %v1835
        %1971 = vmatprep.subr.mxu0 %v1840
        %1972 = vmatpush1.msra.mxu0 %v1839
        %1973 = vmatprep.subr.mxu0 %v1844
        %1974 = vmatpush1.msra.mxu0 %v1843
        %1975 = vmatprep.subr.mxu0 %v1848
        %1976 = vmatpush1.msra.mxu0 %v1847
        %1977 = vmatprep.subr.mxu0 %v1852
        %1978 = vmatpush1.msra.mxu0 %v1851
        %1979 = vmatprep.subr.mxu0 %v1856
        %1980 = vmatpush1.msra.mxu0 %v1855
        %1981 = vmatprep.subr.mxu0 %v1860
        %1982 = vmatpush1.msra.mxu0 %v1859
        %1983 = vmatprep.subr.mxu0 %v1864
        %1984 = vmatpush1.msra.mxu0 %v1863
        %1985 = vmatprep.subr.mxu0 %v1868
        %1986 = vmatpush1.msra.mxu0 %v1867
        %1987 = vmatprep.subr.mxu0 %v1872
        %1988 = vmatpush1.msra.mxu0 %v1871
        %1989 = vmatprep.subr.mxu0 %v1876
        %1990 = vmatpush1.msra.mxu0 %v1875
        %1991 = vmatprep.subr.mxu0 %v1880
        %1992 = vmatpush1.msra.mxu0 %v1879
        %1993 = vmatprep.subr.mxu0 %v1884
        %1994 = vmatpush1.msra.mxu0 %v1883
        %1995 = vmatprep.subr.mxu0 %v1888
        %1996 = vmatpush1.msra.mxu0 %v1887
        %1997 = vmatprep.subr.mxu0 %v1892
        %1998 = vmatpush1.msra.mxu0 %v1891
        %1999 = vmatprep.subr.mxu0 %v1896
        %2000 = vmatpush1.msra.mxu0 %v1895
        %2001 = vmatprep.subr.mxu0 %v1900
        %2002 = vmatpush1.msra.mxu0 %v1899
        %2003 = vmatprep.subr.mxu0 %v1904
        %2004 = vmatpush1.msra.mxu0 %v1903
        %2005 = vmatprep.subr.mxu0 %v1908
        %2006 = vmatpush1.msra.mxu0 %v1907
        %2007 = vmatprep.subr.mxu0 %v1912
        %2008 = vmatpush1.msra.mxu0 %v1911
        %2009 = vmatprep.subr.mxu0 %v1916
        %2010 = vmatpush1.msra.mxu0 %v1915
        %2011 = vmatprep.subr.mxu0 %v1920
        %2012 = vmatpush1.msra.mxu0 %v1919
        %2013 = vmatprep.subr.mxu0 %v1924
        %2014 = vmatpush1.msra.mxu0 %v1923
        %2015 = vmatprep.subr.mxu0 %v1928
        %2016 = vmatpush1.msra.mxu0 %v1927
        %2017 = vmatprep.mubr.f32.mxu0 %v1800
        %2018 = vmatmul.mubr.f32.gmra.mrb[0].mxu0 %v1799
        %v2019 = vpop.f32.mrb[0].mxu0
        %v2020 = vadd.f32 %v1936, %v2019
        %v2021 = vpop.f32.mrb[0].mxu0
        %v2022 = vadd.f32 %v1940, %v2021
        %2023 = vmatprep.mubr.f32.mxu0 %v1802
        %2024 = vmatmul.mubr.f32.gmra.mrb[0].mxu0 %v1801
        %v2025 = vpop.f32.mrb[0].mxu0
        %v2026 = vadd.f32 %v1936, %v2025
        %v2027 = vpop.f32.mrb[0].mxu0
        %v2028 = vadd.f32 %v1940, %v2027
        %2029 = vdwg.mxu0
        %2030 = vmatprep.subr.mxu0 %v1806
        %2031 = vmatpush1.msra.mxu0 %v1805
        %2032 = vmatprep.subr.mxu0 %v1810
        %2033 = vmatpush1.msra.mxu0 %v1809
        %2034 = vmatprep.subr.mxu0 %v1814
        %2035 = vmatpush1.msra.mxu0 %v1813
        %2036 = vmatprep.subr.mxu0 %v1818
        %2037 = vmatpush1.msra.mxu0 %v1817
        %2038 = vmatprep.subr.mxu0 %v1822
        %2039 = vmatpush1.msra.mxu0 %v1821
        %2040 = vmatprep.subr.mxu0 %v1826
        %2041 = vmatpush1.msra.mxu0 %v1825
        %2042 = vmatprep.subr.mxu0 %v1830
        %2043 = vmatpush1.msra.mxu0 %v1829
        %2044 = vmatprep.subr.mxu0 %v1834
        %2045 = vmatpush1.msra.mxu0 %v1833
        %2046 = vmatprep.subr.mxu0 %v1838
        %2047 = vmatpush1.msra.mxu0 %v1837
        %2048 = vmatprep.subr.mxu0 %v1842
        %2049 = vmatpush1.msra.mxu0 %v1841
        %2050 = vmatprep.subr.mxu0 %v1846
        %2051 = vmatpush1.msra.mxu0 %v1845
        %2052 = vmatprep.subr.mxu0 %v1850
        %2053 = vmatpush1.msra.mxu0 %v1849
        %2054 = vmatprep.subr.mxu0 %v1854
        %2055 = vmatpush1.msra.mxu0 %v1853
        %2056 = vmatprep.subr.mxu0 %v1858
        %2057 = vmatpush1.msra.mxu0 %v1857
        %2058 = vmatprep.subr.mxu0 %v1862
        %2059 = vmatpush1.msra.mxu0 %v1861
        %2060 = vmatprep.subr.mxu0 %v1866
        %2061 = vmatpush1.msra.mxu0 %v1865
        %2062 = vmatprep.subr.mxu0 %v1870
        %2063 = vmatpush1.msra.mxu0 %v1869
        %2064 = vmatprep.subr.mxu0 %v1874
        %2065 = vmatpush1.msra.mxu0 %v1873
        %2066 = vmatprep.subr.mxu0 %v1878
        %2067 = vmatpush1.msra.mxu0 %v1877
        %2068 = vmatprep.subr.mxu0 %v1882
        %2069 = vmatpush1.msra.mxu0 %v1881
        %2070 = vmatprep.subr.mxu0 %v1886
        %2071 = vmatpush1.msra.mxu0 %v1885
        %2072 = vmatprep.subr.mxu0 %v1890
        %2073 = vmatpush1.msra.mxu0 %v1889
        %2074 = vmatprep.subr.mxu0 %v1894
        %2075 = vmatpush1.msra.mxu0 %v1893
        %2076 = vmatprep.subr.mxu0 %v1898
        %2077 = vmatpush1.msra.mxu0 %v1897
        %2078 = vmatprep.subr.mxu0 %v1902
        %2079 = vmatpush1.msra.mxu0 %v1901
        %2080 = vmatprep.subr.mxu0 %v1906
        %2081 = vmatpush1.msra.mxu0 %v1905
        %2082 = vmatprep.subr.mxu0 %v1910
        %2083 = vmatpush1.msra.mxu0 %v1909
        %2084 = vmatprep.subr.mxu0 %v1914
        %2085 = vmatpush1.msra.mxu0 %v1913
        %2086 = vmatprep.subr.mxu0 %v1918
        %2087 = vmatpush1.msra.mxu0 %v1917
        %2088 = vmatprep.subr.mxu0 %v1922
        %2089 = vmatpush1.msra.mxu0 %v1921
        %2090 = vmatprep.subr.mxu0 %v1926
        %2091 = vmatpush1.msra.mxu0 %v1925
        %2092 = vmatprep.subr.mxu0 %v1930
        %2093 = vmatpush1.msra.mxu0 %v1929
        %2094 = vmatprep.mubr.f32.mxu0 %v1800
        %2095 = vmatmul.mubr.f32.gmra.mrb[0].mxu0 %v1799
        %v2096 = vpop.f32.mrb[0].mxu0
        %v2097 = vadd.f32 %v1944, %v2096
        %v2098 = vpop.f32.mrb[0].mxu0
        %v2099 = vadd.f32 %v1948, %v2098
        %2100 = vmatprep.mubr.f32.mxu0 %v1802
        %2101 = vmatmul.mubr.f32.gmra.mrb[0].mxu0 %v1801
        %v2102 = vpop.f32.mrb[0].mxu0
        %v2103 = vadd.f32 %v1944, %v2102
        %v2104 = vpop.f32.mrb[0].mxu0
        %v2105 = vadd.f32 %v1948, %v2104
        %2106 = vdwg.mxu0
        %v2107 = vxor.u32 %v2020, 2147483648
        %v2108 = vxor.u32 %v2022, 2147483648
        %v2109 = vxor.u32 %v2097, 2147483648
        %v2110 = vxor.u32 %v2026, 2147483648
        %v2111 = vxor.u32 %v2028, 2147483648
        %v2112 = vxor.u32 %v2103, 2147483648
        %v2113 = vmul.f32 %v2107, 1.442695
        %v2114 = vpow.pop %v2113
        %v2115 = vmul.f32 %v2108, 1.442695
        %v2116 = vpow.pop %v2115
        %v2117 = vmul.f32 %v2109, 1.442695
        %v2118 = vpow.pop %v2117
        %v2119 = vmul.f32 %v2110, 1.442695
        %v2120 = vpow.pop %v2119
        %v2121 = vmul.f32 %v2111, 1.442695
        %v2122 = vpow.pop %v2121
        %v2123 = vmul.f32 %v2112, 1.442695
        %v2124 = vpow.pop %v2123
        %v2125 = vadd.f32 %v2114, 1.0
        %v2126 = vadd.f32 %v2116, 1.0
        %v2127 = vadd.f32 %v2118, 1.0
        %v2128 = vadd.f32 %v2120, 1.0
        %v2129 = vadd.f32 %v2122, 1.0
        %v2130 = vadd.f32 %v2124, 1.0
        %v2131 = vrcp.pop %v2125
        %v2132 = vmul.f32 1.0, %v2131
        %v2133 = vrcp.pop %v2126
        %v2134 = vmul.f32 1.0, %v2133
        %v2135 = vrcp.pop %v2127
        %v2136 = vmul.f32 1.0, %v2135
        %v2137 = vrcp.pop %v2128
        %v2138 = vmul.f32 1.0, %v2137
        %v2139 = vrcp.pop %v2129
        %v2140 = vmul.f32 1.0, %v2139
        %v2141 = vrcp.pop %v2130
        %v2142 = vmul.f32 1.0, %v2141
        %v2143 = vtanh.pop %v2099
        %v2144 = vtanh.pop %v2105
        %v2145 = vld [vmem:[#allocation5] sm:$0xff]
        %v2146 = vld [vmem:[#allocation5 + $0x8] sm:$0xff]
        %v2147 = vmul.f32 %v2134, %v2145
        %v2148 = vmul.f32 %v2140, %v2146
        %2149 = vst [vmem:[#allocation3] sm:$0xff] %v2147
        %2150 = vst [vmem:[#allocation3 + $0x10] sm:$0xff] %v2148
        %v2151 = vmul.f32 %v2132, %v2143
        %v2152 = vmul.f32 %v2138, %v2144
        %2153 = vst [vmem:[#allocation3 + $0x8] sm:$0xff] %v2151
        %2154 = vst [vmem:[#allocation3 + $0x18] sm:$0xff] %v2152
        %v2155 = vld [vmem:[#allocation3] sm:$0xff]
        %v2156 = vld [vmem:[#allocation3 + $0x8] sm:$0xff]
        %v2157 = vld [vmem:[#allocation3 + $0x10] sm:$0xff]
        %v2158 = vld [vmem:[#allocation3 + $0x18] sm:$0xff]
        %v2159 = vld [vmem:[#allocation9] sm:$0xff]
        %v2160 = vld [vmem:[#allocation9 + $0x8] sm:$0xff]
        %v2161 = vld [vmem:[#allocation9 + $0x10] sm:$0xff]
        %v2162 = vld [vmem:[#allocation9 + $0x18] sm:$0xff]
        %v2163 = vld [vmem:[#allocation9 + $0x20] sm:$0xff]
        %v2164 = vld [vmem:[#allocation9 + $0x28] sm:$0xff]
        %v2165 = vld [vmem:[#allocation9 + $0x30] sm:$0xff]
        %v2166 = vld [vmem:[#allocation9 + $0x38] sm:$0xff]
        %v2167 = vld [vmem:[#allocation9 + $0x40] sm:$0xff]
        %v2168 = vld [vmem:[#allocation9 + $0x48] sm:$0xff]
        %v2169 = vld [vmem:[#allocation9 + $0x50] sm:$0xff]
        %v2170 = vld [vmem:[#allocation9 + $0x58] sm:$0xff]
        %v2171 = vld [vmem:[#allocation9 + $0x60] sm:$0xff]
        %v2172 = vld [vmem:[#allocation9 + $0x68] sm:$0xff]
        %v2173 = vld [vmem:[#allocation9 + $0x70] sm:$0xff]
        %v2174 = vld [vmem:[#allocation9 + $0x78] sm:$0xff]
        %v2175 = vld [vmem:[#allocation9 + $0x80] sm:$0xff]
        %v2176 = vld [vmem:[#allocation9 + $0x88] sm:$0xff]
        %v2177 = vld [vmem:[#allocation9 + $0x90] sm:$0xff]
        %v2178 = vld [vmem:[#allocation9 + $0x98] sm:$0xff]
        %v2179 = vld [vmem:[#allocation9 + $0xa0] sm:$0xff]
        %v2180 = vld [vmem:[#allocation9 + $0xa8] sm:$0xff]
        %v2181 = vld [vmem:[#allocation9 + $0xb0] sm:$0xff]
        %v2182 = vld [vmem:[#allocation9 + $0xb8] sm:$0xff]
        %v2183 = vld [vmem:[#allocation9 + $0xc0] sm:$0xff]
        %v2184 = vld [vmem:[#allocation9 + $0xc8] sm:$0xff]
        %v2185 = vld [vmem:[#allocation9 + $0xd0] sm:$0xff]
        %v2186 = vld [vmem:[#allocation9 + $0xd8] sm:$0xff]
        %v2187 = vld [vmem:[#allocation9 + $0xe0] sm:$0xff]
        %v2188 = vld [vmem:[#allocation9 + $0xe8] sm:$0xff]
        %v2189 = vld [vmem:[#allocation9 + $0xf0] sm:$0xff]
        %v2190 = vld [vmem:[#allocation9 + $0xf8] sm:$0xff]
        %v2191 = vld [vmem:[#allocation9 + $0x100] sm:$0xff]
        %v2192 = vld [vmem:[#allocation9 + $0x108] sm:$0xff]
        %v2193 = vld [vmem:[#allocation9 + $0x110] sm:$0xff]
        %v2194 = vld [vmem:[#allocation9 + $0x118] sm:$0xff]
        %v2195 = vld [vmem:[#allocation9 + $0x120] sm:$0xff]
        %v2196 = vld [vmem:[#allocation9 + $0x128] sm:$0xff]
        %v2197 = vld [vmem:[#allocation9 + $0x130] sm:$0xff]
        %v2198 = vld [vmem:[#allocation9 + $0x138] sm:$0xff]
        %v2199 = vld [vmem:[#allocation9 + $0x140] sm:$0xff]
        %v2200 = vld [vmem:[#allocation9 + $0x148] sm:$0xff]
        %v2201 = vld [vmem:[#allocation9 + $0x150] sm:$0xff]
        %v2202 = vld [vmem:[#allocation9 + $0x158] sm:$0xff]
        %v2203 = vld [vmem:[#allocation9 + $0x160] sm:$0xff]
        %v2204 = vld [vmem:[#allocation9 + $0x168] sm:$0xff]
        %v2205 = vld [vmem:[#allocation9 + $0x170] sm:$0xff]
        %v2206 = vld [vmem:[#allocation9 + $0x178] sm:$0xff]
        %v2207 = vld [vmem:[#allocation9 + $0x180] sm:$0xff]
        %v2208 = vld [vmem:[#allocation9 + $0x188] sm:$0xff]
        %v2209 = vld [vmem:[#allocation9 + $0x190] sm:$0xff]
        %v2210 = vld [vmem:[#allocation9 + $0x198] sm:$0xff]
        %v2211 = vld [vmem:[#allocation9 + $0x1a0] sm:$0xff]
        %v2212 = vld [vmem:[#allocation9 + $0x1a8] sm:$0xff]
        %v2213 = vld [vmem:[#allocation9 + $0x1b0] sm:$0xff]
        %v2214 = vld [vmem:[#allocation9 + $0x1b8] sm:$0xff]
        %v2215 = vld [vmem:[#allocation9 + $0x1c0] sm:$0xff]
        %v2216 = vld [vmem:[#allocation9 + $0x1c8] sm:$0xff]
        %v2217 = vld [vmem:[#allocation9 + $0x1d0] sm:$0xff]
        %v2218 = vld [vmem:[#allocation9 + $0x1d8] sm:$0xff]
        %v2219 = vld [vmem:[#allocation9 + $0x1e0] sm:$0xff]
        %v2220 = vld [vmem:[#allocation9 + $0x1e8] sm:$0xff]
        %v2221 = vld [vmem:[#allocation9 + $0x1f0] sm:$0xff]
        %v2222 = vld [vmem:[#allocation9 + $0x1f8] sm:$0xff]
        %v2223 = vld [vmem:[#allocation9 + $0x200] sm:$0xff]
        %v2224 = vld [vmem:[#allocation9 + $0x208] sm:$0xff]
        %v2225 = vld [vmem:[#allocation9 + $0x210] sm:$0xff]
        %v2226 = vld [vmem:[#allocation9 + $0x218] sm:$0xff]
        %v2227 = vld [vmem:[#allocation9 + $0x220] sm:$0xff]
        %v2228 = vld [vmem:[#allocation9 + $0x228] sm:$0xff]
        %v2229 = vld [vmem:[#allocation9 + $0x230] sm:$0xff]
        %v2230 = vld [vmem:[#allocation9 + $0x238] sm:$0xff]
        %v2231 = vld [vmem:[#allocation9 + $0x240] sm:$0xff]
        %v2232 = vld [vmem:[#allocation9 + $0x248] sm:$0xff]
        %v2233 = vld [vmem:[#allocation9 + $0x250] sm:$0xff]
        %v2234 = vld [vmem:[#allocation9 + $0x258] sm:$0xff]
        %v2235 = vld [vmem:[#allocation9 + $0x260] sm:$0xff]
        %v2236 = vld [vmem:[#allocation9 + $0x268] sm:$0xff]
        %v2237 = vld [vmem:[#allocation9 + $0x270] sm:$0xff]
        %v2238 = vld [vmem:[#allocation9 + $0x278] sm:$0xff]
        %v2239 = vld [vmem:[#allocation9 + $0x280] sm:$0xff]
        %v2240 = vld [vmem:[#allocation9 + $0x288] sm:$0xff]
        %v2241 = vld [vmem:[#allocation9 + $0x290] sm:$0xff]
        %v2242 = vld [vmem:[#allocation9 + $0x298] sm:$0xff]
        %v2243 = vld [vmem:[#allocation9 + $0x2a0] sm:$0xff]
        %v2244 = vld [vmem:[#allocation9 + $0x2a8] sm:$0xff]
        %v2245 = vld [vmem:[#allocation9 + $0x2b0] sm:$0xff]
        %v2246 = vld [vmem:[#allocation9 + $0x2b8] sm:$0xff]
        %v2247 = vld [vmem:[#allocation9 + $0x2c0] sm:$0xff]
        %v2248 = vld [vmem:[#allocation9 + $0x2c8] sm:$0xff]
        %v2249 = vld [vmem:[#allocation9 + $0x2d0] sm:$0xff]
        %v2250 = vld [vmem:[#allocation9 + $0x2d8] sm:$0xff]
        %v2251 = vld [vmem:[#allocation9 + $0x2e0] sm:$0xff]
        %v2252 = vld [vmem:[#allocation9 + $0x2e8] sm:$0xff]
        %v2253 = vld [vmem:[#allocation9 + $0x2f0] sm:$0xff]
        %v2254 = vld [vmem:[#allocation9 + $0x2f8] sm:$0xff]
        %v2255 = vld [vmem:[#allocation9 + $0x300] sm:$0xff]
        %v2256 = vld [vmem:[#allocation9 + $0x308] sm:$0xff]
        %v2257 = vld [vmem:[#allocation9 + $0x310] sm:$0xff]
        %v2258 = vld [vmem:[#allocation9 + $0x318] sm:$0xff]
        %v2259 = vld [vmem:[#allocation9 + $0x320] sm:$0xff]
        %v2260 = vld [vmem:[#allocation9 + $0x328] sm:$0xff]
        %v2261 = vld [vmem:[#allocation9 + $0x330] sm:$0xff]
        %v2262 = vld [vmem:[#allocation9 + $0x338] sm:$0xff]
        %v2263 = vld [vmem:[#allocation9 + $0x340] sm:$0xff]
        %v2264 = vld [vmem:[#allocation9 + $0x348] sm:$0xff]
        %v2265 = vld [vmem:[#allocation9 + $0x350] sm:$0xff]
        %v2266 = vld [vmem:[#allocation9 + $0x358] sm:$0xff]
        %v2267 = vld [vmem:[#allocation9 + $0x360] sm:$0xff]
        %v2268 = vld [vmem:[#allocation9 + $0x368] sm:$0xff]
        %v2269 = vld [vmem:[#allocation9 + $0x370] sm:$0xff]
        %v2270 = vld [vmem:[#allocation9 + $0x378] sm:$0xff]
        %v2271 = vld [vmem:[#allocation9 + $0x380] sm:$0xff]
        %v2272 = vld [vmem:[#allocation9 + $0x388] sm:$0xff]
        %v2273 = vld [vmem:[#allocation9 + $0x390] sm:$0xff]
        %v2274 = vld [vmem:[#allocation9 + $0x398] sm:$0xff]
        %v2275 = vld [vmem:[#allocation9 + $0x3a0] sm:$0xff]
        %v2276 = vld [vmem:[#allocation9 + $0x3a8] sm:$0xff]
        %v2277 = vld [vmem:[#allocation9 + $0x3b0] sm:$0xff]
        %v2278 = vld [vmem:[#allocation9 + $0x3b8] sm:$0xff]
        %v2279 = vld [vmem:[#allocation9 + $0x3c0] sm:$0xff]
        %v2280 = vld [vmem:[#allocation9 + $0x3c8] sm:$0xff]
        %v2281 = vld [vmem:[#allocation9 + $0x3d0] sm:$0xff]
        %v2282 = vld [vmem:[#allocation9 + $0x3d8] sm:$0xff]
        %v2283 = vld [vmem:[#allocation9 + $0x3e0] sm:$0xff]
        %v2284 = vld [vmem:[#allocation9 + $0x3e8] sm:$0xff]
        %v2285 = vld [vmem:[#allocation9 + $0x3f0] sm:$0xff]
        %v2286 = vld [vmem:[#allocation9 + $0x3f8] sm:$0xff]
        %2287 = vmatprep.subr.mxu0 %v2160
        %2288 = vmatpush1.msra.mxu0 %v2159
        %2289 = vmatprep.subr.mxu0 %v2164
        %2290 = vmatpush1.msra.mxu0 %v2163
        %2291 = vmatprep.subr.mxu0 %v2168
        %2292 = vmatpush1.msra.mxu0 %v2167
        %2293 = vmatprep.subr.mxu0 %v2172
        %2294 = vmatpush1.msra.mxu0 %v2171
        %2295 = vmatprep.subr.mxu0 %v2176
        %2296 = vmatpush1.msra.mxu0 %v2175
        %2297 = vmatprep.subr.mxu0 %v2180
        %2298 = vmatpush1.msra.mxu0 %v2179
        %2299 = vmatprep.subr.mxu0 %v2184
        %2300 = vmatpush1.msra.mxu0 %v2183
        %2301 = vmatprep.subr.mxu0 %v2188
        %2302 = vmatpush1.msra.mxu0 %v2187
        %2303 = vmatprep.subr.mxu0 %v2192
        %2304 = vmatpush1.msra.mxu0 %v2191
        %2305 = vmatprep.subr.mxu0 %v2196
        %2306 = vmatpush1.msra.mxu0 %v2195
        %2307 = vmatprep.subr.mxu0 %v2200
        %2308 = vmatpush1.msra.mxu0 %v2199
        %2309 = vmatprep.subr.mxu0 %v2204
        %2310 = vmatpush1.msra.mxu0 %v2203
        %2311 = vmatprep.subr.mxu0 %v2208
        %2312 = vmatpush1.msra.mxu0 %v2207
        %2313 = vmatprep.subr.mxu0 %v2212
        %2314 = vmatpush1.msra.mxu0 %v2211
        %2315 = vmatprep.subr.mxu0 %v2216
        %2316 = vmatpush1.msra.mxu0 %v2215
        %2317 = vmatprep.subr.mxu0 %v2220
        %2318 = vmatpush1.msra.mxu0 %v2219
        %2319 = vmatprep.subr.mxu0 %v2224
        %2320 = vmatpush1.msra.mxu0 %v2223
        %2321 = vmatprep.subr.mxu0 %v2228
        %2322 = vmatpush1.msra.mxu0 %v2227
        %2323 = vmatprep.subr.mxu0 %v2232
        %2324 = vmatpush1.msra.mxu0 %v2231
        %2325 = vmatprep.subr.mxu0 %v2236
        %2326 = vmatpush1.msra.mxu0 %v2235
        %2327 = vmatprep.subr.mxu0 %v2240
        %2328 = vmatpush1.msra.mxu0 %v2239
        %2329 = vmatprep.subr.mxu0 %v2244
        %2330 = vmatpush1.msra.mxu0 %v2243
        %2331 = vmatprep.subr.mxu0 %v2248
        %2332 = vmatpush1.msra.mxu0 %v2247
        %2333 = vmatprep.subr.mxu0 %v2252
        %2334 = vmatpush1.msra.mxu0 %v2251
        %2335 = vmatprep.subr.mxu0 %v2256
        %2336 = vmatpush1.msra.mxu0 %v2255
        %2337 = vmatprep.subr.mxu0 %v2260
        %2338 = vmatpush1.msra.mxu0 %v2259
        %2339 = vmatprep.subr.mxu0 %v2264
        %2340 = vmatpush1.msra.mxu0 %v2263
        %2341 = vmatprep.subr.mxu0 %v2268
        %2342 = vmatpush1.msra.mxu0 %v2267
        %2343 = vmatprep.subr.mxu0 %v2272
        %2344 = vmatpush1.msra.mxu0 %v2271
        %2345 = vmatprep.subr.mxu0 %v2276
        %2346 = vmatpush1.msra.mxu0 %v2275
        %2347 = vmatprep.subr.mxu0 %v2280
        %2348 = vmatpush1.msra.mxu0 %v2279
        %2349 = vmatprep.subr.mxu0 %v2284
        %2350 = vmatpush1.msra.mxu0 %v2283
        %2351 = vmatprep.mubr.f32.mxu0 %v2156
        %2352 = vmatmul.mubr.f32.gmra.mrb[0].mxu0 %v2155
        %v2353 = vpop.f32.mrb[0].mxu0
        %v2354 = vadd.f32 %v1707, %v2353
        %v2355 = vpop.f32.mrb[0].mxu0
        %v2356 = vadd.f32 %v1709, %v2355
        %2357 = vmatprep.mubr.f32.mxu0 %v2158
        %2358 = vmatmul.mubr.f32.gmra.mrb[0].mxu0 %v2157
        %v2359 = vpop.f32.mrb[0].mxu0
        %v2360 = vadd.f32 %v1713, %v2359
        %v2361 = vpop.f32.mrb[0].mxu0
        %v2362 = vadd.f32 %v1715, %v2361
        %2363 = vdwg.mxu0
        %2364 = vmatprep.subr.mxu0 %v2162
        %2365 = vmatpush1.msra.mxu0 %v2161
        %2366 = vmatprep.subr.mxu0 %v2166
        %2367 = vmatpush1.msra.mxu0 %v2165
        %2368 = vmatprep.subr.mxu0 %v2170
        %2369 = vmatpush1.msra.mxu0 %v2169
        %2370 = vmatprep.subr.mxu0 %v2174
        %2371 = vmatpush1.msra.mxu0 %v2173
        %2372 = vmatprep.subr.mxu0 %v2178
        %2373 = vmatpush1.msra.mxu0 %v2177
        %2374 = vmatprep.subr.mxu0 %v2182
        %2375 = vmatpush1.msra.mxu0 %v2181
        %2376 = vmatprep.subr.mxu0 %v2186
        %2377 = vmatpush1.msra.mxu0 %v2185
        %2378 = vmatprep.subr.mxu0 %v2190
        %2379 = vmatpush1.msra.mxu0 %v2189
        %2380 = vmatprep.subr.mxu0 %v2194
        %2381 = vmatpush1.msra.mxu0 %v2193
        %2382 = vmatprep.subr.mxu0 %v2198
        %2383 = vmatpush1.msra.mxu0 %v2197
        %2384 = vmatprep.subr.mxu0 %v2202
        %2385 = vmatpush1.msra.mxu0 %v2201
        %2386 = vmatprep.subr.mxu0 %v2206
        %2387 = vmatpush1.msra.mxu0 %v2205
        %2388 = vmatprep.subr.mxu0 %v2210
        %2389 = vmatpush1.msra.mxu0 %v2209
        %2390 = vmatprep.subr.mxu0 %v2214
        %2391 = vmatpush1.msra.mxu0 %v2213
        %2392 = vmatprep.subr.mxu0 %v2218
        %2393 = vmatpush1.msra.mxu0 %v2217
        %2394 = vmatprep.subr.mxu0 %v2222
        %2395 = vmatpush1.msra.mxu0 %v2221
        %2396 = vmatprep.subr.mxu0 %v2226
        %2397 = vmatpush1.msra.mxu0 %v2225
        %2398 = vmatprep.subr.mxu0 %v2230
        %2399 = vmatpush1.msra.mxu0 %v2229
        %2400 = vmatprep.subr.mxu0 %v2234
        %2401 = vmatpush1.msra.mxu0 %v2233
        %2402 = vmatprep.subr.mxu0 %v2238
        %2403 = vmatpush1.msra.mxu0 %v2237
        %2404 = vmatprep.subr.mxu0 %v2242
        %2405 = vmatpush1.msra.mxu0 %v2241
        %2406 = vmatprep.subr.mxu0 %v2246
        %2407 = vmatpush1.msra.mxu0 %v2245
        %2408 = vmatprep.subr.mxu0 %v2250
        %2409 = vmatpush1.msra.mxu0 %v2249
        %2410 = vmatprep.subr.mxu0 %v2254
        %2411 = vmatpush1.msra.mxu0 %v2253
        %2412 = vmatprep.subr.mxu0 %v2258
        %2413 = vmatpush1.msra.mxu0 %v2257
        %2414 = vmatprep.subr.mxu0 %v2262
        %2415 = vmatpush1.msra.mxu0 %v2261
        %2416 = vmatprep.subr.mxu0 %v2266
        %2417 = vmatpush1.msra.mxu0 %v2265
        %2418 = vmatprep.subr.mxu0 %v2270
        %2419 = vmatpush1.msra.mxu0 %v2269
        %2420 = vmatprep.subr.mxu0 %v2274
        %2421 = vmatpush1.msra.mxu0 %v2273
        %2422 = vmatprep.subr.mxu0 %v2278
        %2423 = vmatpush1.msra.mxu0 %v2277
        %2424 = vmatprep.subr.mxu0 %v2282
        %2425 = vmatpush1.msra.mxu0 %v2281
        %2426 = vmatprep.subr.mxu0 %v2286
        %2427 = vmatpush1.msra.mxu0 %v2285
        %2428 = vmatprep.mubr.f32.mxu0 %v2156
        %2429 = vmatmul.mubr.f32.gmra.mrb[0].mxu0 %v2155
        %v2430 = vpop.f32.mrb[0].mxu0
        %v2431 = vadd.f32 %v1784, %v2430
        %v2432 = vpop.f32.mrb[0].mxu0
        %v2433 = vadd.f32 %v1786, %v2432
        %2434 = vmatprep.mubr.f32.mxu0 %v2158
        %2435 = vmatmul.mubr.f32.gmra.mrb[0].mxu0 %v2157
        %v2436 = vpop.f32.mrb[0].mxu0
        %v2437 = vadd.f32 %v1790, %v2436
        %v2438 = vpop.f32.mrb[0].mxu0
        %v2439 = vadd.f32 %v1792, %v2438
        %2440 = vdwg.mxu0
        %v2441 = vxor.u32 %v2354, 2147483648
        %v2442 = vxor.u32 %v2356, 2147483648
        %v2443 = vxor.u32 %v2431, 2147483648
        %v2444 = vxor.u32 %v2360, 2147483648
        %v2445 = vxor.u32 %v2362, 2147483648
        %v2446 = vxor.u32 %v2437, 2147483648
        %v2447 = vmul.f32 %v2441, 1.442695
        %v2448 = vpow.pop %v2447
        %v2449 = vmul.f32 %v2442, 1.442695
        %v2450 = vpow.pop %v2449
        %v2451 = vmul.f32 %v2443, 1.442695
        %v2452 = vpow.pop %v2451
        %v2453 = vmul.f32 %v2444, 1.442695
        %v2454 = vpow.pop %v2453
        %v2455 = vmul.f32 %v2445, 1.442695
        %v2456 = vpow.pop %v2455
        %v2457 = vmul.f32 %v2446, 1.442695
        %v2458 = vpow.pop %v2457
        %v2459 = vadd.f32 %v2448, 1.0
        %v2460 = vadd.f32 %v2450, 1.0
        %v2461 = vadd.f32 %v2452, 1.0
        %v2462 = vadd.f32 %v2454, 1.0
        %v2463 = vadd.f32 %v2456, 1.0
        %v2464 = vadd.f32 %v2458, 1.0
        %v2465 = vrcp.pop %v2459
        %v2466 = vmul.f32 1.0, %v2465
        %v2467 = vrcp.pop %v2460
        %v2468 = vmul.f32 1.0, %v2467
        %v2469 = vrcp.pop %v2461
        %v2470 = vmul.f32 1.0, %v2469
        %v2471 = vrcp.pop %v2462
        %v2472 = vmul.f32 1.0, %v2471
        %v2473 = vrcp.pop %v2463
        %v2474 = vmul.f32 1.0, %v2473
        %v2475 = vrcp.pop %v2464
        %v2476 = vmul.f32 1.0, %v2475
        %v2477 = vtanh.pop %v2433
        %v2478 = vtanh.pop %v2439
        %v2479 = vld [vmem:[#allocation6] sm:$0xff]
        %v2480 = vld [vmem:[#allocation6 + $0x8] sm:$0xff]
        %v2481 = vmul.f32 %v2468, %v2479
        %v2482 = vmul.f32 %v2474, %v2480
        %v2483 = vmul.f32 %v2466, %v2477
        %v2484 = vmul.f32 %v2472, %v2478
        %v2485 = vadd.f32 %v2481, %v2483
        %v2486 = vadd.f32 %v2482, %v2484
        %v2487 = vtanh.pop %v2485
        %v2488 = vtanh.pop %v2486
        %v2489 = vmul.f32 %v2470, %v2487
        %v2490 = vmul.f32 %v2476, %v2488
        %v2491 = vtanh.pop %v2489
        %v2492 = vtanh.pop %v2490
        %v2493 = vmul.f32 %v2136, %v2491
        %v2494 = vmul.f32 %v2142, %v2492
        %s2495 = scalar_lea.vmem %s571, 16
        %2496 = vst [vmem:[%s2495] sm:$0xff] %v2493
        %2497 = vst [vmem:[%s2495 + $0x8] sm:$0xff] %v2494
        %2498 = vst [vmem:[#allocation2 + $0x8] sm:$0xff] %v2493
        %2499 = vst [vmem:[#allocation2 + $0x18] sm:$0xff] %v2494
        %2500 = vst [vmem:[#allocation4] sm:$0xff] %v2489
        %2501 = vst [vmem:[#allocation4 + $0x8] sm:$0xff] %v2490
        %2502 = vst [vmem:[#allocation5] sm:$0xff] %v2489
        %2503 = vst [vmem:[#allocation5 + $0x8] sm:$0xff] %v2490
        %2504 = vst [vmem:[#allocation6] sm:$0xff] %v2485
        %2505 = vst [vmem:[#allocation6 + $0x8] sm:$0xff] %v2486
        %p2506 = scmp.eq.s32.totalorder %s30, 1
        // Predicated region
        $region77: #{_nested_lstm_sequence_jit.1} parent=59 // pred_check
          %p2507 = pneg %p2506
        $region78: #{_nested_lstm_sequence_jit.1} parent=59 // pred_check_branch
          %2509 = sbr.rel (%p2507) target = $region80
        $region79: #{_nested_lstm_sequence_jit.1} parent=59 // pred_region
          %2510 = vst [vmem:[%s578] sm:$0xff] %v2493
          %2511 = vst [vmem:[%s578 + $0x8] sm:$0xff] %v2494
          %s2512 = scalar_lea.vmem %s578, 16
          %2513 = vst [vmem:[%s2512] sm:$0xff] %v2489
          %2514 = vst [vmem:[%s2512 + $0x8] sm:$0xff] %v2490
          %s2515 = scalar_lea.vmem %s578, 32
          %2516 = vst [vmem:[%s2515] sm:$0xff] %v2489
          %2517 = vst [vmem:[%s2515 + $0x8] sm:$0xff] %v2490
          %s2518 = scalar_lea.vmem %s578, 48
          %2519 = vst [vmem:[%s2518] sm:$0xff] %v2485
          %2520 = vst [vmem:[%s2518 + $0x8] sm:$0xff] %v2486
        $region80: #{_nested_lstm_sequence_jit.1} parent=59 // pred_fallthru
          _
        %p2521 = scmp.lt.s32.totalorder %s30, 1
        // Predicated region
        $region81: #{_nested_lstm_sequence_jit.1} parent=59 // pred_check
          %p2522 = pneg %p2521
        $region82: #{_nested_lstm_sequence_jit.1} parent=59 // pred_check_branch
          %2524 = sbr.rel (%p2522) target = $region84
        $region83: #{_nested_lstm_sequence_jit.1} parent=59 // pred_region
          %v2525 = vld [vmem:[#allocation4] sm:$0xff]
          %v2526 = vld [vmem:[#allocation4 + $0x8] sm:$0xff]
          %v2527 = vld [vmem:[#allocation11] sm:$0xff]
          %v2528 = vld [vmem:[#allocation11 + $0x8] sm:$0xff]
          %v2529 = vld [vmem:[#allocation11 + $0x10] sm:$0xff]
          %v2530 = vld [vmem:[#allocation11 + $0x18] sm:$0xff]
          %v2531 = vld [vmem:[#allocation11 + $0x20] sm:$0xff]
          %v2532 = vld [vmem:[#allocation11 + $0x28] sm:$0xff]
          %v2533 = vld [vmem:[#allocation11 + $0x30] sm:$0xff]
          %v2534 = vld [vmem:[#allocation11 + $0x38] sm:$0xff]
          %v2535 = vld [vmem:[#allocation11 + $0x40] sm:$0xff]
          %v2536 = vld [vmem:[#allocation11 + $0x48] sm:$0xff]
          %v2537 = vld [vmem:[#allocation11 + $0x50] sm:$0xff]
          %v2538 = vld [vmem:[#allocation11 + $0x58] sm:$0xff]
          %v2539 = vld [vmem:[#allocation11 + $0x60] sm:$0xff]
          %v2540 = vld [vmem:[#allocation11 + $0x68] sm:$0xff]
          %v2541 = vld [vmem:[#allocation11 + $0x70] sm:$0xff]
          %v2542 = vld [vmem:[#allocation11 + $0x78] sm:$0xff]
          %v2543 = vld [vmem:[#allocation11 + $0x80] sm:$0xff]
          %v2544 = vld [vmem:[#allocation11 + $0x88] sm:$0xff]
          %v2545 = vld [vmem:[#allocation11 + $0x90] sm:$0xff]
          %v2546 = vld [vmem:[#allocation11 + $0x98] sm:$0xff]
          %v2547 = vld [vmem:[#allocation11 + $0xa0] sm:$0xff]
          %v2548 = vld [vmem:[#allocation11 + $0xa8] sm:$0xff]
          %v2549 = vld [vmem:[#allocation11 + $0xb0] sm:$0xff]
          %v2550 = vld [vmem:[#allocation11 + $0xb8] sm:$0xff]
          %v2551 = vld [vmem:[#allocation11 + $0xc0] sm:$0xff]
          %v2552 = vld [vmem:[#allocation11 + $0xc8] sm:$0xff]
          %v2553 = vld [vmem:[#allocation11 + $0xd0] sm:$0xff]
          %v2554 = vld [vmem:[#allocation11 + $0xd8] sm:$0xff]
          %v2555 = vld [vmem:[#allocation11 + $0xe0] sm:$0xff]
          %v2556 = vld [vmem:[#allocation11 + $0xe8] sm:$0xff]
          %v2557 = vld [vmem:[#allocation11 + $0xf0] sm:$0xff]
          %v2558 = vld [vmem:[#allocation11 + $0xf8] sm:$0xff]
          %v2559 = vld [vmem:[#allocation11 + $0x100] sm:$0xff]
          %v2560 = vld [vmem:[#allocation11 + $0x108] sm:$0xff]
          %v2561 = vld [vmem:[#allocation11 + $0x110] sm:$0xff]
          %v2562 = vld [vmem:[#allocation11 + $0x118] sm:$0xff]
          %v2563 = vld [vmem:[#allocation11 + $0x120] sm:$0xff]
          %v2564 = vld [vmem:[#allocation11 + $0x128] sm:$0xff]
          %v2565 = vld [vmem:[#allocation11 + $0x130] sm:$0xff]
          %v2566 = vld [vmem:[#allocation11 + $0x138] sm:$0xff]
          %v2567 = vld [vmem:[#allocation11 + $0x140] sm:$0xff]
          %v2568 = vld [vmem:[#allocation11 + $0x148] sm:$0xff]
          %v2569 = vld [vmem:[#allocation11 + $0x150] sm:$0xff]
          %v2570 = vld [vmem:[#allocation11 + $0x158] sm:$0xff]
          %v2571 = vld [vmem:[#allocation11 + $0x160] sm:$0xff]
          %v2572 = vld [vmem:[#allocation11 + $0x168] sm:$0xff]
          %v2573 = vld [vmem:[#allocation11 + $0x170] sm:$0xff]
          %v2574 = vld [vmem:[#allocation11 + $0x178] sm:$0xff]
          %v2575 = vld [vmem:[#allocation11 + $0x180] sm:$0xff]
          %v2576 = vld [vmem:[#allocation11 + $0x188] sm:$0xff]
          %v2577 = vld [vmem:[#allocation11 + $0x190] sm:$0xff]
          %v2578 = vld [vmem:[#allocation11 + $0x198] sm:$0xff]
          %v2579 = vld [vmem:[#allocation11 + $0x1a0] sm:$0xff]
          %v2580 = vld [vmem:[#allocation11 + $0x1a8] sm:$0xff]
          %v2581 = vld [vmem:[#allocation11 + $0x1b0] sm:$0xff]
          %v2582 = vld [vmem:[#allocation11 + $0x1b8] sm:$0xff]
          %v2583 = vld [vmem:[#allocation11 + $0x1c0] sm:$0xff]
          %v2584 = vld [vmem:[#allocation11 + $0x1c8] sm:$0xff]
          %v2585 = vld [vmem:[#allocation11 + $0x1d0] sm:$0xff]
          %v2586 = vld [vmem:[#allocation11 + $0x1d8] sm:$0xff]
          %v2587 = vld [vmem:[#allocation11 + $0x1e0] sm:$0xff]
          %v2588 = vld [vmem:[#allocation11 + $0x1e8] sm:$0xff]
          %v2589 = vld [vmem:[#allocation11 + $0x1f0] sm:$0xff]
          %v2590 = vld [vmem:[#allocation11 + $0x1f8] sm:$0xff]
          %v2591 = vld [vmem:[%s9] sm:$0xf]
          %v2593 = vlaneseq
          %v2594 = vshrl.u32 %v2593, 7
          %v2595 = vsub.s32 0, %v2594
          %v2596 = vrot.slane %v2591, %v2595
          %v2597 = vlaneseq
          %v2598 = vshrl.u32 %v2597, 7
          %v2599 = vsub.s32 1, %v2598
          %v2600 = vrot.slane %v2591, %v2599
          %v2601 = vlaneseq
          %v2602 = vshrl.u32 %v2601, 7
          %v2603 = vsub.s32 2, %v2602
          %v2604 = vrot.slane %v2591, %v2603
          %v2605 = vlaneseq
          %v2606 = vshrl.u32 %v2605, 7
          %v2607 = vsub.s32 3, %v2606
          %v2608 = vrot.slane %v2591, %v2607
          %2613 = vmatprep.subr.mxu0 %v2528
          %2614 = vmatpush1.msra.mxu0 %v2527
          %2615 = vmatprep.subr.mxu0 %v2532
          %2616 = vmatpush1.msra.mxu0 %v2531
          %2617 = vmatprep.subr.mxu0 %v2536
          %2618 = vmatpush1.msra.mxu0 %v2535
          %2619 = vmatprep.subr.mxu0 %v2540
          %2620 = vmatpush1.msra.mxu0 %v2539
          %2621 = vmatprep.subr.mxu0 %v2544
          %2622 = vmatpush1.msra.mxu0 %v2543
          %2623 = vmatprep.subr.mxu0 %v2548
          %2624 = vmatpush1.msra.mxu0 %v2547
          %2625 = vmatprep.subr.mxu0 %v2552
          %2626 = vmatpush1.msra.mxu0 %v2551
          %2627 = vmatprep.subr.mxu0 %v2556
          %2628 = vmatpush1.msra.mxu0 %v2555
          %2629 = vmatprep.subr.mxu0 %v2560
          %2630 = vmatpush1.msra.mxu0 %v2559
          %2631 = vmatprep.subr.mxu0 %v2564
          %2632 = vmatpush1.msra.mxu0 %v2563
          %2633 = vmatprep.subr.mxu0 %v2568
          %2634 = vmatpush1.msra.mxu0 %v2567
          %2635 = vmatprep.subr.mxu0 %v2572
          %2636 = vmatpush1.msra.mxu0 %v2571
          %2637 = vmatprep.subr.mxu0 %v2576
          %2638 = vmatpush1.msra.mxu0 %v2575
          %2639 = vmatprep.subr.mxu0 %v2580
          %2640 = vmatpush1.msra.mxu0 %v2579
          %2641 = vmatprep.subr.mxu0 %v2584
          %2642 = vmatpush1.msra.mxu0 %v2583
          %2643 = vmatprep.subr.mxu0 %v2588
          %2644 = vmatpush1.msra.mxu0 %v2587
          %2645 = vmatprep.subr.mxu0 0.0
          %2646 = vmatpush1.msra.mxu0 0.0
          %2647 = vmatprep.subr.mxu0 0.0
          %2648 = vmatpush1.msra.mxu0 0.0
          %2649 = vmatprep.subr.mxu0 0.0
          %2650 = vmatpush1.msra.mxu0 0.0
          %2651 = vmatprep.subr.mxu0 0.0
          %2652 = vmatpush1.msra.mxu0 0.0
          %2653 = vmatprep.subr.mxu0 0.0
          %2654 = vmatpush1.msra.mxu0 0.0
          %2655 = vmatprep.subr.mxu0 0.0
          %2656 = vmatpush1.msra.mxu0 0.0
          %2657 = vmatprep.subr.mxu0 0.0
          %2658 = vmatpush1.msra.mxu0 0.0
          %2659 = vmatprep.subr.mxu0 0.0
          %2660 = vmatpush1.msra.mxu0 0.0
          %2661 = vmatprep.subr.mxu0 0.0
          %2662 = vmatpush1.msra.mxu0 0.0
          %2663 = vmatprep.subr.mxu0 0.0
          %2664 = vmatpush1.msra.mxu0 0.0
          %2665 = vmatprep.subr.mxu0 0.0
          %2666 = vmatpush1.msra.mxu0 0.0
          %2667 = vmatprep.subr.mxu0 0.0
          %2668 = vmatpush1.msra.mxu0 0.0
          %2669 = vmatprep.subr.mxu0 0.0
          %2670 = vmatpush1.msra.mxu0 0.0
          %2671 = vmatprep.subr.mxu0 0.0
          %2672 = vmatpush1.msra.mxu0 0.0
          %2673 = vmatprep.subr.mxu0 0.0
          %2674 = vmatpush1.msra.mxu0 0.0
          %2675 = vmatprep.subr.mxu0 0.0
          %2676 = vmatpush1.msra.mxu0 0.0
          %2677 = vmatprep.mubr.f32.mxu0 0.0
          %2678 = vmatmul.mubr.f32.gmra.mrb[0].mxu0 %v2525
          %v2679 = vpop.f32.mrb[0].mxu0
          %v2680 = vadd.f32 %v2596, %v2679
          %v2681 = vpop.f32.mrb[0].mxu0
          %v2682 = vadd.f32 %v2600, %v2681
          %2683 = vmatprep.mubr.f32.mxu0 0.0
          %2684 = vmatmul.mubr.f32.gmra.mrb[0].mxu0 %v2526
          %v2685 = vpop.f32.mrb[0].mxu0
          %v2686 = vadd.f32 %v2596, %v2685
          %v2687 = vpop.f32.mrb[0].mxu0
          %v2688 = vadd.f32 %v2600, %v2687
          %2689 = vdwg.mxu0
          %2690 = vmatprep.subr.mxu0 %v2530
          %2691 = vmatpush1.msra.mxu0 %v2529
          %2692 = vmatprep.subr.mxu0 %v2534
          %2693 = vmatpush1.msra.mxu0 %v2533
          %2694 = vmatprep.subr.mxu0 %v2538
          %2695 = vmatpush1.msra.mxu0 %v2537
          %2696 = vmatprep.subr.mxu0 %v2542
          %2697 = vmatpush1.msra.mxu0 %v2541
          %2698 = vmatprep.subr.mxu0 %v2546
          %2699 = vmatpush1.msra.mxu0 %v2545
          %2700 = vmatprep.subr.mxu0 %v2550
          %2701 = vmatpush1.msra.mxu0 %v2549
          %2702 = vmatprep.subr.mxu0 %v2554
          %2703 = vmatpush1.msra.mxu0 %v2553
          %2704 = vmatprep.subr.mxu0 %v2558
          %2705 = vmatpush1.msra.mxu0 %v2557
          %2706 = vmatprep.subr.mxu0 %v2562
          %2707 = vmatpush1.msra.mxu0 %v2561
          %2708 = vmatprep.subr.mxu0 %v2566
          %2709 = vmatpush1.msra.mxu0 %v2565
          %2710 = vmatprep.subr.mxu0 %v2570
          %2711 = vmatpush1.msra.mxu0 %v2569
          %2712 = vmatprep.subr.mxu0 %v2574
          %2713 = vmatpush1.msra.mxu0 %v2573
          %2714 = vmatprep.subr.mxu0 %v2578
          %2715 = vmatpush1.msra.mxu0 %v2577
          %2716 = vmatprep.subr.mxu0 %v2582
          %2717 = vmatpush1.msra.mxu0 %v2581
          %2718 = vmatprep.subr.mxu0 %v2586
          %2719 = vmatpush1.msra.mxu0 %v2585
          %2720 = vmatprep.subr.mxu0 %v2590
          %2721 = vmatpush1.msra.mxu0 %v2589
          %2722 = vmatprep.subr.mxu0 0.0
          %2723 = vmatpush1.msra.mxu0 0.0
          %2724 = vmatprep.subr.mxu0 0.0
          %2725 = vmatpush1.msra.mxu0 0.0
          %2726 = vmatprep.subr.mxu0 0.0
          %2727 = vmatpush1.msra.mxu0 0.0
          %2728 = vmatprep.subr.mxu0 0.0
          %2729 = vmatpush1.msra.mxu0 0.0
          %2730 = vmatprep.subr.mxu0 0.0
          %2731 = vmatpush1.msra.mxu0 0.0
          %2732 = vmatprep.subr.mxu0 0.0
          %2733 = vmatpush1.msra.mxu0 0.0
          %2734 = vmatprep.subr.mxu0 0.0
          %2735 = vmatpush1.msra.mxu0 0.0
          %2736 = vmatprep.subr.mxu0 0.0
          %2737 = vmatpush1.msra.mxu0 0.0
          %2738 = vmatprep.subr.mxu0 0.0
          %2739 = vmatpush1.msra.mxu0 0.0
          %2740 = vmatprep.subr.mxu0 0.0
          %2741 = vmatpush1.msra.mxu0 0.0
          %2742 = vmatprep.subr.mxu0 0.0
          %2743 = vmatpush1.msra.mxu0 0.0
          %2744 = vmatprep.subr.mxu0 0.0
          %2745 = vmatpush1.msra.mxu0 0.0
          %2746 = vmatprep.subr.mxu0 0.0
          %2747 = vmatpush1.msra.mxu0 0.0
          %2748 = vmatprep.subr.mxu0 0.0
          %2749 = vmatpush1.msra.mxu0 0.0
          %2750 = vmatprep.subr.mxu0 0.0
          %2751 = vmatpush1.msra.mxu0 0.0
          %2752 = vmatprep.subr.mxu0 0.0
          %2753 = vmatpush1.msra.mxu0 0.0
          %2754 = vmatprep.mubr.f32.mxu0 0.0
          %2755 = vmatmul.mubr.f32.gmra.mrb[0].mxu0 %v2525
          %v2756 = vpop.f32.mrb[0].mxu0
          %v2757 = vadd.f32 %v2604, %v2756
          %v2758 = vpop.f32.mrb[0].mxu0
          %v2759 = vadd.f32 %v2608, %v2758
          %2760 = vmatprep.mubr.f32.mxu0 0.0
          %2761 = vmatmul.mubr.f32.gmra.mrb[0].mxu0 %v2526
          %v2762 = vpop.f32.mrb[0].mxu0
          %v2763 = vadd.f32 %v2604, %v2762
          %v2764 = vpop.f32.mrb[0].mxu0
          %v2765 = vadd.f32 %v2608, %v2764
          %2766 = vdwg.mxu0
          %s2767 = scalar_lea.vmem %s535, 32
          %v2768 = vld [vmem:[%s2767] sm:$0xff]
          %v2769 = vld [vmem:[%s2767 + $0x8] sm:$0xff]
          %2770 = vst [vmem:[#allocation2] sm:$0xff] %v2768
          %2771 = vst [vmem:[#allocation2 + $0x10] sm:$0xff] %v2769
          %v2772 = vld [vmem:[#allocation2] sm:$0xff]
          %v2773 = vld [vmem:[#allocation2 + $0x8] sm:$0xff]
          %v2774 = vld [vmem:[#allocation2 + $0x10] sm:$0xff]
          %v2775 = vld [vmem:[#allocation2 + $0x18] sm:$0xff]
          %v2776 = vld [vmem:[#allocation7] sm:$0xff]
          %v2777 = vld [vmem:[#allocation7 + $0x8] sm:$0xff]
          %v2778 = vld [vmem:[#allocation7 + $0x10] sm:$0xff]
          %v2779 = vld [vmem:[#allocation7 + $0x18] sm:$0xff]
          %v2780 = vld [vmem:[#allocation7 + $0x20] sm:$0xff]
          %v2781 = vld [vmem:[#allocation7 + $0x28] sm:$0xff]
          %v2782 = vld [vmem:[#allocation7 + $0x30] sm:$0xff]
          %v2783 = vld [vmem:[#allocation7 + $0x38] sm:$0xff]
          %v2784 = vld [vmem:[#allocation7 + $0x40] sm:$0xff]
          %v2785 = vld [vmem:[#allocation7 + $0x48] sm:$0xff]
          %v2786 = vld [vmem:[#allocation7 + $0x50] sm:$0xff]
          %v2787 = vld [vmem:[#allocation7 + $0x58] sm:$0xff]
          %v2788 = vld [vmem:[#allocation7 + $0x60] sm:$0xff]
          %v2789 = vld [vmem:[#allocation7 + $0x68] sm:$0xff]
          %v2790 = vld [vmem:[#allocation7 + $0x70] sm:$0xff]
          %v2791 = vld [vmem:[#allocation7 + $0x78] sm:$0xff]
          %v2792 = vld [vmem:[#allocation7 + $0x80] sm:$0xff]
          %v2793 = vld [vmem:[#allocation7 + $0x88] sm:$0xff]
          %v2794 = vld [vmem:[#allocation7 + $0x90] sm:$0xff]
          %v2795 = vld [vmem:[#allocation7 + $0x98] sm:$0xff]
          %v2796 = vld [vmem:[#allocation7 + $0xa0] sm:$0xff]
          %v2797 = vld [vmem:[#allocation7 + $0xa8] sm:$0xff]
          %v2798 = vld [vmem:[#allocation7 + $0xb0] sm:$0xff]
          %v2799 = vld [vmem:[#allocation7 + $0xb8] sm:$0xff]
          %v2800 = vld [vmem:[#allocation7 + $0xc0] sm:$0xff]
          %v2801 = vld [vmem:[#allocation7 + $0xc8] sm:$0xff]
          %v2802 = vld [vmem:[#allocation7 + $0xd0] sm:$0xff]
          %v2803 = vld [vmem:[#allocation7 + $0xd8] sm:$0xff]
          %v2804 = vld [vmem:[#allocation7 + $0xe0] sm:$0xff]
          %v2805 = vld [vmem:[#allocation7 + $0xe8] sm:$0xff]
          %v2806 = vld [vmem:[#allocation7 + $0xf0] sm:$0xff]
          %v2807 = vld [vmem:[#allocation7 + $0xf8] sm:$0xff]
          %v2808 = vld [vmem:[#allocation7 + $0x100] sm:$0xff]
          %v2809 = vld [vmem:[#allocation7 + $0x108] sm:$0xff]
          %v2810 = vld [vmem:[#allocation7 + $0x110] sm:$0xff]
          %v2811 = vld [vmem:[#allocation7 + $0x118] sm:$0xff]
          %v2812 = vld [vmem:[#allocation7 + $0x120] sm:$0xff]
          %v2813 = vld [vmem:[#allocation7 + $0x128] sm:$0xff]
          %v2814 = vld [vmem:[#allocation7 + $0x130] sm:$0xff]
          %v2815 = vld [vmem:[#allocation7 + $0x138] sm:$0xff]
          %v2816 = vld [vmem:[#allocation7 + $0x140] sm:$0xff]
          %v2817 = vld [vmem:[#allocation7 + $0x148] sm:$0xff]
          %v2818 = vld [vmem:[#allocation7 + $0x150] sm:$0xff]
          %v2819 = vld [vmem:[#allocation7 + $0x158] sm:$0xff]
          %v2820 = vld [vmem:[#allocation7 + $0x160] sm:$0xff]
          %v2821 = vld [vmem:[#allocation7 + $0x168] sm:$0xff]
          %v2822 = vld [vmem:[#allocation7 + $0x170] sm:$0xff]
          %v2823 = vld [vmem:[#allocation7 + $0x178] sm:$0xff]
          %v2824 = vld [vmem:[#allocation7 + $0x180] sm:$0xff]
          %v2825 = vld [vmem:[#allocation7 + $0x188] sm:$0xff]
          %v2826 = vld [vmem:[#allocation7 + $0x190] sm:$0xff]
          %v2827 = vld [vmem:[#allocation7 + $0x198] sm:$0xff]
          %v2828 = vld [vmem:[#allocation7 + $0x1a0] sm:$0xff]
          %v2829 = vld [vmem:[#allocation7 + $0x1a8] sm:$0xff]
          %v2830 = vld [vmem:[#allocation7 + $0x1b0] sm:$0xff]
          %v2831 = vld [vmem:[#allocation7 + $0x1b8] sm:$0xff]
          %v2832 = vld [vmem:[#allocation7 + $0x1c0] sm:$0xff]
          %v2833 = vld [vmem:[#allocation7 + $0x1c8] sm:$0xff]
          %v2834 = vld [vmem:[#allocation7 + $0x1d0] sm:$0xff]
          %v2835 = vld [vmem:[#allocation7 + $0x1d8] sm:$0xff]
          %v2836 = vld [vmem:[#allocation7 + $0x1e0] sm:$0xff]
          %v2837 = vld [vmem:[#allocation7 + $0x1e8] sm:$0xff]
          %v2838 = vld [vmem:[#allocation7 + $0x1f0] sm:$0xff]
          %v2839 = vld [vmem:[#allocation7 + $0x1f8] sm:$0xff]
          %v2840 = vld [vmem:[#allocation7 + $0x200] sm:$0xff]
          %v2841 = vld [vmem:[#allocation7 + $0x208] sm:$0xff]
          %v2842 = vld [vmem:[#allocation7 + $0x210] sm:$0xff]
          %v2843 = vld [vmem:[#allocation7 + $0x218] sm:$0xff]
          %v2844 = vld [vmem:[#allocation7 + $0x220] sm:$0xff]
          %v2845 = vld [vmem:[#allocation7 + $0x228] sm:$0xff]
          %v2846 = vld [vmem:[#allocation7 + $0x230] sm:$0xff]
          %v2847 = vld [vmem:[#allocation7 + $0x238] sm:$0xff]
          %v2848 = vld [vmem:[#allocation7 + $0x240] sm:$0xff]
          %v2849 = vld [vmem:[#allocation7 + $0x248] sm:$0xff]
          %v2850 = vld [vmem:[#allocation7 + $0x250] sm:$0xff]
          %v2851 = vld [vmem:[#allocation7 + $0x258] sm:$0xff]
          %v2852 = vld [vmem:[#allocation7 + $0x260] sm:$0xff]
          %v2853 = vld [vmem:[#allocation7 + $0x268] sm:$0xff]
          %v2854 = vld [vmem:[#allocation7 + $0x270] sm:$0xff]
          %v2855 = vld [vmem:[#allocation7 + $0x278] sm:$0xff]
          %v2856 = vld [vmem:[#allocation7 + $0x280] sm:$0xff]
          %v2857 = vld [vmem:[#allocation7 + $0x288] sm:$0xff]
          %v2858 = vld [vmem:[#allocation7 + $0x290] sm:$0xff]
          %v2859 = vld [vmem:[#allocation7 + $0x298] sm:$0xff]
          %v2860 = vld [vmem:[#allocation7 + $0x2a0] sm:$0xff]
          %v2861 = vld [vmem:[#allocation7 + $0x2a8] sm:$0xff]
          %v2862 = vld [vmem:[#allocation7 + $0x2b0] sm:$0xff]
          %v2863 = vld [vmem:[#allocation7 + $0x2b8] sm:$0xff]
          %v2864 = vld [vmem:[#allocation7 + $0x2c0] sm:$0xff]
          %v2865 = vld [vmem:[#allocation7 + $0x2c8] sm:$0xff]
          %v2866 = vld [vmem:[#allocation7 + $0x2d0] sm:$0xff]
          %v2867 = vld [vmem:[#allocation7 + $0x2d8] sm:$0xff]
          %v2868 = vld [vmem:[#allocation7 + $0x2e0] sm:$0xff]
          %v2869 = vld [vmem:[#allocation7 + $0x2e8] sm:$0xff]
          %v2870 = vld [vmem:[#allocation7 + $0x2f0] sm:$0xff]
          %v2871 = vld [vmem:[#allocation7 + $0x2f8] sm:$0xff]
          %v2872 = vld [vmem:[#allocation7 + $0x300] sm:$0xff]
          %v2873 = vld [vmem:[#allocation7 + $0x308] sm:$0xff]
          %v2874 = vld [vmem:[#allocation7 + $0x310] sm:$0xff]
          %v2875 = vld [vmem:[#allocation7 + $0x318] sm:$0xff]
          %v2876 = vld [vmem:[#allocation7 + $0x320] sm:$0xff]
          %v2877 = vld [vmem:[#allocation7 + $0x328] sm:$0xff]
          %v2878 = vld [vmem:[#allocation7 + $0x330] sm:$0xff]
          %v2879 = vld [vmem:[#allocation7 + $0x338] sm:$0xff]
          %v2880 = vld [vmem:[#allocation7 + $0x340] sm:$0xff]
          %v2881 = vld [vmem:[#allocation7 + $0x348] sm:$0xff]
          %v2882 = vld [vmem:[#allocation7 + $0x350] sm:$0xff]
          %v2883 = vld [vmem:[#allocation7 + $0x358] sm:$0xff]
          %v2884 = vld [vmem:[#allocation7 + $0x360] sm:$0xff]
          %v2885 = vld [vmem:[#allocation7 + $0x368] sm:$0xff]
          %v2886 = vld [vmem:[#allocation7 + $0x370] sm:$0xff]
          %v2887 = vld [vmem:[#allocation7 + $0x378] sm:$0xff]
          %v2888 = vld [vmem:[#allocation7 + $0x380] sm:$0xff]
          %v2889 = vld [vmem:[#allocation7 + $0x388] sm:$0xff]
          %v2890 = vld [vmem:[#allocation7 + $0x390] sm:$0xff]
          %v2891 = vld [vmem:[#allocation7 + $0x398] sm:$0xff]
          %v2892 = vld [vmem:[#allocation7 + $0x3a0] sm:$0xff]
          %v2893 = vld [vmem:[#allocation7 + $0x3a8] sm:$0xff]
          %v2894 = vld [vmem:[#allocation7 + $0x3b0] sm:$0xff]
          %v2895 = vld [vmem:[#allocation7 + $0x3b8] sm:$0xff]
          %v2896 = vld [vmem:[#allocation7 + $0x3c0] sm:$0xff]
          %v2897 = vld [vmem:[#allocation7 + $0x3c8] sm:$0xff]
          %v2898 = vld [vmem:[#allocation7 + $0x3d0] sm:$0xff]
          %v2899 = vld [vmem:[#allocation7 + $0x3d8] sm:$0xff]
          %v2900 = vld [vmem:[#allocation7 + $0x3e0] sm:$0xff]
          %v2901 = vld [vmem:[#allocation7 + $0x3e8] sm:$0xff]
          %v2902 = vld [vmem:[#allocation7 + $0x3f0] sm:$0xff]
          %v2903 = vld [vmem:[#allocation7 + $0x3f8] sm:$0xff]
          %v2904 = vld [vmem:[%s6] sm:$0xf]
          %v2906 = vlaneseq
          %v2907 = vshrl.u32 %v2906, 7
          %v2908 = vsub.s32 0, %v2907
          %v2909 = vrot.slane %v2904, %v2908
          %v2910 = vlaneseq
          %v2911 = vshrl.u32 %v2910, 7
          %v2912 = vsub.s32 1, %v2911
          %v2913 = vrot.slane %v2904, %v2912
          %v2914 = vlaneseq
          %v2915 = vshrl.u32 %v2914, 7
          %v2916 = vsub.s32 2, %v2915
          %v2917 = vrot.slane %v2904, %v2916
          %v2918 = vlaneseq
          %v2919 = vshrl.u32 %v2918, 7
          %v2920 = vsub.s32 3, %v2919
          %v2921 = vrot.slane %v2904, %v2920
          %2926 = vmatprep.subr.mxu0 %v2777
          %2927 = vmatpush1.msra.mxu0 %v2776
          %2928 = vmatprep.subr.mxu0 %v2781
          %2929 = vmatpush1.msra.mxu0 %v2780
          %2930 = vmatprep.subr.mxu0 %v2785
          %2931 = vmatpush1.msra.mxu0 %v2784
          %2932 = vmatprep.subr.mxu0 %v2789
          %2933 = vmatpush1.msra.mxu0 %v2788
          %2934 = vmatprep.subr.mxu0 %v2793
          %2935 = vmatpush1.msra.mxu0 %v2792
          %2936 = vmatprep.subr.mxu0 %v2797
          %2937 = vmatpush1.msra.mxu0 %v2796
          %2938 = vmatprep.subr.mxu0 %v2801
          %2939 = vmatpush1.msra.mxu0 %v2800
          %2940 = vmatprep.subr.mxu0 %v2805
          %2941 = vmatpush1.msra.mxu0 %v2804
          %2942 = vmatprep.subr.mxu0 %v2809
          %2943 = vmatpush1.msra.mxu0 %v2808
          %2944 = vmatprep.subr.mxu0 %v2813
          %2945 = vmatpush1.msra.mxu0 %v2812
          %2946 = vmatprep.subr.mxu0 %v2817
          %2947 = vmatpush1.msra.mxu0 %v2816
          %2948 = vmatprep.subr.mxu0 %v2821
          %2949 = vmatpush1.msra.mxu0 %v2820
          %2950 = vmatprep.subr.mxu0 %v2825
          %2951 = vmatpush1.msra.mxu0 %v2824
          %2952 = vmatprep.subr.mxu0 %v2829
          %2953 = vmatpush1.msra.mxu0 %v2828
          %2954 = vmatprep.subr.mxu0 %v2833
          %2955 = vmatpush1.msra.mxu0 %v2832
          %2956 = vmatprep.subr.mxu0 %v2837
          %2957 = vmatpush1.msra.mxu0 %v2836
          %2958 = vmatprep.subr.mxu0 %v2841
          %2959 = vmatpush1.msra.mxu0 %v2840
          %2960 = vmatprep.subr.mxu0 %v2845
          %2961 = vmatpush1.msra.mxu0 %v2844
          %2962 = vmatprep.subr.mxu0 %v2849
          %2963 = vmatpush1.msra.mxu0 %v2848
          %2964 = vmatprep.subr.mxu0 %v2853
          %2965 = vmatpush1.msra.mxu0 %v2852
          %2966 = vmatprep.subr.mxu0 %v2857
          %2967 = vmatpush1.msra.mxu0 %v2856
          %2968 = vmatprep.subr.mxu0 %v2861
          %2969 = vmatpush1.msra.mxu0 %v2860
          %2970 = vmatprep.subr.mxu0 %v2865
          %2971 = vmatpush1.msra.mxu0 %v2864
          %2972 = vmatprep.subr.mxu0 %v2869
          %2973 = vmatpush1.msra.mxu0 %v2868
          %2974 = vmatprep.subr.mxu0 %v2873
          %2975 = vmatpush1.msra.mxu0 %v2872
          %2976 = vmatprep.subr.mxu0 %v2877
          %2977 = vmatpush1.msra.mxu0 %v2876
          %2978 = vmatprep.subr.mxu0 %v2881
          %2979 = vmatpush1.msra.mxu0 %v2880
          %2980 = vmatprep.subr.mxu0 %v2885
          %2981 = vmatpush1.msra.mxu0 %v2884
          %2982 = vmatprep.subr.mxu0 %v2889
          %2983 = vmatpush1.msra.mxu0 %v2888
          %2984 = vmatprep.subr.mxu0 %v2893
          %2985 = vmatpush1.msra.mxu0 %v2892
          %2986 = vmatprep.subr.mxu0 %v2897
          %2987 = vmatpush1.msra.mxu0 %v2896
          %2988 = vmatprep.subr.mxu0 %v2901
          %2989 = vmatpush1.msra.mxu0 %v2900
          %2990 = vmatprep.mubr.f32.mxu0 %v2773
          %2991 = vmatmul.mubr.f32.gmra.mrb[0].mxu0 %v2772
          %v2992 = vpop.f32.mrb[0].mxu0
          %v2993 = vadd.f32 %v2909, %v2992
          %v2994 = vpop.f32.mrb[0].mxu0
          %v2995 = vadd.f32 %v2913, %v2994
          %2996 = vmatprep.mubr.f32.mxu0 %v2775
          %2997 = vmatmul.mubr.f32.gmra.mrb[0].mxu0 %v2774
          %v2998 = vpop.f32.mrb[0].mxu0
          %v2999 = vadd.f32 %v2909, %v2998
          %v3000 = vpop.f32.mrb[0].mxu0
          %v3001 = vadd.f32 %v2913, %v3000
          %3002 = vdwg.mxu0
          %3003 = vmatprep.subr.mxu0 %v2779
          %3004 = vmatpush1.msra.mxu0 %v2778
          %3005 = vmatprep.subr.mxu0 %v2783
          %3006 = vmatpush1.msra.mxu0 %v2782
          %3007 = vmatprep.subr.mxu0 %v2787
          %3008 = vmatpush1.msra.mxu0 %v2786
          %3009 = vmatprep.subr.mxu0 %v2791
          %3010 = vmatpush1.msra.mxu0 %v2790
          %3011 = vmatprep.subr.mxu0 %v2795
          %3012 = vmatpush1.msra.mxu0 %v2794
          %3013 = vmatprep.subr.mxu0 %v2799
          %3014 = vmatpush1.msra.mxu0 %v2798
          %3015 = vmatprep.subr.mxu0 %v2803
          %3016 = vmatpush1.msra.mxu0 %v2802
          %3017 = vmatprep.subr.mxu0 %v2807
          %3018 = vmatpush1.msra.mxu0 %v2806
          %3019 = vmatprep.subr.mxu0 %v2811
          %3020 = vmatpush1.msra.mxu0 %v2810
          %3021 = vmatprep.subr.mxu0 %v2815
          %3022 = vmatpush1.msra.mxu0 %v2814
          %3023 = vmatprep.subr.mxu0 %v2819
          %3024 = vmatpush1.msra.mxu0 %v2818
          %3025 = vmatprep.subr.mxu0 %v2823
          %3026 = vmatpush1.msra.mxu0 %v2822
          %3027 = vmatprep.subr.mxu0 %v2827
          %3028 = vmatpush1.msra.mxu0 %v2826
          %3029 = vmatprep.subr.mxu0 %v2831
          %3030 = vmatpush1.msra.mxu0 %v2830
          %3031 = vmatprep.subr.mxu0 %v2835
          %3032 = vmatpush1.msra.mxu0 %v2834
          %3033 = vmatprep.subr.mxu0 %v2839
          %3034 = vmatpush1.msra.mxu0 %v2838
          %3035 = vmatprep.subr.mxu0 %v2843
          %3036 = vmatpush1.msra.mxu0 %v2842
          %3037 = vmatprep.subr.mxu0 %v2847
          %3038 = vmatpush1.msra.mxu0 %v2846
          %3039 = vmatprep.subr.mxu0 %v2851
          %3040 = vmatpush1.msra.mxu0 %v2850
          %3041 = vmatprep.subr.mxu0 %v2855
          %3042 = vmatpush1.msra.mxu0 %v2854
          %3043 = vmatprep.subr.mxu0 %v2859
          %3044 = vmatpush1.msra.mxu0 %v2858
          %3045 = vmatprep.subr.mxu0 %v2863
          %3046 = vmatpush1.msra.mxu0 %v2862
          %3047 = vmatprep.subr.mxu0 %v2867
          %3048 = vmatpush1.msra.mxu0 %v2866
          %3049 = vmatprep.subr.mxu0 %v2871
          %3050 = vmatpush1.msra.mxu0 %v2870
          %3051 = vmatprep.subr.mxu0 %v2875
          %3052 = vmatpush1.msra.mxu0 %v2874
          %3053 = vmatprep.subr.mxu0 %v2879
          %3054 = vmatpush1.msra.mxu0 %v2878
          %3055 = vmatprep.subr.mxu0 %v2883
          %3056 = vmatpush1.msra.mxu0 %v2882
          %3057 = vmatprep.subr.mxu0 %v2887
          %3058 = vmatpush1.msra.mxu0 %v2886
          %3059 = vmatprep.subr.mxu0 %v2891
          %3060 = vmatpush1.msra.mxu0 %v2890
          %3061 = vmatprep.subr.mxu0 %v2895
          %3062 = vmatpush1.msra.mxu0 %v2894
          %3063 = vmatprep.subr.mxu0 %v2899
          %3064 = vmatpush1.msra.mxu0 %v2898
          %3065 = vmatprep.subr.mxu0 %v2903
          %3066 = vmatpush1.msra.mxu0 %v2902
          %3067 = vmatprep.mubr.f32.mxu0 %v2773
          %3068 = vmatmul.mubr.f32.gmra.mrb[0].mxu0 %v2772
          %v3069 = vpop.f32.mrb[0].mxu0
          %v3070 = vadd.f32 %v2917, %v3069
          %v3071 = vpop.f32.mrb[0].mxu0
          %v3072 = vadd.f32 %v2921, %v3071
          %3073 = vmatprep.mubr.f32.mxu0 %v2775
          %3074 = vmatmul.mubr.f32.gmra.mrb[0].mxu0 %v2774
          %v3075 = vpop.f32.mrb[0].mxu0
          %v3076 = vadd.f32 %v2917, %v3075
          %v3077 = vpop.f32.mrb[0].mxu0
          %v3078 = vadd.f32 %v2921, %v3077
          %3079 = vdwg.mxu0
          %v3080 = vxor.u32 %v2993, 2147483648
          %v3081 = vxor.u32 %v2995, 2147483648
          %v3082 = vxor.u32 %v3070, 2147483648
          %v3083 = vxor.u32 %v2999, 2147483648
          %v3084 = vxor.u32 %v3001, 2147483648
          %v3085 = vxor.u32 %v3076, 2147483648
          %v3086 = vmul.f32 %v3080, 1.442695
          %v3087 = vpow.pop %v3086
          %v3088 = vmul.f32 %v3081, 1.442695
          %v3089 = vpow.pop %v3088
          %v3090 = vmul.f32 %v3082, 1.442695
          %v3091 = vpow.pop %v3090
          %v3092 = vmul.f32 %v3083, 1.442695
          %v3093 = vpow.pop %v3092
          %v3094 = vmul.f32 %v3084, 1.442695
          %v3095 = vpow.pop %v3094
          %v3096 = vmul.f32 %v3085, 1.442695
          %v3097 = vpow.pop %v3096
          %v3098 = vadd.f32 %v3087, 1.0
          %v3099 = vadd.f32 %v3089, 1.0
          %v3100 = vadd.f32 %v3091, 1.0
          %v3101 = vadd.f32 %v3093, 1.0
          %v3102 = vadd.f32 %v3095, 1.0
          %v3103 = vadd.f32 %v3097, 1.0
          %v3104 = vrcp.pop %v3098
          %v3105 = vmul.f32 1.0, %v3104
          %v3106 = vrcp.pop %v3099
          %v3107 = vmul.f32 1.0, %v3106
          %v3108 = vrcp.pop %v3100
          %v3109 = vmul.f32 1.0, %v3108
          %v3110 = vrcp.pop %v3101
          %v3111 = vmul.f32 1.0, %v3110
          %v3112 = vrcp.pop %v3102
          %v3113 = vmul.f32 1.0, %v3112
          %v3114 = vrcp.pop %v3103
          %v3115 = vmul.f32 1.0, %v3114
          %v3116 = vtanh.pop %v3072
          %v3117 = vtanh.pop %v3078
          %v3118 = vld [vmem:[#allocation5] sm:$0xff]
          %v3119 = vld [vmem:[#allocation5 + $0x8] sm:$0xff]
          %v3120 = vmul.f32 %v3107, %v3118
          %v3121 = vmul.f32 %v3113, %v3119
          %3122 = vst [vmem:[#allocation3] sm:$0xff] %v3120
          %3123 = vst [vmem:[#allocation3 + $0x10] sm:$0xff] %v3121
          %v3124 = vmul.f32 %v3105, %v3116
          %v3125 = vmul.f32 %v3111, %v3117
          %3126 = vst [vmem:[#allocation3 + $0x8] sm:$0xff] %v3124
          %3127 = vst [vmem:[#allocation3 + $0x18] sm:$0xff] %v3125
          %v3128 = vld [vmem:[#allocation3] sm:$0xff]
          %v3129 = vld [vmem:[#allocation3 + $0x8] sm:$0xff]
          %v3130 = vld [vmem:[#allocation3 + $0x10] sm:$0xff]
          %v3131 = vld [vmem:[#allocation3 + $0x18] sm:$0xff]
          %v3132 = vld [vmem:[#allocation9] sm:$0xff]
          %v3133 = vld [vmem:[#allocation9 + $0x8] sm:$0xff]
          %v3134 = vld [vmem:[#allocation9 + $0x10] sm:$0xff]
          %v3135 = vld [vmem:[#allocation9 + $0x18] sm:$0xff]
          %v3136 = vld [vmem:[#allocation9 + $0x20] sm:$0xff]
          %v3137 = vld [vmem:[#allocation9 + $0x28] sm:$0xff]
          %v3138 = vld [vmem:[#allocation9 + $0x30] sm:$0xff]
          %v3139 = vld [vmem:[#allocation9 + $0x38] sm:$0xff]
          %v3140 = vld [vmem:[#allocation9 + $0x40] sm:$0xff]
          %v3141 = vld [vmem:[#allocation9 + $0x48] sm:$0xff]
          %v3142 = vld [vmem:[#allocation9 + $0x50] sm:$0xff]
          %v3143 = vld [vmem:[#allocation9 + $0x58] sm:$0xff]
          %v3144 = vld [vmem:[#allocation9 + $0x60] sm:$0xff]
          %v3145 = vld [vmem:[#allocation9 + $0x68] sm:$0xff]
          %v3146 = vld [vmem:[#allocation9 + $0x70] sm:$0xff]
          %v3147 = vld [vmem:[#allocation9 + $0x78] sm:$0xff]
          %v3148 = vld [vmem:[#allocation9 + $0x80] sm:$0xff]
          %v3149 = vld [vmem:[#allocation9 + $0x88] sm:$0xff]
          %v3150 = vld [vmem:[#allocation9 + $0x90] sm:$0xff]
          %v3151 = vld [vmem:[#allocation9 + $0x98] sm:$0xff]
          %v3152 = vld [vmem:[#allocation9 + $0xa0] sm:$0xff]
          %v3153 = vld [vmem:[#allocation9 + $0xa8] sm:$0xff]
          %v3154 = vld [vmem:[#allocation9 + $0xb0] sm:$0xff]
          %v3155 = vld [vmem:[#allocation9 + $0xb8] sm:$0xff]
          %v3156 = vld [vmem:[#allocation9 + $0xc0] sm:$0xff]
          %v3157 = vld [vmem:[#allocation9 + $0xc8] sm:$0xff]
          %v3158 = vld [vmem:[#allocation9 + $0xd0] sm:$0xff]
          %v3159 = vld [vmem:[#allocation9 + $0xd8] sm:$0xff]
          %v3160 = vld [vmem:[#allocation9 + $0xe0] sm:$0xff]
          %v3161 = vld [vmem:[#allocation9 + $0xe8] sm:$0xff]
          %v3162 = vld [vmem:[#allocation9 + $0xf0] sm:$0xff]
          %v3163 = vld [vmem:[#allocation9 + $0xf8] sm:$0xff]
          %v3164 = vld [vmem:[#allocation9 + $0x100] sm:$0xff]
          %v3165 = vld [vmem:[#allocation9 + $0x108] sm:$0xff]
          %v3166 = vld [vmem:[#allocation9 + $0x110] sm:$0xff]
          %v3167 = vld [vmem:[#allocation9 + $0x118] sm:$0xff]
          %v3168 = vld [vmem:[#allocation9 + $0x120] sm:$0xff]
          %v3169 = vld [vmem:[#allocation9 + $0x128] sm:$0xff]
          %v3170 = vld [vmem:[#allocation9 + $0x130] sm:$0xff]
          %v3171 = vld [vmem:[#allocation9 + $0x138] sm:$0xff]
          %v3172 = vld [vmem:[#allocation9 + $0x140] sm:$0xff]
          %v3173 = vld [vmem:[#allocation9 + $0x148] sm:$0xff]
          %v3174 = vld [vmem:[#allocation9 + $0x150] sm:$0xff]
          %v3175 = vld [vmem:[#allocation9 + $0x158] sm:$0xff]
          %v3176 = vld [vmem:[#allocation9 + $0x160] sm:$0xff]
          %v3177 = vld [vmem:[#allocation9 + $0x168] sm:$0xff]
          %v3178 = vld [vmem:[#allocation9 + $0x170] sm:$0xff]
          %v3179 = vld [vmem:[#allocation9 + $0x178] sm:$0xff]
          %v3180 = vld [vmem:[#allocation9 + $0x180] sm:$0xff]
          %v3181 = vld [vmem:[#allocation9 + $0x188] sm:$0xff]
          %v3182 = vld [vmem:[#allocation9 + $0x190] sm:$0xff]
          %v3183 = vld [vmem:[#allocation9 + $0x198] sm:$0xff]
          %v3184 = vld [vmem:[#allocation9 + $0x1a0] sm:$0xff]
          %v3185 = vld [vmem:[#allocation9 + $0x1a8] sm:$0xff]
          %v3186 = vld [vmem:[#allocation9 + $0x1b0] sm:$0xff]
          %v3187 = vld [vmem:[#allocation9 + $0x1b8] sm:$0xff]
          %v3188 = vld [vmem:[#allocation9 + $0x1c0] sm:$0xff]
          %v3189 = vld [vmem:[#allocation9 + $0x1c8] sm:$0xff]
          %v3190 = vld [vmem:[#allocation9 + $0x1d0] sm:$0xff]
          %v3191 = vld [vmem:[#allocation9 + $0x1d8] sm:$0xff]
          %v3192 = vld [vmem:[#allocation9 + $0x1e0] sm:$0xff]
          %v3193 = vld [vmem:[#allocation9 + $0x1e8] sm:$0xff]
          %v3194 = vld [vmem:[#allocation9 + $0x1f0] sm:$0xff]
          %v3195 = vld [vmem:[#allocation9 + $0x1f8] sm:$0xff]
          %v3196 = vld [vmem:[#allocation9 + $0x200] sm:$0xff]
          %v3197 = vld [vmem:[#allocation9 + $0x208] sm:$0xff]
          %v3198 = vld [vmem:[#allocation9 + $0x210] sm:$0xff]
          %v3199 = vld [vmem:[#allocation9 + $0x218] sm:$0xff]
          %v3200 = vld [vmem:[#allocation9 + $0x220] sm:$0xff]
          %v3201 = vld [vmem:[#allocation9 + $0x228] sm:$0xff]
          %v3202 = vld [vmem:[#allocation9 + $0x230] sm:$0xff]
          %v3203 = vld [vmem:[#allocation9 + $0x238] sm:$0xff]
          %v3204 = vld [vmem:[#allocation9 + $0x240] sm:$0xff]
          %v3205 = vld [vmem:[#allocation9 + $0x248] sm:$0xff]
          %v3206 = vld [vmem:[#allocation9 + $0x250] sm:$0xff]
          %v3207 = vld [vmem:[#allocation9 + $0x258] sm:$0xff]
          %v3208 = vld [vmem:[#allocation9 + $0x260] sm:$0xff]
          %v3209 = vld [vmem:[#allocation9 + $0x268] sm:$0xff]
          %v3210 = vld [vmem:[#allocation9 + $0x270] sm:$0xff]
          %v3211 = vld [vmem:[#allocation9 + $0x278] sm:$0xff]
          %v3212 = vld [vmem:[#allocation9 + $0x280] sm:$0xff]
          %v3213 = vld [vmem:[#allocation9 + $0x288] sm:$0xff]
          %v3214 = vld [vmem:[#allocation9 + $0x290] sm:$0xff]
          %v3215 = vld [vmem:[#allocation9 + $0x298] sm:$0xff]
          %v3216 = vld [vmem:[#allocation9 + $0x2a0] sm:$0xff]
          %v3217 = vld [vmem:[#allocation9 + $0x2a8] sm:$0xff]
          %v3218 = vld [vmem:[#allocation9 + $0x2b0] sm:$0xff]
          %v3219 = vld [vmem:[#allocation9 + $0x2b8] sm:$0xff]
          %v3220 = vld [vmem:[#allocation9 + $0x2c0] sm:$0xff]
          %v3221 = vld [vmem:[#allocation9 + $0x2c8] sm:$0xff]
          %v3222 = vld [vmem:[#allocation9 + $0x2d0] sm:$0xff]
          %v3223 = vld [vmem:[#allocation9 + $0x2d8] sm:$0xff]
          %v3224 = vld [vmem:[#allocation9 + $0x2e0] sm:$0xff]
          %v3225 = vld [vmem:[#allocation9 + $0x2e8] sm:$0xff]
          %v3226 = vld [vmem:[#allocation9 + $0x2f0] sm:$0xff]
          %v3227 = vld [vmem:[#allocation9 + $0x2f8] sm:$0xff]
          %v3228 = vld [vmem:[#allocation9 + $0x300] sm:$0xff]
          %v3229 = vld [vmem:[#allocation9 + $0x308] sm:$0xff]
          %v3230 = vld [vmem:[#allocation9 + $0x310] sm:$0xff]
          %v3231 = vld [vmem:[#allocation9 + $0x318] sm:$0xff]
          %v3232 = vld [vmem:[#allocation9 + $0x320] sm:$0xff]
          %v3233 = vld [vmem:[#allocation9 + $0x328] sm:$0xff]
          %v3234 = vld [vmem:[#allocation9 + $0x330] sm:$0xff]
          %v3235 = vld [vmem:[#allocation9 + $0x338] sm:$0xff]
          %v3236 = vld [vmem:[#allocation9 + $0x340] sm:$0xff]
          %v3237 = vld [vmem:[#allocation9 + $0x348] sm:$0xff]
          %v3238 = vld [vmem:[#allocation9 + $0x350] sm:$0xff]
          %v3239 = vld [vmem:[#allocation9 + $0x358] sm:$0xff]
          %v3240 = vld [vmem:[#allocation9 + $0x360] sm:$0xff]
          %v3241 = vld [vmem:[#allocation9 + $0x368] sm:$0xff]
          %v3242 = vld [vmem:[#allocation9 + $0x370] sm:$0xff]
          %v3243 = vld [vmem:[#allocation9 + $0x378] sm:$0xff]
          %v3244 = vld [vmem:[#allocation9 + $0x380] sm:$0xff]
          %v3245 = vld [vmem:[#allocation9 + $0x388] sm:$0xff]
          %v3246 = vld [vmem:[#allocation9 + $0x390] sm:$0xff]
          %v3247 = vld [vmem:[#allocation9 + $0x398] sm:$0xff]
          %v3248 = vld [vmem:[#allocation9 + $0x3a0] sm:$0xff]
          %v3249 = vld [vmem:[#allocation9 + $0x3a8] sm:$0xff]
          %v3250 = vld [vmem:[#allocation9 + $0x3b0] sm:$0xff]
          %v3251 = vld [vmem:[#allocation9 + $0x3b8] sm:$0xff]
          %v3252 = vld [vmem:[#allocation9 + $0x3c0] sm:$0xff]
          %v3253 = vld [vmem:[#allocation9 + $0x3c8] sm:$0xff]
          %v3254 = vld [vmem:[#allocation9 + $0x3d0] sm:$0xff]
          %v3255 = vld [vmem:[#allocation9 + $0x3d8] sm:$0xff]
          %v3256 = vld [vmem:[#allocation9 + $0x3e0] sm:$0xff]
          %v3257 = vld [vmem:[#allocation9 + $0x3e8] sm:$0xff]
          %v3258 = vld [vmem:[#allocation9 + $0x3f0] sm:$0xff]
          %v3259 = vld [vmem:[#allocation9 + $0x3f8] sm:$0xff]
          %3260 = vmatprep.subr.mxu0 %v3133
          %3261 = vmatpush1.msra.mxu0 %v3132
          %3262 = vmatprep.subr.mxu0 %v3137
          %3263 = vmatpush1.msra.mxu0 %v3136
          %3264 = vmatprep.subr.mxu0 %v3141
          %3265 = vmatpush1.msra.mxu0 %v3140
          %3266 = vmatprep.subr.mxu0 %v3145
          %3267 = vmatpush1.msra.mxu0 %v3144
          %3268 = vmatprep.subr.mxu0 %v3149
          %3269 = vmatpush1.msra.mxu0 %v3148
          %3270 = vmatprep.subr.mxu0 %v3153
          %3271 = vmatpush1.msra.mxu0 %v3152
          %3272 = vmatprep.subr.mxu0 %v3157
          %3273 = vmatpush1.msra.mxu0 %v3156
          %3274 = vmatprep.subr.mxu0 %v3161
          %3275 = vmatpush1.msra.mxu0 %v3160
          %3276 = vmatprep.subr.mxu0 %v3165
          %3277 = vmatpush1.msra.mxu0 %v3164
          %3278 = vmatprep.subr.mxu0 %v3169
          %3279 = vmatpush1.msra.mxu0 %v3168
          %3280 = vmatprep.subr.mxu0 %v3173
          %3281 = vmatpush1.msra.mxu0 %v3172
          %3282 = vmatprep.subr.mxu0 %v3177
          %3283 = vmatpush1.msra.mxu0 %v3176
          %3284 = vmatprep.subr.mxu0 %v3181
          %3285 = vmatpush1.msra.mxu0 %v3180
          %3286 = vmatprep.subr.mxu0 %v3185
          %3287 = vmatpush1.msra.mxu0 %v3184
          %3288 = vmatprep.subr.mxu0 %v3189
          %3289 = vmatpush1.msra.mxu0 %v3188
          %3290 = vmatprep.subr.mxu0 %v3193
          %3291 = vmatpush1.msra.mxu0 %v3192
          %3292 = vmatprep.subr.mxu0 %v3197
          %3293 = vmatpush1.msra.mxu0 %v3196
          %3294 = vmatprep.subr.mxu0 %v3201
          %3295 = vmatpush1.msra.mxu0 %v3200
          %3296 = vmatprep.subr.mxu0 %v3205
          %3297 = vmatpush1.msra.mxu0 %v3204
          %3298 = vmatprep.subr.mxu0 %v3209
          %3299 = vmatpush1.msra.mxu0 %v3208
          %3300 = vmatprep.subr.mxu0 %v3213
          %3301 = vmatpush1.msra.mxu0 %v3212
          %3302 = vmatprep.subr.mxu0 %v3217
          %3303 = vmatpush1.msra.mxu0 %v3216
          %3304 = vmatprep.subr.mxu0 %v3221
          %3305 = vmatpush1.msra.mxu0 %v3220
          %3306 = vmatprep.subr.mxu0 %v3225
          %3307 = vmatpush1.msra.mxu0 %v3224
          %3308 = vmatprep.subr.mxu0 %v3229
          %3309 = vmatpush1.msra.mxu0 %v3228
          %3310 = vmatprep.subr.mxu0 %v3233
          %3311 = vmatpush1.msra.mxu0 %v3232
          %3312 = vmatprep.subr.mxu0 %v3237
          %3313 = vmatpush1.msra.mxu0 %v3236
          %3314 = vmatprep.subr.mxu0 %v3241
          %3315 = vmatpush1.msra.mxu0 %v3240
          %3316 = vmatprep.subr.mxu0 %v3245
          %3317 = vmatpush1.msra.mxu0 %v3244
          %3318 = vmatprep.subr.mxu0 %v3249
          %3319 = vmatpush1.msra.mxu0 %v3248
          %3320 = vmatprep.subr.mxu0 %v3253
          %3321 = vmatpush1.msra.mxu0 %v3252
          %3322 = vmatprep.subr.mxu0 %v3257
          %3323 = vmatpush1.msra.mxu0 %v3256
          %3324 = vmatprep.mubr.f32.mxu0 %v3129
          %3325 = vmatmul.mubr.f32.gmra.mrb[0].mxu0 %v3128
          %v3326 = vpop.f32.mrb[0].mxu0
          %v3327 = vadd.f32 %v2680, %v3326
          %v3328 = vpop.f32.mrb[0].mxu0
          %v3329 = vadd.f32 %v2682, %v3328
          %3330 = vmatprep.mubr.f32.mxu0 %v3131
          %3331 = vmatmul.mubr.f32.gmra.mrb[0].mxu0 %v3130
          %v3332 = vpop.f32.mrb[0].mxu0
          %v3333 = vadd.f32 %v2686, %v3332
          %v3334 = vpop.f32.mrb[0].mxu0
          %v3335 = vadd.f32 %v2688, %v3334
          %3336 = vdwg.mxu0
          %3337 = vmatprep.subr.mxu0 %v3135
          %3338 = vmatpush1.msra.mxu0 %v3134
          %3339 = vmatprep.subr.mxu0 %v3139
          %3340 = vmatpush1.msra.mxu0 %v3138
          %3341 = vmatprep.subr.mxu0 %v3143
          %3342 = vmatpush1.msra.mxu0 %v3142
          %3343 = vmatprep.subr.mxu0 %v3147
          %3344 = vmatpush1.msra.mxu0 %v3146
          %3345 = vmatprep.subr.mxu0 %v3151
          %3346 = vmatpush1.msra.mxu0 %v3150
          %3347 = vmatprep.subr.mxu0 %v3155
          %3348 = vmatpush1.msra.mxu0 %v3154
          %3349 = vmatprep.subr.mxu0 %v3159
          %3350 = vmatpush1.msra.mxu0 %v3158
          %3351 = vmatprep.subr.mxu0 %v3163
          %3352 = vmatpush1.msra.mxu0 %v3162
          %3353 = vmatprep.subr.mxu0 %v3167
          %3354 = vmatpush1.msra.mxu0 %v3166
          %3355 = vmatprep.subr.mxu0 %v3171
          %3356 = vmatpush1.msra.mxu0 %v3170
          %3357 = vmatprep.subr.mxu0 %v3175
          %3358 = vmatpush1.msra.mxu0 %v3174
          %3359 = vmatprep.subr.mxu0 %v3179
          %3360 = vmatpush1.msra.mxu0 %v3178
          %3361 = vmatprep.subr.mxu0 %v3183
          %3362 = vmatpush1.msra.mxu0 %v3182
          %3363 = vmatprep.subr.mxu0 %v3187
          %3364 = vmatpush1.msra.mxu0 %v3186
          %3365 = vmatprep.subr.mxu0 %v3191
          %3366 = vmatpush1.msra.mxu0 %v3190
          %3367 = vmatprep.subr.mxu0 %v3195
          %3368 = vmatpush1.msra.mxu0 %v3194
          %3369 = vmatprep.subr.mxu0 %v3199
          %3370 = vmatpush1.msra.mxu0 %v3198
          %3371 = vmatprep.subr.mxu0 %v3203
          %3372 = vmatpush1.msra.mxu0 %v3202
          %3373 = vmatprep.subr.mxu0 %v3207
          %3374 = vmatpush1.msra.mxu0 %v3206
          %3375 = vmatprep.subr.mxu0 %v3211
          %3376 = vmatpush1.msra.mxu0 %v3210
          %3377 = vmatprep.subr.mxu0 %v3215
          %3378 = vmatpush1.msra.mxu0 %v3214
          %3379 = vmatprep.subr.mxu0 %v3219
          %3380 = vmatpush1.msra.mxu0 %v3218
          %3381 = vmatprep.subr.mxu0 %v3223
          %3382 = vmatpush1.msra.mxu0 %v3222
          %3383 = vmatprep.subr.mxu0 %v3227
          %3384 = vmatpush1.msra.mxu0 %v3226
          %3385 = vmatprep.subr.mxu0 %v3231
          %3386 = vmatpush1.msra.mxu0 %v3230
          %3387 = vmatprep.subr.mxu0 %v3235
          %3388 = vmatpush1.msra.mxu0 %v3234
          %3389 = vmatprep.subr.mxu0 %v3239
          %3390 = vmatpush1.msra.mxu0 %v3238
          %3391 = vmatprep.subr.mxu0 %v3243
          %3392 = vmatpush1.msra.mxu0 %v3242
          %3393 = vmatprep.subr.mxu0 %v3247
          %3394 = vmatpush1.msra.mxu0 %v3246
          %3395 = vmatprep.subr.mxu0 %v3251
          %3396 = vmatpush1.msra.mxu0 %v3250
          %3397 = vmatprep.subr.mxu0 %v3255
          %3398 = vmatpush1.msra.mxu0 %v3254
          %3399 = vmatprep.subr.mxu0 %v3259
          %3400 = vmatpush1.msra.mxu0 %v3258
          %3401 = vmatprep.mubr.f32.mxu0 %v3129
          %3402 = vmatmul.mubr.f32.gmra.mrb[0].mxu0 %v3128
          %v3403 = vpop.f32.mrb[0].mxu0
          %v3404 = vadd.f32 %v2757, %v3403
          %v3405 = vpop.f32.mrb[0].mxu0
          %v3406 = vadd.f32 %v2759, %v3405
          %3407 = vmatprep.mubr.f32.mxu0 %v3131
          %3408 = vmatmul.mubr.f32.gmra.mrb[0].mxu0 %v3130
          %v3409 = vpop.f32.mrb[0].mxu0
          %v3410 = vadd.f32 %v2763, %v3409
          %v3411 = vpop.f32.mrb[0].mxu0
          %v3412 = vadd.f32 %v2765, %v3411
          %3413 = vdwg.mxu0
          %v3414 = vxor.u32 %v3327, 2147483648
          %v3415 = vxor.u32 %v3329, 2147483648
          %v3416 = vxor.u32 %v3404, 2147483648
          %v3417 = vxor.u32 %v3333, 2147483648
          %v3418 = vxor.u32 %v3335, 2147483648
          %v3419 = vxor.u32 %v3410, 2147483648
          %v3420 = vmul.f32 %v3414, 1.442695
          %v3421 = vpow.pop %v3420
          %v3422 = vmul.f32 %v3415, 1.442695
          %v3423 = vpow.pop %v3422
          %v3424 = vmul.f32 %v3416, 1.442695
          %v3425 = vpow.pop %v3424
          %v3426 = vmul.f32 %v3417, 1.442695
          %v3427 = vpow.pop %v3426
          %v3428 = vmul.f32 %v3418, 1.442695
          %v3429 = vpow.pop %v3428
          %v3430 = vmul.f32 %v3419, 1.442695
          %v3431 = vpow.pop %v3430
          %v3432 = vadd.f32 %v3421, 1.0
          %v3433 = vadd.f32 %v3423, 1.0
          %v3434 = vadd.f32 %v3425, 1.0
          %v3435 = vadd.f32 %v3427, 1.0
          %v3436 = vadd.f32 %v3429, 1.0
          %v3437 = vadd.f32 %v3431, 1.0
          %v3438 = vrcp.pop %v3432
          %v3439 = vmul.f32 1.0, %v3438
          %v3440 = vrcp.pop %v3433
          %v3441 = vmul.f32 1.0, %v3440
          %v3442 = vrcp.pop %v3434
          %v3443 = vmul.f32 1.0, %v3442
          %v3444 = vrcp.pop %v3435
          %v3445 = vmul.f32 1.0, %v3444
          %v3446 = vrcp.pop %v3436
          %v3447 = vmul.f32 1.0, %v3446
          %v3448 = vrcp.pop %v3437
          %v3449 = vmul.f32 1.0, %v3448
          %v3450 = vtanh.pop %v3406
          %v3451 = vtanh.pop %v3412
          %v3452 = vld [vmem:[#allocation6] sm:$0xff]
          %v3453 = vld [vmem:[#allocation6 + $0x8] sm:$0xff]
          %v3454 = vmul.f32 %v3441, %v3452
          %v3455 = vmul.f32 %v3447, %v3453
          %v3456 = vmul.f32 %v3439, %v3450
          %v3457 = vmul.f32 %v3445, %v3451
          %v3458 = vadd.f32 %v3454, %v3456
          %v3459 = vadd.f32 %v3455, %v3457
          %v3460 = vtanh.pop %v3458
          %v3461 = vtanh.pop %v3459
          %v3462 = vmul.f32 %v3443, %v3460
          %v3463 = vmul.f32 %v3449, %v3461
          %v3464 = vtanh.pop %v3462
          %v3465 = vtanh.pop %v3463
          %v3466 = vmul.f32 %v3109, %v3464
          %v3467 = vmul.f32 %v3115, %v3465
          %s3468 = scalar_lea.vmem %s571, 32
          %3469 = vst [vmem:[%s3468] sm:$0xff] %v3466
          %3470 = vst [vmem:[%s3468 + $0x8] sm:$0xff] %v3467
          %3471 = vst [vmem:[#allocation2 + $0x8] sm:$0xff] %v3466
          %3472 = vst [vmem:[#allocation2 + $0x18] sm:$0xff] %v3467
          %3473 = vst [vmem:[#allocation4] sm:$0xff] %v3462
          %3474 = vst [vmem:[#allocation4 + $0x8] sm:$0xff] %v3463
          %3475 = vst [vmem:[#allocation5] sm:$0xff] %v3462
          %3476 = vst [vmem:[#allocation5 + $0x8] sm:$0xff] %v3463
          %3477 = vst [vmem:[#allocation6] sm:$0xff] %v3458
          %3478 = vst [vmem:[#allocation6 + $0x8] sm:$0xff] %v3459
          %v3479 = vld [vmem:[#allocation4] sm:$0xff]
          %v3480 = vld [vmem:[#allocation4 + $0x8] sm:$0xff]
          %v3481 = vld [vmem:[#allocation11] sm:$0xff]
          %v3482 = vld [vmem:[#allocation11 + $0x8] sm:$0xff]
          %v3483 = vld [vmem:[#allocation11 + $0x10] sm:$0xff]
          %v3484 = vld [vmem:[#allocation11 + $0x18] sm:$0xff]
          %v3485 = vld [vmem:[#allocation11 + $0x20] sm:$0xff]
          %v3486 = vld [vmem:[#allocation11 + $0x28] sm:$0xff]
          %v3487 = vld [vmem:[#allocation11 + $0x30] sm:$0xff]
          %v3488 = vld [vmem:[#allocation11 + $0x38] sm:$0xff]
          %v3489 = vld [vmem:[#allocation11 + $0x40] sm:$0xff]
          %v3490 = vld [vmem:[#allocation11 + $0x48] sm:$0xff]
          %v3491 = vld [vmem:[#allocation11 + $0x50] sm:$0xff]
          %v3492 = vld [vmem:[#allocation11 + $0x58] sm:$0xff]
          %v3493 = vld [vmem:[#allocation11 + $0x60] sm:$0xff]
          %v3494 = vld [vmem:[#allocation11 + $0x68] sm:$0xff]
          %v3495 = vld [vmem:[#allocation11 + $0x70] sm:$0xff]
          %v3496 = vld [vmem:[#allocation11 + $0x78] sm:$0xff]
          %v3497 = vld [vmem:[#allocation11 + $0x80] sm:$0xff]
          %v3498 = vld [vmem:[#allocation11 + $0x88] sm:$0xff]
          %v3499 = vld [vmem:[#allocation11 + $0x90] sm:$0xff]
          %v3500 = vld [vmem:[#allocation11 + $0x98] sm:$0xff]
          %v3501 = vld [vmem:[#allocation11 + $0xa0] sm:$0xff]
          %v3502 = vld [vmem:[#allocation11 + $0xa8] sm:$0xff]
          %v3503 = vld [vmem:[#allocation11 + $0xb0] sm:$0xff]
          %v3504 = vld [vmem:[#allocation11 + $0xb8] sm:$0xff]
          %v3505 = vld [vmem:[#allocation11 + $0xc0] sm:$0xff]
          %v3506 = vld [vmem:[#allocation11 + $0xc8] sm:$0xff]
          %v3507 = vld [vmem:[#allocation11 + $0xd0] sm:$0xff]
          %v3508 = vld [vmem:[#allocation11 + $0xd8] sm:$0xff]
          %v3509 = vld [vmem:[#allocation11 + $0xe0] sm:$0xff]
          %v3510 = vld [vmem:[#allocation11 + $0xe8] sm:$0xff]
          %v3511 = vld [vmem:[#allocation11 + $0xf0] sm:$0xff]
          %v3512 = vld [vmem:[#allocation11 + $0xf8] sm:$0xff]
          %v3513 = vld [vmem:[#allocation11 + $0x100] sm:$0xff]
          %v3514 = vld [vmem:[#allocation11 + $0x108] sm:$0xff]
          %v3515 = vld [vmem:[#allocation11 + $0x110] sm:$0xff]
          %v3516 = vld [vmem:[#allocation11 + $0x118] sm:$0xff]
          %v3517 = vld [vmem:[#allocation11 + $0x120] sm:$0xff]
          %v3518 = vld [vmem:[#allocation11 + $0x128] sm:$0xff]
          %v3519 = vld [vmem:[#allocation11 + $0x130] sm:$0xff]
          %v3520 = vld [vmem:[#allocation11 + $0x138] sm:$0xff]
          %v3521 = vld [vmem:[#allocation11 + $0x140] sm:$0xff]
          %v3522 = vld [vmem:[#allocation11 + $0x148] sm:$0xff]
          %v3523 = vld [vmem:[#allocation11 + $0x150] sm:$0xff]
          %v3524 = vld [vmem:[#allocation11 + $0x158] sm:$0xff]
          %v3525 = vld [vmem:[#allocation11 + $0x160] sm:$0xff]
          %v3526 = vld [vmem:[#allocation11 + $0x168] sm:$0xff]
          %v3527 = vld [vmem:[#allocation11 + $0x170] sm:$0xff]
          %v3528 = vld [vmem:[#allocation11 + $0x178] sm:$0xff]
          %v3529 = vld [vmem:[#allocation11 + $0x180] sm:$0xff]
          %v3530 = vld [vmem:[#allocation11 + $0x188] sm:$0xff]
          %v3531 = vld [vmem:[#allocation11 + $0x190] sm:$0xff]
          %v3532 = vld [vmem:[#allocation11 + $0x198] sm:$0xff]
          %v3533 = vld [vmem:[#allocation11 + $0x1a0] sm:$0xff]
          %v3534 = vld [vmem:[#allocation11 + $0x1a8] sm:$0xff]
          %v3535 = vld [vmem:[#allocation11 + $0x1b0] sm:$0xff]
          %v3536 = vld [vmem:[#allocation11 + $0x1b8] sm:$0xff]
          %v3537 = vld [vmem:[#allocation11 + $0x1c0] sm:$0xff]
          %v3538 = vld [vmem:[#allocation11 + $0x1c8] sm:$0xff]
          %v3539 = vld [vmem:[#allocation11 + $0x1d0] sm:$0xff]
          %v3540 = vld [vmem:[#allocation11 + $0x1d8] sm:$0xff]
          %v3541 = vld [vmem:[#allocation11 + $0x1e0] sm:$0xff]
          %v3542 = vld [vmem:[#allocation11 + $0x1e8] sm:$0xff]
          %v3543 = vld [vmem:[#allocation11 + $0x1f0] sm:$0xff]
          %v3544 = vld [vmem:[#allocation11 + $0x1f8] sm:$0xff]
          %v3545 = vld [vmem:[%s9] sm:$0xf]
          %v3547 = vlaneseq
          %v3548 = vshrl.u32 %v3547, 7
          %v3549 = vsub.s32 0, %v3548
          %v3550 = vrot.slane %v3545, %v3549
          %v3551 = vlaneseq
          %v3552 = vshrl.u32 %v3551, 7
          %v3553 = vsub.s32 1, %v3552
          %v3554 = vrot.slane %v3545, %v3553
          %v3555 = vlaneseq
          %v3556 = vshrl.u32 %v3555, 7
          %v3557 = vsub.s32 2, %v3556
          %v3558 = vrot.slane %v3545, %v3557
          %v3559 = vlaneseq
          %v3560 = vshrl.u32 %v3559, 7
          %v3561 = vsub.s32 3, %v3560
          %v3562 = vrot.slane %v3545, %v3561
          %3567 = vmatprep.subr.mxu0 %v3482
          %3568 = vmatpush1.msra.mxu0 %v3481
          %3569 = vmatprep.subr.mxu0 %v3486
          %3570 = vmatpush1.msra.mxu0 %v3485
          %3571 = vmatprep.subr.mxu0 %v3490
          %3572 = vmatpush1.msra.mxu0 %v3489
          %3573 = vmatprep.subr.mxu0 %v3494
          %3574 = vmatpush1.msra.mxu0 %v3493
          %3575 = vmatprep.subr.mxu0 %v3498
          %3576 = vmatpush1.msra.mxu0 %v3497
          %3577 = vmatprep.subr.mxu0 %v3502
          %3578 = vmatpush1.msra.mxu0 %v3501
          %3579 = vmatprep.subr.mxu0 %v3506
          %3580 = vmatpush1.msra.mxu0 %v3505
          %3581 = vmatprep.subr.mxu0 %v3510
          %3582 = vmatpush1.msra.mxu0 %v3509
          %3583 = vmatprep.subr.mxu0 %v3514
          %3584 = vmatpush1.msra.mxu0 %v3513
          %3585 = vmatprep.subr.mxu0 %v3518
          %3586 = vmatpush1.msra.mxu0 %v3517
          %3587 = vmatprep.subr.mxu0 %v3522
          %3588 = vmatpush1.msra.mxu0 %v3521
          %3589 = vmatprep.subr.mxu0 %v3526
          %3590 = vmatpush1.msra.mxu0 %v3525
          %3591 = vmatprep.subr.mxu0 %v3530
          %3592 = vmatpush1.msra.mxu0 %v3529
          %3593 = vmatprep.subr.mxu0 %v3534
          %3594 = vmatpush1.msra.mxu0 %v3533
          %3595 = vmatprep.subr.mxu0 %v3538
          %3596 = vmatpush1.msra.mxu0 %v3537
          %3597 = vmatprep.subr.mxu0 %v3542
          %3598 = vmatpush1.msra.mxu0 %v3541
          %3599 = vmatprep.subr.mxu0 0.0
          %3600 = vmatpush1.msra.mxu0 0.0
          %3601 = vmatprep.subr.mxu0 0.0
          %3602 = vmatpush1.msra.mxu0 0.0
          %3603 = vmatprep.subr.mxu0 0.0
          %3604 = vmatpush1.msra.mxu0 0.0
          %3605 = vmatprep.subr.mxu0 0.0
          %3606 = vmatpush1.msra.mxu0 0.0
          %3607 = vmatprep.subr.mxu0 0.0
          %3608 = vmatpush1.msra.mxu0 0.0
          %3609 = vmatprep.subr.mxu0 0.0
          %3610 = vmatpush1.msra.mxu0 0.0
          %3611 = vmatprep.subr.mxu0 0.0
          %3612 = vmatpush1.msra.mxu0 0.0
          %3613 = vmatprep.subr.mxu0 0.0
          %3614 = vmatpush1.msra.mxu0 0.0
          %3615 = vmatprep.subr.mxu0 0.0
          %3616 = vmatpush1.msra.mxu0 0.0
          %3617 = vmatprep.subr.mxu0 0.0
          %3618 = vmatpush1.msra.mxu0 0.0
          %3619 = vmatprep.subr.mxu0 0.0
          %3620 = vmatpush1.msra.mxu0 0.0
          %3621 = vmatprep.subr.mxu0 0.0
          %3622 = vmatpush1.msra.mxu0 0.0
          %3623 = vmatprep.subr.mxu0 0.0
          %3624 = vmatpush1.msra.mxu0 0.0
          %3625 = vmatprep.subr.mxu0 0.0
          %3626 = vmatpush1.msra.mxu0 0.0
          %3627 = vmatprep.subr.mxu0 0.0
          %3628 = vmatpush1.msra.mxu0 0.0
          %3629 = vmatprep.subr.mxu0 0.0
          %3630 = vmatpush1.msra.mxu0 0.0
          %3631 = vmatprep.mubr.f32.mxu0 0.0
          %3632 = vmatmul.mubr.f32.gmra.mrb[0].mxu0 %v3479
          %v3633 = vpop.f32.mrb[0].mxu0
          %v3634 = vadd.f32 %v3550, %v3633
          %v3635 = vpop.f32.mrb[0].mxu0
          %v3636 = vadd.f32 %v3554, %v3635
          %3637 = vmatprep.mubr.f32.mxu0 0.0
          %3638 = vmatmul.mubr.f32.gmra.mrb[0].mxu0 %v3480
          %v3639 = vpop.f32.mrb[0].mxu0
          %v3640 = vadd.f32 %v3550, %v3639
          %v3641 = vpop.f32.mrb[0].mxu0
          %v3642 = vadd.f32 %v3554, %v3641
          %3643 = vdwg.mxu0
          %3644 = vmatprep.subr.mxu0 %v3484
          %3645 = vmatpush1.msra.mxu0 %v3483
          %3646 = vmatprep.subr.mxu0 %v3488
          %3647 = vmatpush1.msra.mxu0 %v3487
          %3648 = vmatprep.subr.mxu0 %v3492
          %3649 = vmatpush1.msra.mxu0 %v3491
          %3650 = vmatprep.subr.mxu0 %v3496
          %3651 = vmatpush1.msra.mxu0 %v3495
          %3652 = vmatprep.subr.mxu0 %v3500
          %3653 = vmatpush1.msra.mxu0 %v3499
          %3654 = vmatprep.subr.mxu0 %v3504
          %3655 = vmatpush1.msra.mxu0 %v3503
          %3656 = vmatprep.subr.mxu0 %v3508
          %3657 = vmatpush1.msra.mxu0 %v3507
          %3658 = vmatprep.subr.mxu0 %v3512
          %3659 = vmatpush1.msra.mxu0 %v3511
          %3660 = vmatprep.subr.mxu0 %v3516
          %3661 = vmatpush1.msra.mxu0 %v3515
          %3662 = vmatprep.subr.mxu0 %v3520
          %3663 = vmatpush1.msra.mxu0 %v3519
          %3664 = vmatprep.subr.mxu0 %v3524
          %3665 = vmatpush1.msra.mxu0 %v3523
          %3666 = vmatprep.subr.mxu0 %v3528
          %3667 = vmatpush1.msra.mxu0 %v3527
          %3668 = vmatprep.subr.mxu0 %v3532
          %3669 = vmatpush1.msra.mxu0 %v3531
          %3670 = vmatprep.subr.mxu0 %v3536
          %3671 = vmatpush1.msra.mxu0 %v3535
          %3672 = vmatprep.subr.mxu0 %v3540
          %3673 = vmatpush1.msra.mxu0 %v3539
          %3674 = vmatprep.subr.mxu0 %v3544
          %3675 = vmatpush1.msra.mxu0 %v3543
          %3676 = vmatprep.subr.mxu0 0.0
          %3677 = vmatpush1.msra.mxu0 0.0
          %3678 = vmatprep.subr.mxu0 0.0
          %3679 = vmatpush1.msra.mxu0 0.0
          %3680 = vmatprep.subr.mxu0 0.0
          %3681 = vmatpush1.msra.mxu0 0.0
          %3682 = vmatprep.subr.mxu0 0.0
          %3683 = vmatpush1.msra.mxu0 0.0
          %3684 = vmatprep.subr.mxu0 0.0
          %3685 = vmatpush1.msra.mxu0 0.0
          %3686 = vmatprep.subr.mxu0 0.0
          %3687 = vmatpush1.msra.mxu0 0.0
          %3688 = vmatprep.subr.mxu0 0.0
          %3689 = vmatpush1.msra.mxu0 0.0
          %3690 = vmatprep.subr.mxu0 0.0
          %3691 = vmatpush1.msra.mxu0 0.0
          %3692 = vmatprep.subr.mxu0 0.0
          %3693 = vmatpush1.msra.mxu0 0.0
          %3694 = vmatprep.subr.mxu0 0.0
          %3695 = vmatpush1.msra.mxu0 0.0
          %3696 = vmatprep.subr.mxu0 0.0
          %3697 = vmatpush1.msra.mxu0 0.0
          %3698 = vmatprep.subr.mxu0 0.0
          %3699 = vmatpush1.msra.mxu0 0.0
          %3700 = vmatprep.subr.mxu0 0.0
          %3701 = vmatpush1.msra.mxu0 0.0
          %3702 = vmatprep.subr.mxu0 0.0
          %3703 = vmatpush1.msra.mxu0 0.0
          %3704 = vmatprep.subr.mxu0 0.0
          %3705 = vmatpush1.msra.mxu0 0.0
          %3706 = vmatprep.subr.mxu0 0.0
          %3707 = vmatpush1.msra.mxu0 0.0
          %3708 = vmatprep.mubr.f32.mxu0 0.0
          %3709 = vmatmul.mubr.f32.gmra.mrb[0].mxu0 %v3479
          %v3710 = vpop.f32.mrb[0].mxu0
          %v3711 = vadd.f32 %v3558, %v3710
          %v3712 = vpop.f32.mrb[0].mxu0
          %v3713 = vadd.f32 %v3562, %v3712
          %3714 = vmatprep.mubr.f32.mxu0 0.0
          %3715 = vmatmul.mubr.f32.gmra.mrb[0].mxu0 %v3480
          %v3716 = vpop.f32.mrb[0].mxu0
          %v3717 = vadd.f32 %v3558, %v3716
          %v3718 = vpop.f32.mrb[0].mxu0
          %v3719 = vadd.f32 %v3562, %v3718
          %3720 = vdwg.mxu0
          %s3721 = scalar_lea.vmem %s535, 48
          %v3722 = vld [vmem:[%s3721] sm:$0xff]
          %v3723 = vld [vmem:[%s3721 + $0x8] sm:$0xff]
          %3724 = vst [vmem:[#allocation2] sm:$0xff] %v3722
          %3725 = vst [vmem:[#allocation2 + $0x10] sm:$0xff] %v3723
          %v3726 = vld [vmem:[#allocation2] sm:$0xff]
          %v3727 = vld [vmem:[#allocation2 + $0x8] sm:$0xff]
          %v3728 = vld [vmem:[#allocation2 + $0x10] sm:$0xff]
          %v3729 = vld [vmem:[#allocation2 + $0x18] sm:$0xff]
          %v3730 = vld [vmem:[#allocation7] sm:$0xff]
          %v3731 = vld [vmem:[#allocation7 + $0x8] sm:$0xff]
          %v3732 = vld [vmem:[#allocation7 + $0x10] sm:$0xff]
          %v3733 = vld [vmem:[#allocation7 + $0x18] sm:$0xff]
          %v3734 = vld [vmem:[#allocation7 + $0x20] sm:$0xff]
          %v3735 = vld [vmem:[#allocation7 + $0x28] sm:$0xff]
          %v3736 = vld [vmem:[#allocation7 + $0x30] sm:$0xff]
          %v3737 = vld [vmem:[#allocation7 + $0x38] sm:$0xff]
          %v3738 = vld [vmem:[#allocation7 + $0x40] sm:$0xff]
          %v3739 = vld [vmem:[#allocation7 + $0x48] sm:$0xff]
          %v3740 = vld [vmem:[#allocation7 + $0x50] sm:$0xff]
          %v3741 = vld [vmem:[#allocation7 + $0x58] sm:$0xff]
          %v3742 = vld [vmem:[#allocation7 + $0x60] sm:$0xff]
          %v3743 = vld [vmem:[#allocation7 + $0x68] sm:$0xff]
          %v3744 = vld [vmem:[#allocation7 + $0x70] sm:$0xff]
          %v3745 = vld [vmem:[#allocation7 + $0x78] sm:$0xff]
          %v3746 = vld [vmem:[#allocation7 + $0x80] sm:$0xff]
          %v3747 = vld [vmem:[#allocation7 + $0x88] sm:$0xff]
          %v3748 = vld [vmem:[#allocation7 + $0x90] sm:$0xff]
          %v3749 = vld [vmem:[#allocation7 + $0x98] sm:$0xff]
          %v3750 = vld [vmem:[#allocation7 + $0xa0] sm:$0xff]
          %v3751 = vld [vmem:[#allocation7 + $0xa8] sm:$0xff]
          %v3752 = vld [vmem:[#allocation7 + $0xb0] sm:$0xff]
          %v3753 = vld [vmem:[#allocation7 + $0xb8] sm:$0xff]
          %v3754 = vld [vmem:[#allocation7 + $0xc0] sm:$0xff]
          %v3755 = vld [vmem:[#allocation7 + $0xc8] sm:$0xff]
          %v3756 = vld [vmem:[#allocation7 + $0xd0] sm:$0xff]
          %v3757 = vld [vmem:[#allocation7 + $0xd8] sm:$0xff]
          %v3758 = vld [vmem:[#allocation7 + $0xe0] sm:$0xff]
          %v3759 = vld [vmem:[#allocation7 + $0xe8] sm:$0xff]
          %v3760 = vld [vmem:[#allocation7 + $0xf0] sm:$0xff]
          %v3761 = vld [vmem:[#allocation7 + $0xf8] sm:$0xff]
          %v3762 = vld [vmem:[#allocation7 + $0x100] sm:$0xff]
          %v3763 = vld [vmem:[#allocation7 + $0x108] sm:$0xff]
          %v3764 = vld [vmem:[#allocation7 + $0x110] sm:$0xff]
          %v3765 = vld [vmem:[#allocation7 + $0x118] sm:$0xff]
          %v3766 = vld [vmem:[#allocation7 + $0x120] sm:$0xff]
          %v3767 = vld [vmem:[#allocation7 + $0x128] sm:$0xff]
          %v3768 = vld [vmem:[#allocation7 + $0x130] sm:$0xff]
          %v3769 = vld [vmem:[#allocation7 + $0x138] sm:$0xff]
          %v3770 = vld [vmem:[#allocation7 + $0x140] sm:$0xff]
          %v3771 = vld [vmem:[#allocation7 + $0x148] sm:$0xff]
          %v3772 = vld [vmem:[#allocation7 + $0x150] sm:$0xff]
          %v3773 = vld [vmem:[#allocation7 + $0x158] sm:$0xff]
          %v3774 = vld [vmem:[#allocation7 + $0x160] sm:$0xff]
          %v3775 = vld [vmem:[#allocation7 + $0x168] sm:$0xff]
          %v3776 = vld [vmem:[#allocation7 + $0x170] sm:$0xff]
          %v3777 = vld [vmem:[#allocation7 + $0x178] sm:$0xff]
          %v3778 = vld [vmem:[#allocation7 + $0x180] sm:$0xff]
          %v3779 = vld [vmem:[#allocation7 + $0x188] sm:$0xff]
          %v3780 = vld [vmem:[#allocation7 + $0x190] sm:$0xff]
          %v3781 = vld [vmem:[#allocation7 + $0x198] sm:$0xff]
          %v3782 = vld [vmem:[#allocation7 + $0x1a0] sm:$0xff]
          %v3783 = vld [vmem:[#allocation7 + $0x1a8] sm:$0xff]
          %v3784 = vld [vmem:[#allocation7 + $0x1b0] sm:$0xff]
          %v3785 = vld [vmem:[#allocation7 + $0x1b8] sm:$0xff]
          %v3786 = vld [vmem:[#allocation7 + $0x1c0] sm:$0xff]
          %v3787 = vld [vmem:[#allocation7 + $0x1c8] sm:$0xff]
          %v3788 = vld [vmem:[#allocation7 + $0x1d0] sm:$0xff]
          %v3789 = vld [vmem:[#allocation7 + $0x1d8] sm:$0xff]
          %v3790 = vld [vmem:[#allocation7 + $0x1e0] sm:$0xff]
          %v3791 = vld [vmem:[#allocation7 + $0x1e8] sm:$0xff]
          %v3792 = vld [vmem:[#allocation7 + $0x1f0] sm:$0xff]
          %v3793 = vld [vmem:[#allocation7 + $0x1f8] sm:$0xff]
          %v3794 = vld [vmem:[#allocation7 + $0x200] sm:$0xff]
          %v3795 = vld [vmem:[#allocation7 + $0x208] sm:$0xff]
          %v3796 = vld [vmem:[#allocation7 + $0x210] sm:$0xff]
          %v3797 = vld [vmem:[#allocation7 + $0x218] sm:$0xff]
          %v3798 = vld [vmem:[#allocation7 + $0x220] sm:$0xff]
          %v3799 = vld [vmem:[#allocation7 + $0x228] sm:$0xff]
          %v3800 = vld [vmem:[#allocation7 + $0x230] sm:$0xff]
          %v3801 = vld [vmem:[#allocation7 + $0x238] sm:$0xff]
          %v3802 = vld [vmem:[#allocation7 + $0x240] sm:$0xff]
          %v3803 = vld [vmem:[#allocation7 + $0x248] sm:$0xff]
          %v3804 = vld [vmem:[#allocation7 + $0x250] sm:$0xff]
          %v3805 = vld [vmem:[#allocation7 + $0x258] sm:$0xff]
          %v3806 = vld [vmem:[#allocation7 + $0x260] sm:$0xff]
          %v3807 = vld [vmem:[#allocation7 + $0x268] sm:$0xff]
          %v3808 = vld [vmem:[#allocation7 + $0x270] sm:$0xff]
          %v3809 = vld [vmem:[#allocation7 + $0x278] sm:$0xff]
          %v3810 = vld [vmem:[#allocation7 + $0x280] sm:$0xff]
          %v3811 = vld [vmem:[#allocation7 + $0x288] sm:$0xff]
          %v3812 = vld [vmem:[#allocation7 + $0x290] sm:$0xff]
          %v3813 = vld [vmem:[#allocation7 + $0x298] sm:$0xff]
          %v3814 = vld [vmem:[#allocation7 + $0x2a0] sm:$0xff]
          %v3815 = vld [vmem:[#allocation7 + $0x2a8] sm:$0xff]
          %v3816 = vld [vmem:[#allocation7 + $0x2b0] sm:$0xff]
          %v3817 = vld [vmem:[#allocation7 + $0x2b8] sm:$0xff]
          %v3818 = vld [vmem:[#allocation7 + $0x2c0] sm:$0xff]
          %v3819 = vld [vmem:[#allocation7 + $0x2c8] sm:$0xff]
          %v3820 = vld [vmem:[#allocation7 + $0x2d0] sm:$0xff]
          %v3821 = vld [vmem:[#allocation7 + $0x2d8] sm:$0xff]
          %v3822 = vld [vmem:[#allocation7 + $0x2e0] sm:$0xff]
          %v3823 = vld [vmem:[#allocation7 + $0x2e8] sm:$0xff]
          %v3824 = vld [vmem:[#allocation7 + $0x2f0] sm:$0xff]
          %v3825 = vld [vmem:[#allocation7 + $0x2f8] sm:$0xff]
          %v3826 = vld [vmem:[#allocation7 + $0x300] sm:$0xff]
          %v3827 = vld [vmem:[#allocation7 + $0x308] sm:$0xff]
          %v3828 = vld [vmem:[#allocation7 + $0x310] sm:$0xff]
          %v3829 = vld [vmem:[#allocation7 + $0x318] sm:$0xff]
          %v3830 = vld [vmem:[#allocation7 + $0x320] sm:$0xff]
          %v3831 = vld [vmem:[#allocation7 + $0x328] sm:$0xff]
          %v3832 = vld [vmem:[#allocation7 + $0x330] sm:$0xff]
          %v3833 = vld [vmem:[#allocation7 + $0x338] sm:$0xff]
          %v3834 = vld [vmem:[#allocation7 + $0x340] sm:$0xff]
          %v3835 = vld [vmem:[#allocation7 + $0x348] sm:$0xff]
          %v3836 = vld [vmem:[#allocation7 + $0x350] sm:$0xff]
          %v3837 = vld [vmem:[#allocation7 + $0x358] sm:$0xff]
          %v3838 = vld [vmem:[#allocation7 + $0x360] sm:$0xff]
          %v3839 = vld [vmem:[#allocation7 + $0x368] sm:$0xff]
          %v3840 = vld [vmem:[#allocation7 + $0x370] sm:$0xff]
          %v3841 = vld [vmem:[#allocation7 + $0x378] sm:$0xff]
          %v3842 = vld [vmem:[#allocation7 + $0x380] sm:$0xff]
          %v3843 = vld [vmem:[#allocation7 + $0x388] sm:$0xff]
          %v3844 = vld [vmem:[#allocation7 + $0x390] sm:$0xff]
          %v3845 = vld [vmem:[#allocation7 + $0x398] sm:$0xff]
          %v3846 = vld [vmem:[#allocation7 + $0x3a0] sm:$0xff]
          %v3847 = vld [vmem:[#allocation7 + $0x3a8] sm:$0xff]
          %v3848 = vld [vmem:[#allocation7 + $0x3b0] sm:$0xff]
          %v3849 = vld [vmem:[#allocation7 + $0x3b8] sm:$0xff]
          %v3850 = vld [vmem:[#allocation7 + $0x3c0] sm:$0xff]
          %v3851 = vld [vmem:[#allocation7 + $0x3c8] sm:$0xff]
          %v3852 = vld [vmem:[#allocation7 + $0x3d0] sm:$0xff]
          %v3853 = vld [vmem:[#allocation7 + $0x3d8] sm:$0xff]
          %v3854 = vld [vmem:[#allocation7 + $0x3e0] sm:$0xff]
          %v3855 = vld [vmem:[#allocation7 + $0x3e8] sm:$0xff]
          %v3856 = vld [vmem:[#allocation7 + $0x3f0] sm:$0xff]
          %v3857 = vld [vmem:[#allocation7 + $0x3f8] sm:$0xff]
          %v3858 = vld [vmem:[%s6] sm:$0xf]
          %v3860 = vlaneseq
          %v3861 = vshrl.u32 %v3860, 7
          %v3862 = vsub.s32 0, %v3861
          %v3863 = vrot.slane %v3858, %v3862
          %v3864 = vlaneseq
          %v3865 = vshrl.u32 %v3864, 7
          %v3866 = vsub.s32 1, %v3865
          %v3867 = vrot.slane %v3858, %v3866
          %v3868 = vlaneseq
          %v3869 = vshrl.u32 %v3868, 7
          %v3870 = vsub.s32 2, %v3869
          %v3871 = vrot.slane %v3858, %v3870
          %v3872 = vlaneseq
          %v3873 = vshrl.u32 %v3872, 7
          %v3874 = vsub.s32 3, %v3873
          %v3875 = vrot.slane %v3858, %v3874
          %3880 = vmatprep.subr.mxu0 %v3731
          %3881 = vmatpush1.msra.mxu0 %v3730
          %3882 = vmatprep.subr.mxu0 %v3735
          %3883 = vmatpush1.msra.mxu0 %v3734
          %3884 = vmatprep.subr.mxu0 %v3739
          %3885 = vmatpush1.msra.mxu0 %v3738
          %3886 = vmatprep.subr.mxu0 %v3743
          %3887 = vmatpush1.msra.mxu0 %v3742
          %3888 = vmatprep.subr.mxu0 %v3747
          %3889 = vmatpush1.msra.mxu0 %v3746
          %3890 = vmatprep.subr.mxu0 %v3751
          %3891 = vmatpush1.msra.mxu0 %v3750
          %3892 = vmatprep.subr.mxu0 %v3755
          %3893 = vmatpush1.msra.mxu0 %v3754
          %3894 = vmatprep.subr.mxu0 %v3759
          %3895 = vmatpush1.msra.mxu0 %v3758
          %3896 = vmatprep.subr.mxu0 %v3763
          %3897 = vmatpush1.msra.mxu0 %v3762
          %3898 = vmatprep.subr.mxu0 %v3767
          %3899 = vmatpush1.msra.mxu0 %v3766
          %3900 = vmatprep.subr.mxu0 %v3771
          %3901 = vmatpush1.msra.mxu0 %v3770
          %3902 = vmatprep.subr.mxu0 %v3775
          %3903 = vmatpush1.msra.mxu0 %v3774
          %3904 = vmatprep.subr.mxu0 %v3779
          %3905 = vmatpush1.msra.mxu0 %v3778
          %3906 = vmatprep.subr.mxu0 %v3783
          %3907 = vmatpush1.msra.mxu0 %v3782
          %3908 = vmatprep.subr.mxu0 %v3787
          %3909 = vmatpush1.msra.mxu0 %v3786
          %3910 = vmatprep.subr.mxu0 %v3791
          %3911 = vmatpush1.msra.mxu0 %v3790
          %3912 = vmatprep.subr.mxu0 %v3795
          %3913 = vmatpush1.msra.mxu0 %v3794
          %3914 = vmatprep.subr.mxu0 %v3799
          %3915 = vmatpush1.msra.mxu0 %v3798
          %3916 = vmatprep.subr.mxu0 %v3803
          %3917 = vmatpush1.msra.mxu0 %v3802
          %3918 = vmatprep.subr.mxu0 %v3807
          %3919 = vmatpush1.msra.mxu0 %v3806
          %3920 = vmatprep.subr.mxu0 %v3811
          %3921 = vmatpush1.msra.mxu0 %v3810
          %3922 = vmatprep.subr.mxu0 %v3815
          %3923 = vmatpush1.msra.mxu0 %v3814
          %3924 = vmatprep.subr.mxu0 %v3819
          %3925 = vmatpush1.msra.mxu0 %v3818
          %3926 = vmatprep.subr.mxu0 %v3823
          %3927 = vmatpush1.msra.mxu0 %v3822
          %3928 = vmatprep.subr.mxu0 %v3827
          %3929 = vmatpush1.msra.mxu0 %v3826
          %3930 = vmatprep.subr.mxu0 %v3831
          %3931 = vmatpush1.msra.mxu0 %v3830
          %3932 = vmatprep.subr.mxu0 %v3835
          %3933 = vmatpush1.msra.mxu0 %v3834
          %3934 = vmatprep.subr.mxu0 %v3839
          %3935 = vmatpush1.msra.mxu0 %v3838
          %3936 = vmatprep.subr.mxu0 %v3843
          %3937 = vmatpush1.msra.mxu0 %v3842
          %3938 = vmatprep.subr.mxu0 %v3847
          %3939 = vmatpush1.msra.mxu0 %v3846
          %3940 = vmatprep.subr.mxu0 %v3851
          %3941 = vmatpush1.msra.mxu0 %v3850
          %3942 = vmatprep.subr.mxu0 %v3855
          %3943 = vmatpush1.msra.mxu0 %v3854
          %3944 = vmatprep.mubr.f32.mxu0 %v3727
          %3945 = vmatmul.mubr.f32.gmra.mrb[0].mxu0 %v3726
          %v3946 = vpop.f32.mrb[0].mxu0
          %v3947 = vadd.f32 %v3863, %v3946
          %v3948 = vpop.f32.mrb[0].mxu0
          %v3949 = vadd.f32 %v3867, %v3948
          %3950 = vmatprep.mubr.f32.mxu0 %v3729
          %3951 = vmatmul.mubr.f32.gmra.mrb[0].mxu0 %v3728
          %v3952 = vpop.f32.mrb[0].mxu0
          %v3953 = vadd.f32 %v3863, %v3952
          %v3954 = vpop.f32.mrb[0].mxu0
          %v3955 = vadd.f32 %v3867, %v3954
          %3956 = vdwg.mxu0
          %3957 = vmatprep.subr.mxu0 %v3733
          %3958 = vmatpush1.msra.mxu0 %v3732
          %3959 = vmatprep.subr.mxu0 %v3737
          %3960 = vmatpush1.msra.mxu0 %v3736
          %3961 = vmatprep.subr.mxu0 %v3741
          %3962 = vmatpush1.msra.mxu0 %v3740
          %3963 = vmatprep.subr.mxu0 %v3745
          %3964 = vmatpush1.msra.mxu0 %v3744
          %3965 = vmatprep.subr.mxu0 %v3749
          %3966 = vmatpush1.msra.mxu0 %v3748
          %3967 = vmatprep.subr.mxu0 %v3753
          %3968 = vmatpush1.msra.mxu0 %v3752
          %3969 = vmatprep.subr.mxu0 %v3757
          %3970 = vmatpush1.msra.mxu0 %v3756
          %3971 = vmatprep.subr.mxu0 %v3761
          %3972 = vmatpush1.msra.mxu0 %v3760
          %3973 = vmatprep.subr.mxu0 %v3765
          %3974 = vmatpush1.msra.mxu0 %v3764
          %3975 = vmatprep.subr.mxu0 %v3769
          %3976 = vmatpush1.msra.mxu0 %v3768
          %3977 = vmatprep.subr.mxu0 %v3773
          %3978 = vmatpush1.msra.mxu0 %v3772
          %3979 = vmatprep.subr.mxu0 %v3777
          %3980 = vmatpush1.msra.mxu0 %v3776
          %3981 = vmatprep.subr.mxu0 %v3781
          %3982 = vmatpush1.msra.mxu0 %v3780
          %3983 = vmatprep.subr.mxu0 %v3785
          %3984 = vmatpush1.msra.mxu0 %v3784
          %3985 = vmatprep.subr.mxu0 %v3789
          %3986 = vmatpush1.msra.mxu0 %v3788
          %3987 = vmatprep.subr.mxu0 %v3793
          %3988 = vmatpush1.msra.mxu0 %v3792
          %3989 = vmatprep.subr.mxu0 %v3797
          %3990 = vmatpush1.msra.mxu0 %v3796
          %3991 = vmatprep.subr.mxu0 %v3801
          %3992 = vmatpush1.msra.mxu0 %v3800
          %3993 = vmatprep.subr.mxu0 %v3805
          %3994 = vmatpush1.msra.mxu0 %v3804
          %3995 = vmatprep.subr.mxu0 %v3809
          %3996 = vmatpush1.msra.mxu0 %v3808
          %3997 = vmatprep.subr.mxu0 %v3813
          %3998 = vmatpush1.msra.mxu0 %v3812
          %3999 = vmatprep.subr.mxu0 %v3817
          %4000 = vmatpush1.msra.mxu0 %v3816
          %4001 = vmatprep.subr.mxu0 %v3821
          %4002 = vmatpush1.msra.mxu0 %v3820
          %4003 = vmatprep.subr.mxu0 %v3825
          %4004 = vmatpush1.msra.mxu0 %v3824
          %4005 = vmatprep.subr.mxu0 %v3829
          %4006 = vmatpush1.msra.mxu0 %v3828
          %4007 = vmatprep.subr.mxu0 %v3833
          %4008 = vmatpush1.msra.mxu0 %v3832
          %4009 = vmatprep.subr.mxu0 %v3837
          %4010 = vmatpush1.msra.mxu0 %v3836
          %4011 = vmatprep.subr.mxu0 %v3841
          %4012 = vmatpush1.msra.mxu0 %v3840
          %4013 = vmatprep.subr.mxu0 %v3845
          %4014 = vmatpush1.msra.mxu0 %v3844
          %4015 = vmatprep.subr.mxu0 %v3849
          %4016 = vmatpush1.msra.mxu0 %v3848
          %4017 = vmatprep.subr.mxu0 %v3853
          %4018 = vmatpush1.msra.mxu0 %v3852
          %4019 = vmatprep.subr.mxu0 %v3857
          %4020 = vmatpush1.msra.mxu0 %v3856
          %4021 = vmatprep.mubr.f32.mxu0 %v3727
          %4022 = vmatmul.mubr.f32.gmra.mrb[0].mxu0 %v3726
          %v4023 = vpop.f32.mrb[0].mxu0
          %v4024 = vadd.f32 %v3871, %v4023
          %v4025 = vpop.f32.mrb[0].mxu0
          %v4026 = vadd.f32 %v3875, %v4025
          %4027 = vmatprep.mubr.f32.mxu0 %v3729
          %4028 = vmatmul.mubr.f32.gmra.mrb[0].mxu0 %v3728
          %v4029 = vpop.f32.mrb[0].mxu0
          %v4030 = vadd.f32 %v3871, %v4029
          %v4031 = vpop.f32.mrb[0].mxu0
          %v4032 = vadd.f32 %v3875, %v4031
          %4033 = vdwg.mxu0
          %v4034 = vxor.u32 %v3947, 2147483648
          %v4035 = vxor.u32 %v3949, 2147483648
          %v4036 = vxor.u32 %v4024, 2147483648
          %v4037 = vxor.u32 %v3953, 2147483648
          %v4038 = vxor.u32 %v3955, 2147483648
          %v4039 = vxor.u32 %v4030, 2147483648
          %v4040 = vmul.f32 %v4034, 1.442695
          %v4041 = vpow.pop %v4040
          %v4042 = vmul.f32 %v4035, 1.442695
          %v4043 = vpow.pop %v4042
          %v4044 = vmul.f32 %v4036, 1.442695
          %v4045 = vpow.pop %v4044
          %v4046 = vmul.f32 %v4037, 1.442695
          %v4047 = vpow.pop %v4046
          %v4048 = vmul.f32 %v4038, 1.442695
          %v4049 = vpow.pop %v4048
          %v4050 = vmul.f32 %v4039, 1.442695
          %v4051 = vpow.pop %v4050
          %v4052 = vadd.f32 %v4041, 1.0
          %v4053 = vadd.f32 %v4043, 1.0
          %v4054 = vadd.f32 %v4045, 1.0
          %v4055 = vadd.f32 %v4047, 1.0
          %v4056 = vadd.f32 %v4049, 1.0
          %v4057 = vadd.f32 %v4051, 1.0
          %v4058 = vrcp.pop %v4052
          %v4059 = vmul.f32 1.0, %v4058
          %v4060 = vrcp.pop %v4053
          %v4061 = vmul.f32 1.0, %v4060
          %v4062 = vrcp.pop %v4054
          %v4063 = vmul.f32 1.0, %v4062
          %v4064 = vrcp.pop %v4055
          %v4065 = vmul.f32 1.0, %v4064
          %v4066 = vrcp.pop %v4056
          %v4067 = vmul.f32 1.0, %v4066
          %v4068 = vrcp.pop %v4057
          %v4069 = vmul.f32 1.0, %v4068
          %v4070 = vtanh.pop %v4026
          %v4071 = vtanh.pop %v4032
          %v4072 = vld [vmem:[#allocation5] sm:$0xff]
          %v4073 = vld [vmem:[#allocation5 + $0x8] sm:$0xff]
          %v4074 = vmul.f32 %v4061, %v4072
          %v4075 = vmul.f32 %v4067, %v4073
          %4076 = vst [vmem:[#allocation3] sm:$0xff] %v4074
          %4077 = vst [vmem:[#allocation3 + $0x10] sm:$0xff] %v4075
          %v4078 = vmul.f32 %v4059, %v4070
          %v4079 = vmul.f32 %v4065, %v4071
          %4080 = vst [vmem:[#allocation3 + $0x8] sm:$0xff] %v4078
          %4081 = vst [vmem:[#allocation3 + $0x18] sm:$0xff] %v4079
          %v4082 = vld [vmem:[#allocation3] sm:$0xff]
          %v4083 = vld [vmem:[#allocation3 + $0x8] sm:$0xff]
          %v4084 = vld [vmem:[#allocation3 + $0x10] sm:$0xff]
          %v4085 = vld [vmem:[#allocation3 + $0x18] sm:$0xff]
          %v4086 = vld [vmem:[#allocation9] sm:$0xff]
          %v4087 = vld [vmem:[#allocation9 + $0x8] sm:$0xff]
          %v4088 = vld [vmem:[#allocation9 + $0x10] sm:$0xff]
          %v4089 = vld [vmem:[#allocation9 + $0x18] sm:$0xff]
          %v4090 = vld [vmem:[#allocation9 + $0x20] sm:$0xff]
          %v4091 = vld [vmem:[#allocation9 + $0x28] sm:$0xff]
          %v4092 = vld [vmem:[#allocation9 + $0x30] sm:$0xff]
          %v4093 = vld [vmem:[#allocation9 + $0x38] sm:$0xff]
          %v4094 = vld [vmem:[#allocation9 + $0x40] sm:$0xff]
          %v4095 = vld [vmem:[#allocation9 + $0x48] sm:$0xff]
          %v4096 = vld [vmem:[#allocation9 + $0x50] sm:$0xff]
          %v4097 = vld [vmem:[#allocation9 + $0x58] sm:$0xff]
          %v4098 = vld [vmem:[#allocation9 + $0x60] sm:$0xff]
          %v4099 = vld [vmem:[#allocation9 + $0x68] sm:$0xff]
          %v4100 = vld [vmem:[#allocation9 + $0x70] sm:$0xff]
          %v4101 = vld [vmem:[#allocation9 + $0x78] sm:$0xff]
          %v4102 = vld [vmem:[#allocation9 + $0x80] sm:$0xff]
          %v4103 = vld [vmem:[#allocation9 + $0x88] sm:$0xff]
          %v4104 = vld [vmem:[#allocation9 + $0x90] sm:$0xff]
          %v4105 = vld [vmem:[#allocation9 + $0x98] sm:$0xff]
          %v4106 = vld [vmem:[#allocation9 + $0xa0] sm:$0xff]
          %v4107 = vld [vmem:[#allocation9 + $0xa8] sm:$0xff]
          %v4108 = vld [vmem:[#allocation9 + $0xb0] sm:$0xff]
          %v4109 = vld [vmem:[#allocation9 + $0xb8] sm:$0xff]
          %v4110 = vld [vmem:[#allocation9 + $0xc0] sm:$0xff]
          %v4111 = vld [vmem:[#allocation9 + $0xc8] sm:$0xff]
          %v4112 = vld [vmem:[#allocation9 + $0xd0] sm:$0xff]
          %v4113 = vld [vmem:[#allocation9 + $0xd8] sm:$0xff]
          %v4114 = vld [vmem:[#allocation9 + $0xe0] sm:$0xff]
          %v4115 = vld [vmem:[#allocation9 + $0xe8] sm:$0xff]
          %v4116 = vld [vmem:[#allocation9 + $0xf0] sm:$0xff]
          %v4117 = vld [vmem:[#allocation9 + $0xf8] sm:$0xff]
          %v4118 = vld [vmem:[#allocation9 + $0x100] sm:$0xff]
          %v4119 = vld [vmem:[#allocation9 + $0x108] sm:$0xff]
          %v4120 = vld [vmem:[#allocation9 + $0x110] sm:$0xff]
          %v4121 = vld [vmem:[#allocation9 + $0x118] sm:$0xff]
          %v4122 = vld [vmem:[#allocation9 + $0x120] sm:$0xff]
          %v4123 = vld [vmem:[#allocation9 + $0x128] sm:$0xff]
          %v4124 = vld [vmem:[#allocation9 + $0x130] sm:$0xff]
          %v4125 = vld [vmem:[#allocation9 + $0x138] sm:$0xff]
          %v4126 = vld [vmem:[#allocation9 + $0x140] sm:$0xff]
          %v4127 = vld [vmem:[#allocation9 + $0x148] sm:$0xff]
          %v4128 = vld [vmem:[#allocation9 + $0x150] sm:$0xff]
          %v4129 = vld [vmem:[#allocation9 + $0x158] sm:$0xff]
          %v4130 = vld [vmem:[#allocation9 + $0x160] sm:$0xff]
          %v4131 = vld [vmem:[#allocation9 + $0x168] sm:$0xff]
          %v4132 = vld [vmem:[#allocation9 + $0x170] sm:$0xff]
          %v4133 = vld [vmem:[#allocation9 + $0x178] sm:$0xff]
          %v4134 = vld [vmem:[#allocation9 + $0x180] sm:$0xff]
          %v4135 = vld [vmem:[#allocation9 + $0x188] sm:$0xff]
          %v4136 = vld [vmem:[#allocation9 + $0x190] sm:$0xff]
          %v4137 = vld [vmem:[#allocation9 + $0x198] sm:$0xff]
          %v4138 = vld [vmem:[#allocation9 + $0x1a0] sm:$0xff]
          %v4139 = vld [vmem:[#allocation9 + $0x1a8] sm:$0xff]
          %v4140 = vld [vmem:[#allocation9 + $0x1b0] sm:$0xff]
          %v4141 = vld [vmem:[#allocation9 + $0x1b8] sm:$0xff]
          %v4142 = vld [vmem:[#allocation9 + $0x1c0] sm:$0xff]
          %v4143 = vld [vmem:[#allocation9 + $0x1c8] sm:$0xff]
          %v4144 = vld [vmem:[#allocation9 + $0x1d0] sm:$0xff]
          %v4145 = vld [vmem:[#allocation9 + $0x1d8] sm:$0xff]
          %v4146 = vld [vmem:[#allocation9 + $0x1e0] sm:$0xff]
          %v4147 = vld [vmem:[#allocation9 + $0x1e8] sm:$0xff]
          %v4148 = vld [vmem:[#allocation9 + $0x1f0] sm:$0xff]
          %v4149 = vld [vmem:[#allocation9 + $0x1f8] sm:$0xff]
          %v4150 = vld [vmem:[#allocation9 + $0x200] sm:$0xff]
          %v4151 = vld [vmem:[#allocation9 + $0x208] sm:$0xff]
          %v4152 = vld [vmem:[#allocation9 + $0x210] sm:$0xff]
          %v4153 = vld [vmem:[#allocation9 + $0x218] sm:$0xff]
          %v4154 = vld [vmem:[#allocation9 + $0x220] sm:$0xff]
          %v4155 = vld [vmem:[#allocation9 + $0x228] sm:$0xff]
          %v4156 = vld [vmem:[#allocation9 + $0x230] sm:$0xff]
          %v4157 = vld [vmem:[#allocation9 + $0x238] sm:$0xff]
          %v4158 = vld [vmem:[#allocation9 + $0x240] sm:$0xff]
          %v4159 = vld [vmem:[#allocation9 + $0x248] sm:$0xff]
          %v4160 = vld [vmem:[#allocation9 + $0x250] sm:$0xff]
          %v4161 = vld [vmem:[#allocation9 + $0x258] sm:$0xff]
          %v4162 = vld [vmem:[#allocation9 + $0x260] sm:$0xff]
          %v4163 = vld [vmem:[#allocation9 + $0x268] sm:$0xff]
          %v4164 = vld [vmem:[#allocation9 + $0x270] sm:$0xff]
          %v4165 = vld [vmem:[#allocation9 + $0x278] sm:$0xff]
          %v4166 = vld [vmem:[#allocation9 + $0x280] sm:$0xff]
          %v4167 = vld [vmem:[#allocation9 + $0x288] sm:$0xff]
          %v4168 = vld [vmem:[#allocation9 + $0x290] sm:$0xff]
          %v4169 = vld [vmem:[#allocation9 + $0x298] sm:$0xff]
          %v4170 = vld [vmem:[#allocation9 + $0x2a0] sm:$0xff]
          %v4171 = vld [vmem:[#allocation9 + $0x2a8] sm:$0xff]
          %v4172 = vld [vmem:[#allocation9 + $0x2b0] sm:$0xff]
          %v4173 = vld [vmem:[#allocation9 + $0x2b8] sm:$0xff]
          %v4174 = vld [vmem:[#allocation9 + $0x2c0] sm:$0xff]
          %v4175 = vld [vmem:[#allocation9 + $0x2c8] sm:$0xff]
          %v4176 = vld [vmem:[#allocation9 + $0x2d0] sm:$0xff]
          %v4177 = vld [vmem:[#allocation9 + $0x2d8] sm:$0xff]
          %v4178 = vld [vmem:[#allocation9 + $0x2e0] sm:$0xff]
          %v4179 = vld [vmem:[#allocation9 + $0x2e8] sm:$0xff]
          %v4180 = vld [vmem:[#allocation9 + $0x2f0] sm:$0xff]
          %v4181 = vld [vmem:[#allocation9 + $0x2f8] sm:$0xff]
          %v4182 = vld [vmem:[#allocation9 + $0x300] sm:$0xff]
          %v4183 = vld [vmem:[#allocation9 + $0x308] sm:$0xff]
          %v4184 = vld [vmem:[#allocation9 + $0x310] sm:$0xff]
          %v4185 = vld [vmem:[#allocation9 + $0x318] sm:$0xff]
          %v4186 = vld [vmem:[#allocation9 + $0x320] sm:$0xff]
          %v4187 = vld [vmem:[#allocation9 + $0x328] sm:$0xff]
          %v4188 = vld [vmem:[#allocation9 + $0x330] sm:$0xff]
          %v4189 = vld [vmem:[#allocation9 + $0x338] sm:$0xff]
          %v4190 = vld [vmem:[#allocation9 + $0x340] sm:$0xff]
          %v4191 = vld [vmem:[#allocation9 + $0x348] sm:$0xff]
          %v4192 = vld [vmem:[#allocation9 + $0x350] sm:$0xff]
          %v4193 = vld [vmem:[#allocation9 + $0x358] sm:$0xff]
          %v4194 = vld [vmem:[#allocation9 + $0x360] sm:$0xff]
          %v4195 = vld [vmem:[#allocation9 + $0x368] sm:$0xff]
          %v4196 = vld [vmem:[#allocation9 + $0x370] sm:$0xff]
          %v4197 = vld [vmem:[#allocation9 + $0x378] sm:$0xff]
          %v4198 = vld [vmem:[#allocation9 + $0x380] sm:$0xff]
          %v4199 = vld [vmem:[#allocation9 + $0x388] sm:$0xff]
          %v4200 = vld [vmem:[#allocation9 + $0x390] sm:$0xff]
          %v4201 = vld [vmem:[#allocation9 + $0x398] sm:$0xff]
          %v4202 = vld [vmem:[#allocation9 + $0x3a0] sm:$0xff]
          %v4203 = vld [vmem:[#allocation9 + $0x3a8] sm:$0xff]
          %v4204 = vld [vmem:[#allocation9 + $0x3b0] sm:$0xff]
          %v4205 = vld [vmem:[#allocation9 + $0x3b8] sm:$0xff]
          %v4206 = vld [vmem:[#allocation9 + $0x3c0] sm:$0xff]
          %v4207 = vld [vmem:[#allocation9 + $0x3c8] sm:$0xff]
          %v4208 = vld [vmem:[#allocation9 + $0x3d0] sm:$0xff]
          %v4209 = vld [vmem:[#allocation9 + $0x3d8] sm:$0xff]
          %v4210 = vld [vmem:[#allocation9 + $0x3e0] sm:$0xff]
          %v4211 = vld [vmem:[#allocation9 + $0x3e8] sm:$0xff]
          %v4212 = vld [vmem:[#allocation9 + $0x3f0] sm:$0xff]
          %v4213 = vld [vmem:[#allocation9 + $0x3f8] sm:$0xff]
          %4214 = vmatprep.subr.mxu0 %v4087
          %4215 = vmatpush1.msra.mxu0 %v4086
          %4216 = vmatprep.subr.mxu0 %v4091
          %4217 = vmatpush1.msra.mxu0 %v4090
          %4218 = vmatprep.subr.mxu0 %v4095
          %4219 = vmatpush1.msra.mxu0 %v4094
          %4220 = vmatprep.subr.mxu0 %v4099
          %4221 = vmatpush1.msra.mxu0 %v4098
          %4222 = vmatprep.subr.mxu0 %v4103
          %4223 = vmatpush1.msra.mxu0 %v4102
          %4224 = vmatprep.subr.mxu0 %v4107
          %4225 = vmatpush1.msra.mxu0 %v4106
          %4226 = vmatprep.subr.mxu0 %v4111
          %4227 = vmatpush1.msra.mxu0 %v4110
          %4228 = vmatprep.subr.mxu0 %v4115
          %4229 = vmatpush1.msra.mxu0 %v4114
          %4230 = vmatprep.subr.mxu0 %v4119
          %4231 = vmatpush1.msra.mxu0 %v4118
          %4232 = vmatprep.subr.mxu0 %v4123
          %4233 = vmatpush1.msra.mxu0 %v4122
          %4234 = vmatprep.subr.mxu0 %v4127
          %4235 = vmatpush1.msra.mxu0 %v4126
          %4236 = vmatprep.subr.mxu0 %v4131
          %4237 = vmatpush1.msra.mxu0 %v4130
          %4238 = vmatprep.subr.mxu0 %v4135
          %4239 = vmatpush1.msra.mxu0 %v4134
          %4240 = vmatprep.subr.mxu0 %v4139
          %4241 = vmatpush1.msra.mxu0 %v4138
          %4242 = vmatprep.subr.mxu0 %v4143
          %4243 = vmatpush1.msra.mxu0 %v4142
          %4244 = vmatprep.subr.mxu0 %v4147
          %4245 = vmatpush1.msra.mxu0 %v4146
          %4246 = vmatprep.subr.mxu0 %v4151
          %4247 = vmatpush1.msra.mxu0 %v4150
          %4248 = vmatprep.subr.mxu0 %v4155
          %4249 = vmatpush1.msra.mxu0 %v4154
          %4250 = vmatprep.subr.mxu0 %v4159
          %4251 = vmatpush1.msra.mxu0 %v4158
          %4252 = vmatprep.subr.mxu0 %v4163
          %4253 = vmatpush1.msra.mxu0 %v4162
          %4254 = vmatprep.subr.mxu0 %v4167
          %4255 = vmatpush1.msra.mxu0 %v4166
          %4256 = vmatprep.subr.mxu0 %v4171
          %4257 = vmatpush1.msra.mxu0 %v4170
          %4258 = vmatprep.subr.mxu0 %v4175
          %4259 = vmatpush1.msra.mxu0 %v4174
          %4260 = vmatprep.subr.mxu0 %v4179
          %4261 = vmatpush1.msra.mxu0 %v4178
          %4262 = vmatprep.subr.mxu0 %v4183
          %4263 = vmatpush1.msra.mxu0 %v4182
          %4264 = vmatprep.subr.mxu0 %v4187
          %4265 = vmatpush1.msra.mxu0 %v4186
          %4266 = vmatprep.subr.mxu0 %v4191
          %4267 = vmatpush1.msra.mxu0 %v4190
          %4268 = vmatprep.subr.mxu0 %v4195
          %4269 = vmatpush1.msra.mxu0 %v4194
          %4270 = vmatprep.subr.mxu0 %v4199
          %4271 = vmatpush1.msra.mxu0 %v4198
          %4272 = vmatprep.subr.mxu0 %v4203
          %4273 = vmatpush1.msra.mxu0 %v4202
          %4274 = vmatprep.subr.mxu0 %v4207
          %4275 = vmatpush1.msra.mxu0 %v4206
          %4276 = vmatprep.subr.mxu0 %v4211
          %4277 = vmatpush1.msra.mxu0 %v4210
          %4278 = vmatprep.mubr.f32.mxu0 %v4083
          %4279 = vmatmul.mubr.f32.gmra.mrb[0].mxu0 %v4082
          %v4280 = vpop.f32.mrb[0].mxu0
          %v4281 = vadd.f32 %v3634, %v4280
          %v4282 = vpop.f32.mrb[0].mxu0
          %v4283 = vadd.f32 %v3636, %v4282
          %4284 = vmatprep.mubr.f32.mxu0 %v4085
          %4285 = vmatmul.mubr.f32.gmra.mrb[0].mxu0 %v4084
          %v4286 = vpop.f32.mrb[0].mxu0
          %v4287 = vadd.f32 %v3640, %v4286
          %v4288 = vpop.f32.mrb[0].mxu0
          %v4289 = vadd.f32 %v3642, %v4288
          %4290 = vdwg.mxu0
          %4291 = vmatprep.subr.mxu0 %v4089
          %4292 = vmatpush1.msra.mxu0 %v4088
          %4293 = vmatprep.subr.mxu0 %v4093
          %4294 = vmatpush1.msra.mxu0 %v4092
          %4295 = vmatprep.subr.mxu0 %v4097
          %4296 = vmatpush1.msra.mxu0 %v4096
          %4297 = vmatprep.subr.mxu0 %v4101
          %4298 = vmatpush1.msra.mxu0 %v4100
          %4299 = vmatprep.subr.mxu0 %v4105
          %4300 = vmatpush1.msra.mxu0 %v4104
          %4301 = vmatprep.subr.mxu0 %v4109
          %4302 = vmatpush1.msra.mxu0 %v4108
          %4303 = vmatprep.subr.mxu0 %v4113
          %4304 = vmatpush1.msra.mxu0 %v4112
          %4305 = vmatprep.subr.mxu0 %v4117
          %4306 = vmatpush1.msra.mxu0 %v4116
          %4307 = vmatprep.subr.mxu0 %v4121
          %4308 = vmatpush1.msra.mxu0 %v4120
          %4309 = vmatprep.subr.mxu0 %v4125
          %4310 = vmatpush1.msra.mxu0 %v4124
          %4311 = vmatprep.subr.mxu0 %v4129
          %4312 = vmatpush1.msra.mxu0 %v4128
          %4313 = vmatprep.subr.mxu0 %v4133
          %4314 = vmatpush1.msra.mxu0 %v4132
          %4315 = vmatprep.subr.mxu0 %v4137
          %4316 = vmatpush1.msra.mxu0 %v4136
          %4317 = vmatprep.subr.mxu0 %v4141
          %4318 = vmatpush1.msra.mxu0 %v4140
          %4319 = vmatprep.subr.mxu0 %v4145
          %4320 = vmatpush1.msra.mxu0 %v4144
          %4321 = vmatprep.subr.mxu0 %v4149
          %4322 = vmatpush1.msra.mxu0 %v4148
          %4323 = vmatprep.subr.mxu0 %v4153
          %4324 = vmatpush1.msra.mxu0 %v4152
          %4325 = vmatprep.subr.mxu0 %v4157
          %4326 = vmatpush1.msra.mxu0 %v4156
          %4327 = vmatprep.subr.mxu0 %v4161
          %4328 = vmatpush1.msra.mxu0 %v4160
          %4329 = vmatprep.subr.mxu0 %v4165
          %4330 = vmatpush1.msra.mxu0 %v4164
          %4331 = vmatprep.subr.mxu0 %v4169
          %4332 = vmatpush1.msra.mxu0 %v4168
          %4333 = vmatprep.subr.mxu0 %v4173
          %4334 = vmatpush1.msra.mxu0 %v4172
          %4335 = vmatprep.subr.mxu0 %v4177
          %4336 = vmatpush1.msra.mxu0 %v4176
          %4337 = vmatprep.subr.mxu0 %v4181
          %4338 = vmatpush1.msra.mxu0 %v4180
          %4339 = vmatprep.subr.mxu0 %v4185
          %4340 = vmatpush1.msra.mxu0 %v4184
          %4341 = vmatprep.subr.mxu0 %v4189
          %4342 = vmatpush1.msra.mxu0 %v4188
          %4343 = vmatprep.subr.mxu0 %v4193
          %4344 = vmatpush1.msra.mxu0 %v4192
          %4345 = vmatprep.subr.mxu0 %v4197
          %4346 = vmatpush1.msra.mxu0 %v4196
          %4347 = vmatprep.subr.mxu0 %v4201
          %4348 = vmatpush1.msra.mxu0 %v4200
          %4349 = vmatprep.subr.mxu0 %v4205
          %4350 = vmatpush1.msra.mxu0 %v4204
          %4351 = vmatprep.subr.mxu0 %v4209
          %4352 = vmatpush1.msra.mxu0 %v4208
          %4353 = vmatprep.subr.mxu0 %v4213
          %4354 = vmatpush1.msra.mxu0 %v4212
          %4355 = vmatprep.mubr.f32.mxu0 %v4083
          %4356 = vmatmul.mubr.f32.gmra.mrb[0].mxu0 %v4082
          %v4357 = vpop.f32.mrb[0].mxu0
          %v4358 = vadd.f32 %v3711, %v4357
          %v4359 = vpop.f32.mrb[0].mxu0
          %v4360 = vadd.f32 %v3713, %v4359
          %4361 = vmatprep.mubr.f32.mxu0 %v4085
          %4362 = vmatmul.mubr.f32.gmra.mrb[0].mxu0 %v4084
          %v4363 = vpop.f32.mrb[0].mxu0
          %v4364 = vadd.f32 %v3717, %v4363
          %v4365 = vpop.f32.mrb[0].mxu0
          %v4366 = vadd.f32 %v3719, %v4365
          %4367 = vdwg.mxu0
          %v4368 = vxor.u32 %v4281, 2147483648
          %v4369 = vxor.u32 %v4283, 2147483648
          %v4370 = vxor.u32 %v4358, 2147483648
          %v4371 = vxor.u32 %v4287, 2147483648
          %v4372 = vxor.u32 %v4289, 2147483648
          %v4373 = vxor.u32 %v4364, 2147483648
          %v4374 = vmul.f32 %v4368, 1.442695
          %v4375 = vpow.pop %v4374
          %v4376 = vmul.f32 %v4369, 1.442695
          %v4377 = vpow.pop %v4376
          %v4378 = vmul.f32 %v4370, 1.442695
          %v4379 = vpow.pop %v4378
          %v4380 = vmul.f32 %v4371, 1.442695
          %v4381 = vpow.pop %v4380
          %v4382 = vmul.f32 %v4372, 1.442695
          %v4383 = vpow.pop %v4382
          %v4384 = vmul.f32 %v4373, 1.442695
          %v4385 = vpow.pop %v4384
          %v4386 = vadd.f32 %v4375, 1.0
          %v4387 = vadd.f32 %v4377, 1.0
          %v4388 = vadd.f32 %v4379, 1.0
          %v4389 = vadd.f32 %v4381, 1.0
          %v4390 = vadd.f32 %v4383, 1.0
          %v4391 = vadd.f32 %v4385, 1.0
          %v4392 = vrcp.pop %v4386
          %v4393 = vmul.f32 1.0, %v4392
          %v4394 = vrcp.pop %v4387
          %v4395 = vmul.f32 1.0, %v4394
          %v4396 = vrcp.pop %v4388
          %v4397 = vmul.f32 1.0, %v4396
          %v4398 = vrcp.pop %v4389
          %v4399 = vmul.f32 1.0, %v4398
          %v4400 = vrcp.pop %v4390
          %v4401 = vmul.f32 1.0, %v4400
          %v4402 = vrcp.pop %v4391
          %v4403 = vmul.f32 1.0, %v4402
          %v4404 = vtanh.pop %v4360
          %v4405 = vtanh.pop %v4366
          %v4406 = vld [vmem:[#allocation6] sm:$0xff]
          %v4407 = vld [vmem:[#allocation6 + $0x8] sm:$0xff]
          %v4408 = vmul.f32 %v4395, %v4406
          %v4409 = vmul.f32 %v4401, %v4407
          %v4410 = vmul.f32 %v4393, %v4404
          %v4411 = vmul.f32 %v4399, %v4405
          %v4412 = vadd.f32 %v4408, %v4410
          %v4413 = vadd.f32 %v4409, %v4411
          %v4414 = vtanh.pop %v4412
          %v4415 = vtanh.pop %v4413
          %v4416 = vmul.f32 %v4397, %v4414
          %v4417 = vmul.f32 %v4403, %v4415
          %v4418 = vtanh.pop %v4416
          %v4419 = vtanh.pop %v4417
          %v4420 = vmul.f32 %v4063, %v4418
          %v4421 = vmul.f32 %v4069, %v4419
          %s4422 = scalar_lea.vmem %s571, 48
          %4423 = vst [vmem:[%s4422] sm:$0xff] %v4420
          %4424 = vst [vmem:[%s4422 + $0x8] sm:$0xff] %v4421
          %4425 = vst [vmem:[#allocation2 + $0x8] sm:$0xff] %v4420
          %4426 = vst [vmem:[#allocation2 + $0x18] sm:$0xff] %v4421
          %4427 = vst [vmem:[#allocation4] sm:$0xff] %v4416
          %4428 = vst [vmem:[#allocation4 + $0x8] sm:$0xff] %v4417
          %4429 = vst [vmem:[#allocation5] sm:$0xff] %v4416
          %4430 = vst [vmem:[#allocation5 + $0x8] sm:$0xff] %v4417
          %4431 = vst [vmem:[#allocation6] sm:$0xff] %v4412
          %4432 = vst [vmem:[#allocation6 + $0x8] sm:$0xff] %v4413
        $region84: #{_nested_lstm_sequence_jit.1} parent=59 // pred_fallthru
          _
        %s4433 = smul.u32 4, %s30
        %s4434 = smul.u32 2, %s29
        %p4435 = scmp.lt.s32.totalorder %s4433, 7
        %s4436 = scalar_select %p4435, %s4433, 7
        %p4437 = scmp.lt.s32.totalorder %s4434, 1
        %s4438 = scalar_select %p4437, %s4434, 1
        %s4439 = smul.addr %s4436, 2
        %s4440 = sadd.s32 %s4438, %s4439
        %s4441 = smul.addr %s4440, 8
        %s4442 = scalar_lea.vmem %s10, %s4441
        %s4443 = smul.u32 2, %s29
        %p4444 = scmp.lt.s32.totalorder %s4443, 1
        %s4445 = scalar_select %p4444, %s4443, 1
        %s4446 = smul.addr %s4445, 8
        %s4447 = scalar_lea.vmem %s11, %s4446
        // Predicated region
        $region85: #{_nested_lstm_sequence_jit.1} parent=59 // pred_check
          %p4448 = pneg %p294
        $region86: #{_nested_lstm_sequence_jit.1} parent=59 // pred_check_branch
          %4450 = sbr.rel (%p4448) target = $region88
        $region87: #{_nested_lstm_sequence_jit.1} parent=59 // pred_region
          %s4451 = smul.u32 4, %s30
          %s4452 = smul.u32 2, %s29
        $region88: #{_nested_lstm_sequence_jit.1} parent=59 // pred_fallthru
          _
        // Predicated region
        $region89: #{_nested_lstm_sequence_jit.1} parent=59 // pred_check
          %p4453 = pneg %p320
        $region90: #{_nested_lstm_sequence_jit.1} parent=59 // pred_check_branch
          %4455 = sbr.rel (%p4453) target = $region92
        $region91: #{_nested_lstm_sequence_jit.1} parent=59 // pred_region
          %s4456 = smul.u32 2, %s29
        $region92: #{_nested_lstm_sequence_jit.1} parent=59 // pred_fallthru
          _
        // Predicated region
        $region93: #{_nested_lstm_sequence_jit.1} parent=59 // pred_check
          %p4457 = pneg %p320
        $region94: #{_nested_lstm_sequence_jit.1} parent=59 // pred_check_branch
          %4459 = sbr.rel (%p4457) target = $region96
        $region95: #{_nested_lstm_sequence_jit.1} parent=59 // pred_region
          %s4460 = smul.u32 2, %s29
          %p4461 = scmp.lt.s32.totalorder %s4460, 1
          %s4462 = scalar_select %p4461, %s4460, 1
          %s4463 = smul.addr %s4462, 8
          %s4464 = scalar_lea.vmem %s11, %s4463
        $region96: #{_nested_lstm_sequence_jit.1} parent=59 // pred_fallthru
          _
      $region60: #{_nested_lstm_sequence_jit.1} parent=5 // pred_fallthru
        _
      %p4465 = scmp.le.s32.totalorder 2, %s20
      // Predicated region
      $region97: #{_nested_lstm_sequence_jit.1} parent=5 // pred_check
        %p4466 = pneg %p4465
      $region98: #{_nested_lstm_sequence_jit.1} parent=5 // pred_check_branch
        %4468 = sbr.rel (%p4466) target = $region100
      $region99: #{_nested_lstm_sequence_jit.1} parent=5 // pred_region
        %s4469 = ssub.s32 %s20, 2
        // Predicated region
        $region101: #{_nested_lstm_sequence_jit.1} parent=99 // pred_check
          %p4470 = pneg %p300
        $region102: #{_nested_lstm_sequence_jit.1} parent=99 // pred_check_branch
          %4472 = sbr.rel (%p4470) target = $region104
        $region103: #{_nested_lstm_sequence_jit.1} parent=99 // pred_region
          %s4473 = smul.u32 4, %s32
          %s4474 = smul.u32 2, %s31
          %p4475 = scmp.lt.s32.totalorder %s4473, 7
          %s4476 = scalar_select %p4475, %s4473, 7
          %p4477 = scmp.lt.s32.totalorder %s4474, 1
          %s4478 = scalar_select %p4477, %s4474, 1
          %s4479 = smul.addr %s4476, 2
          %s4480 = sadd.s32 %s4478, %s4479
          %s4481 = smul.addr %s4480, 8
          %s4482 = scalar_lea.vmem %s10, %s4481
        $region104: #{_nested_lstm_sequence_jit.1} parent=99 // pred_fallthru
          _
      $region100: #{_nested_lstm_sequence_jit.1} parent=5 // pred_fallthru
        _
    $region6: #{_nested_lstm_sequence_jit.1} parent=1 // loop_footer
      %s24 = sadd.s32 1, %s20
    $region7: #{_nested_lstm_sequence_jit.1} parent=1 // loop_footer_branch
      %19 = sbr.rel target = $region3
    $region8: #{_nested_lstm_sequence_jit.1} parent=1 // loop_exit
      _
    %4483 = vsyncpa [#allocation8], 1
    %s4484 = scalar_lea.sflag [#allocation8], 1
    %4485 = vsyncpa %s4484, 1
    %4486 = vsyncpa [#allocation10], 1

</llo_original>
